<compile_context>
chip_gen: v5e
topology: v5e:2x2
jax: 0.10.0
libtpu: 0.0.40
codegen_flags: <defaults>
</compile_context>

<pallas_src>
import jax
import jax.numpy as jnp
from jax.experimental import pallas as pl
from jax.experimental.pallas import tpu as pltpu

# Small hyper-parameters consistent with the module's constructor structure.
CLASSES = 2
C_IN    = 8            # sampleChannel
L_IN    = 96           # sampleLength
N1      = 8
D       = 2
K_LEN   = 32           # kernelLength
O_CH    = D * N1       # depthwise output channels
T_OUT   = L_IN - K_LEN + 1    # valid-conv output length (== AvgPool window) = 65
T_PAD   = 128          # per-sample time axis padded to one full lane width
BATCH   = 8
TOTAL   = BATCH * T_PAD        # lanes of the fused activation tile
YB_COLS = TOTAL + T_PAD        # pointwise-output slab (+ zero tail for shifts)
PV_COLS = 8                    # packed per-channel parameter columns
BN_EPS  = 1e-5

assert T_PAD >= L_IN and T_PAD % 128 == 0
assert T_OUT + K_LEN - 1 == L_IN
assert 3 + CLASSES + 1 <= PV_COLS
assert CLASSES <= O_CH


def eon_kernel(x_ref, wpw_ref, wd_ref, pvec_ref, mask_ref, out_ref, ybuf, gap_sc):
    # x_ref   : (BATCH, C_IN, L_IN)  raw input (single ~24 KiB DMA, no im2col)
    # wpw_ref : (O_CH, C_IN)         pointwise weight expanded to depthwise chans
    # wd_ref  : (O_CH, K_LEN)        depthwise weight
    # pvec_ref: (O_CH, PV_COLS)      packed per-channel params:
    #           [:,0]=fused bias  [:,1]=gamma  [:,2]=beta
    #           [:,3+c]=fc weight of class c   [c,3+CLASSES]=fc bias of class c
    # mask_ref: (1, TOTAL)           1.0 on valid time lanes (t < T_OUT), else 0.0
    # out_ref : (CLASSES, BATCH)     log-softmax output (transposed; wrapper fixes)
    # ybuf    : (O_CH, YB_COLS)      VMEM scratch: pointwise-conv output, one
    #                                128-lane slab per sample, zero elsewhere
    # gap_sc  : (O_CH, BATCH)        per-sample time sums of z

    # Zero the slab once so per-sample pad lanes and the tail are exact zeros.
    ybuf[...] = jnp.zeros_like(ybuf)

    # Pointwise conv (channel mixing): one small MXU matmul per sample written
    # into that sample's aligned 128-lane slab (bias folded into b_fused).
    wpw = wpw_ref[...]
    for b in range(BATCH):
        ybuf[:, b * T_PAD:b * T_PAD + L_IN] = jnp.dot(
            wpw, x_ref[b], preferred_element_type=jnp.float32)

    # Depthwise conv as K shifted lane-slices + VPU FMAs; taps for valid t
    # (< T_OUT) never cross a sample slab, so a plain shifted read is exact.
    wdv = wd_ref[...]
    acc = wdv[:, 0:1] * ybuf[:, 0:TOTAL]
    for k in range(1, K_LEN):
        acc = acc + wdv[:, k:k + 1] * ybuf[:, k:k + TOTAL]

    # Fused bias + ReLU, then zero the padded time lanes so they never reach
    # the BN statistics or the GAP sums (single multiply with a 0/1 mask).
    z = jnp.maximum(acc + pvec_ref[:, 0:1], 0.0) * mask_ref[...]      # (O, TOTAL)

    # Per-sample time sums (GAP numerators): aligned 128-lane reduces written
    # into lane slices of a tiny scratch (no lane-axis concatenation).
    for b in range(BATCH):
        gap_sc[:, b:b + 1] = jnp.sum(z[:, b * T_PAD:(b + 1) * T_PAD],
                                     axis=1, keepdims=True)
    gap = gap_sc[...]                                                 # (O, BATCH)

    # BatchNorm batch statistics (biased variance).  The channel mean comes
    # from the GAP sums, so only sum(z^2) needs a full-width reduce.
    cnt = float(BATCH * T_OUT)
    mean = jnp.sum(gap, axis=1, keepdims=True) / cnt                  # (O, 1)
    var = jnp.sum(z * z, axis=1, keepdims=True) / cnt - mean * mean
    scale = pvec_ref[:, 1:2] * jax.lax.rsqrt(var + BN_EPS)            # (O, 1)

    # Fused BN + global-average-pool on the pooled (O, BATCH) tile.
    gn = (gap * (1.0 / T_OUT) - mean) * scale + pvec_ref[:, 2:3]      # (O, BATCH)

    # Final FC (O -> CLASSES) off the MXU: VPU multiply + sublane reduce.
    rows = []
    for c in range(CLASSES):
        r = jnp.sum(gn * pvec_ref[:, 3 + c:4 + c], axis=0, keepdims=True)
        rows.append(r + pvec_ref[c:c + 1, 3 + CLASSES:4 + CLASSES])   # (1, BATCH)
    logits = jnp.concatenate(rows, axis=0)                            # (CLASSES, BATCH)

    # Stable log-softmax over the class axis.
    m = jnp.max(logits, axis=0, keepdims=True)
    s = logits - m
    lse = jnp.log(jnp.sum(jnp.exp(s), axis=0, keepdims=True))
    out_ref[...] = (s - lse).astype(out_ref.dtype)


@jax.jit
def interpretable_cnn_forward(x_nchw, params):
    wp, bp, wd, bd, gamma, beta, wfc, bfc = params
    x = x_nchw[:, 0].astype(jnp.float32)                 # (B, C, L), raw layout

    # Tiny parameter prep (would be hoisted/cached in a real model).
    # Grouped-conv convention: depthwise output channel o uses pointwise
    # output channel o // D.
    wp_exp = jnp.repeat(wp, D, axis=0)                   # (O, C)
    bp_exp = jnp.repeat(bp, D, axis=0)                   # (O,)
    b_fused = bp_exp * jnp.sum(wd, axis=1) + bd          # (O,)

    # Pack all per-channel vectors + FC params into one small (O, PV_COLS) DMA.
    fc_bias_col = jnp.zeros((O_CH,), jnp.float32).at[:CLASSES].set(bfc)
    cols = [b_fused, gamma, beta] + [wfc[c] for c in range(CLASSES)] + [fc_bias_col]
    cols += [jnp.zeros((O_CH,), jnp.float32)] * (PV_COLS - len(cols))
    pvec = jnp.stack(cols, axis=1)                       # (O, PV_COLS)

    # Valid-time mask for the per-sample 128-lane slabs (jit-time constant).
    mask = (jnp.arange(TOTAL) % T_PAD < T_OUT).astype(jnp.float32)[None, :]

    inputs = (x, wp_exp, wd, pvec, mask)
    const2d = lambda i: (0, 0)                           # everything is resident
    grid_spec = pltpu.PrefetchScalarGridSpec(
        num_scalar_prefetch=0,
        grid=(1,),                                       # single step: nothing to pipeline
        in_specs=[
            pl.BlockSpec((BATCH, C_IN, L_IN), lambda i: (0, 0, 0)),
            pl.BlockSpec((O_CH, C_IN), const2d),
            pl.BlockSpec((O_CH, K_LEN), const2d),
            pl.BlockSpec((O_CH, PV_COLS), const2d),
            pl.BlockSpec((1, TOTAL), const2d),
        ],
        out_specs=pl.BlockSpec((CLASSES, BATCH), const2d),
        scratch_shapes=[
            pltpu.VMEM((O_CH, YB_COLS), jnp.float32),    # pointwise-conv slabs
            pltpu.VMEM((O_CH, BATCH), jnp.float32),      # per-sample GAP sums
        ],
    )
    out_t = pl.pallas_call(
        eon_kernel,
        out_shape=jax.ShapeDtypeStruct((CLASSES, BATCH), jnp.float32),
        grid_spec=grid_spec,
        compiler_params=pltpu.CompilerParams(
            dimension_semantics=("arbitrary",)),
    )(*inputs)
    return out_t.T                                       # (B, CLASSES)


def ref_forward(x_nchw, wp, bp, wd, bd, gamma, beta, wfc, bfc):
    """Pure-JAX mirror of the PyTorch forward, for verification."""
    hp = jax.lax.Precision.HIGHEST
    x = x_nchw[:, 0]                                                  # (B, C, L)
    y1 = jnp.einsum('nc,bcl->bnl', wp, x, precision=hp) + bp[None, :, None]
    y1e = jnp.repeat(y1, D, axis=1)                                   # (B, O, L)
    acc = jnp.zeros((BATCH, O_CH, T_OUT), jnp.float32)
    for k in range(K_LEN):
        acc = acc + wd[None, :, k:k + 1] * y1e[:, :, k:k + T_OUT]
    z = jnp.maximum(acc + bd[None, :, None], 0.0)
    mean = z.mean(axis=(0, 2), keepdims=True)
    var = ((z - mean) ** 2).mean(axis=(0, 2), keepdims=True)          # biased
    zn = (z - mean) / jnp.sqrt(var + BN_EPS) * gamma[None, :, None] + beta[None, :, None]
    g = zn.mean(axis=2)                                               # GAP + flatten
    logits = jnp.dot(g, wfc.T, precision=hp) + bfc[None, :]
    return jax.nn.log_softmax(logits, axis=1)


if __name__ == "__main__":
    key = jax.random.PRNGKey(0)
    kx, k1, k2, k3, k4, k5, k6, k7, k8 = jax.random.split(key, 9)
    x = jax.random.normal(kx, (BATCH, 1, C_IN, L_IN), jnp.float32)

    # Deterministic synthetic parameters (shapes from the module's __init__,
    # singleton conv-kernel dims squeezed out).
    wp = 0.3 * jax.random.normal(k1, (N1, C_IN), jnp.float32)     # Conv2d(1,N1,(C,1))
    bp = 0.1 * jax.random.normal(k2, (N1,), jnp.float32)
    wd = 0.3 * jax.random.normal(k3, (O_CH, K_LEN), jnp.float32)  # Conv2d(N1,d*N1,(1,K),groups=N1)
    bd = 0.1 * jax.random.normal(k4, (O_CH,), jnp.float32)
    gamma = 1.0 + 0.05 * jax.random.normal(k7, (O_CH,), jnp.float32)
    beta = 0.05 * jax.random.normal(k8, (O_CH,), jnp.float32)
    wfc = 0.3 * jax.random.normal(k5, (CLASSES, O_CH), jnp.float32)   # Linear(d*N1, classes)
    bfc = 0.1 * jax.random.normal(k6, (CLASSES,), jnp.float32)
    params = (wp, bp, wd, bd, gamma, beta, wfc, bfc)

    out = jax.block_until_ready(interpretable_cnn_forward(x, params))

    ref = ref_forward(x, *params)
    assert out.shape == (BATCH, CLASSES)
    assert bool(jnp.allclose(out, ref, atol=1e-4, rtol=1e-4)), (out, ref)
    print("KERNEL_OK")
</pallas_src>

<mosaic_0001>
module attributes {stable_mosaic.version = 11 : i64} {
  func.func @eon_kernel(%arg0: i32, %arg1: memref<8x8x96xf32, #tpu.memory_space<vmem>>, %arg2: memref<16x8xf32, #tpu.memory_space<vmem>>, %arg3: memref<16x32xf32, #tpu.memory_space<vmem>>, %arg4: memref<16x8xf32, #tpu.memory_space<vmem>>, %arg5: memref<1x1024xf32, #tpu.memory_space<vmem>>, %arg6: memref<2x8xf32, #tpu.memory_space<vmem>>, %arg7: memref<16x1152xf32, #tpu.memory_space<vmem>>, %arg8: memref<16x8xf32, #tpu.memory_space<vmem>>) attributes {dimension_semantics = [#tpu.dimension_semantics<arbitrary>], iteration_bounds = array<i64: 1>, scalar_prefetch = 0 : i64, scratch_operands = 2 : i64, tpu.core_type = #tpu.core_type<tc>, window_params = [{pipeline_mode = #tpu.pipeline_mode<synchronous>, transform_indices = @transform_0, window_bounds = array<i64: 8, 8, 96>}, {pipeline_mode = #tpu.pipeline_mode<synchronous>, transform_indices = @transform_1, window_bounds = array<i64: 16, 8>}, {pipeline_mode = #tpu.pipeline_mode<synchronous>, transform_indices = @transform_2, window_bounds = array<i64: 16, 32>}, {pipeline_mode = #tpu.pipeline_mode<synchronous>, transform_indices = @transform_3, window_bounds = array<i64: 16, 8>}, {pipeline_mode = #tpu.pipeline_mode<synchronous>, transform_indices = @transform_4, window_bounds = array<i64: 1, 1024>}, {pipeline_mode = #tpu.pipeline_mode<synchronous>, transform_indices = @transform_5, window_bounds = array<i64: 2, 8>}]} {
    %cst = arith.constant 0.000000e+00 : f32
    %0 = vector.broadcast %cst : f32 to vector<16x1152xf32>
    %c0 = arith.constant 0 : index
    %c0_0 = arith.constant 0 : index
    %1 = vector.load %arg7[%c0, %c0_0] : memref<16x1152xf32, #tpu.memory_space<vmem>>, vector<16x1152xf32>
    tpu.vector_store %arg7[%c0, %c0_0], %0 {strides = array<i32>} : memref<16x1152xf32, #tpu.memory_space<vmem>>, vector<16x1152xf32>,
    %c0_1 = arith.constant 0 : index
    %c0_2 = arith.constant 0 : index
    %2 = vector.load %arg2[%c0_1, %c0_2] : memref<16x8xf32, #tpu.memory_space<vmem>>, vector<16x8xf32>
    %c0_3 = arith.constant 0 : index
    %c0_4 = arith.constant 0 : index
    %c0_5 = arith.constant 0 : index
    %3 = vector.load %arg1[%c0_3, %c0_4, %c0_5] : memref<8x8x96xf32, #tpu.memory_space<vmem>>, vector<1x8x96xf32>
    %4 = vector.shape_cast %3 : vector<1x8x96xf32> to vector<8x96xf32>
    %cst_6 = arith.constant dense<0.000000e+00> : vector<16x96xf32>
    %5 = tpu.matmul %2, %4, %cst_6 {dimension_numbers = #tpu.dot_dimension_numbers<[1], [0], [0], [1], [0, 0, 1, 1], [], []>} : vector<16x8xf32>, vector<8x96xf32>, vector<16x96xf32> -> vector<16x96xf32>
    %c0_7 = arith.constant 0 : index
    %c0_8 = arith.constant 0 : index
    %6 = vector.load %arg7[%c0_7, %c0_8] : memref<16x1152xf32, #tpu.memory_space<vmem>>, vector<16x96xf32>
    tpu.vector_store %arg7[%c0_7, %c0_8], %5 {strides = array<i32>} : memref<16x1152xf32, #tpu.memory_space<vmem>>, vector<16x96xf32>,
    %c1 = arith.constant 1 : index
    %c0_9 = arith.constant 0 : index
    %c0_10 = arith.constant 0 : index
    %7 = vector.load %arg1[%c1, %c0_9, %c0_10] : memref<8x8x96xf32, #tpu.memory_space<vmem>>, vector<1x8x96xf32>
    %8 = vector.shape_cast %7 : vector<1x8x96xf32> to vector<8x96xf32>
    %cst_11 = arith.constant dense<0.000000e+00> : vector<16x96xf32>
    %9 = tpu.matmul %2, %8, %cst_11 {dimension_numbers = #tpu.dot_dimension_numbers<[1], [0], [0], [1], [0, 0, 1, 1], [], []>} : vector<16x8xf32>, vector<8x96xf32>, vector<16x96xf32> -> vector<16x96xf32>
    %c0_12 = arith.constant 0 : index
    %c128 = arith.constant 128 : index
    %10 = vector.load %arg7[%c0_12, %c128] : memref<16x1152xf32, #tpu.memory_space<vmem>>, vector<16x96xf32>
    tpu.vector_store %arg7[%c0_12, %c128], %9 {strides = array<i32>} : memref<16x1152xf32, #tpu.memory_space<vmem>>, vector<16x96xf32>,
    %c2 = arith.constant 2 : index
    %c0_13 = arith.constant 0 : index
    %c0_14 = arith.constant 0 : index
    %11 = vector.load %arg1[%c2, %c0_13, %c0_14] : memref<8x8x96xf32, #tpu.memory_space<vmem>>, vector<1x8x96xf32>
    %12 = vector.shape_cast %11 : vector<1x8x96xf32> to vector<8x96xf32>
    %cst_15 = arith.constant dense<0.000000e+00> : vector<16x96xf32>
    %13 = tpu.matmul %2, %12, %cst_15 {dimension_numbers = #tpu.dot_dimension_numbers<[1], [0], [0], [1], [0, 0, 1, 1], [], []>} : vector<16x8xf32>, vector<8x96xf32>, vector<16x96xf32> -> vector<16x96xf32>
    %c0_16 = arith.constant 0 : index
    %c256 = arith.constant 256 : index
    %14 = vector.load %arg7[%c0_16, %c256] : memref<16x1152xf32, #tpu.memory_space<vmem>>, vector<16x96xf32>
    tpu.vector_store %arg7[%c0_16, %c256], %13 {strides = array<i32>} : memref<16x1152xf32, #tpu.memory_space<vmem>>, vector<16x96xf32>,
    %c3 = arith.constant 3 : index
    %c0_17 = arith.constant 0 : index
    %c0_18 = arith.constant 0 : index
    %15 = vector.load %arg1[%c3, %c0_17, %c0_18] : memref<8x8x96xf32, #tpu.memory_space<vmem>>, vector<1x8x96xf32>
    %16 = vector.shape_cast %15 : vector<1x8x96xf32> to vector<8x96xf32>
    %cst_19 = arith.constant dense<0.000000e+00> : vector<16x96xf32>
    %17 = tpu.matmul %2, %16, %cst_19 {dimension_numbers = #tpu.dot_dimension_numbers<[1], [0], [0], [1], [0, 0, 1, 1], [], []>} : vector<16x8xf32>, vector<8x96xf32>, vector<16x96xf32> -> vector<16x96xf32>
    %c0_20 = arith.constant 0 : index
    %c384 = arith.constant 384 : index
    %18 = vector.load %arg7[%c0_20, %c384] : memref<16x1152xf32, #tpu.memory_space<vmem>>, vector<16x96xf32>
    tpu.vector_store %arg7[%c0_20, %c384], %17 {strides = array<i32>} : memref<16x1152xf32, #tpu.memory_space<vmem>>, vector<16x96xf32>,
    %c4 = arith.constant 4 : index
    %c0_21 = arith.constant 0 : index
    %c0_22 = arith.constant 0 : index
    %19 = vector.load %arg1[%c4, %c0_21, %c0_22] : memref<8x8x96xf32, #tpu.memory_space<vmem>>, vector<1x8x96xf32>
    %20 = vector.shape_cast %19 : vector<1x8x96xf32> to vector<8x96xf32>
    %cst_23 = arith.constant dense<0.000000e+00> : vector<16x96xf32>
    %21 = tpu.matmul %2, %20, %cst_23 {dimension_numbers = #tpu.dot_dimension_numbers<[1], [0], [0], [1], [0, 0, 1, 1], [], []>} : vector<16x8xf32>, vector<8x96xf32>, vector<16x96xf32> -> vector<16x96xf32>
    %c0_24 = arith.constant 0 : index
    %c512 = arith.constant 512 : index
    %22 = vector.load %arg7[%c0_24, %c512] : memref<16x1152xf32, #tpu.memory_space<vmem>>, vector<16x96xf32>
    tpu.vector_store %arg7[%c0_24, %c512], %21 {strides = array<i32>} : memref<16x1152xf32, #tpu.memory_space<vmem>>, vector<16x96xf32>,
    %c5 = arith.constant 5 : index
    %c0_25 = arith.constant 0 : index
    %c0_26 = arith.constant 0 : index
    %23 = vector.load %arg1[%c5, %c0_25, %c0_26] : memref<8x8x96xf32, #tpu.memory_space<vmem>>, vector<1x8x96xf32>
    %24 = vector.shape_cast %23 : vector<1x8x96xf32> to vector<8x96xf32>
    %cst_27 = arith.constant dense<0.000000e+00> : vector<16x96xf32>
    %25 = tpu.matmul %2, %24, %cst_27 {dimension_numbers = #tpu.dot_dimension_numbers<[1], [0], [0], [1], [0, 0, 1, 1], [], []>} : vector<16x8xf32>, vector<8x96xf32>, vector<16x96xf32> -> vector<16x96xf32>
    %c0_28 = arith.constant 0 : index
    %c640 = arith.constant 640 : index
    %26 = vector.load %arg7[%c0_28, %c640] : memref<16x1152xf32, #tpu.memory_space<vmem>>, vector<16x96xf32>
    tpu.vector_store %arg7[%c0_28, %c640], %25 {strides = array<i32>} : memref<16x1152xf32, #tpu.memory_space<vmem>>, vector<16x96xf32>,
    %c6 = arith.constant 6 : index
    %c0_29 = arith.constant 0 : index
    %c0_30 = arith.constant 0 : index
    %27 = vector.load %arg1[%c6, %c0_29, %c0_30] : memref<8x8x96xf32, #tpu.memory_space<vmem>>, vector<1x8x96xf32>
    %28 = vector.shape_cast %27 : vector<1x8x96xf32> to vector<8x96xf32>
    %cst_31 = arith.constant dense<0.000000e+00> : vector<16x96xf32>
    %29 = tpu.matmul %2, %28, %cst_31 {dimension_numbers = #tpu.dot_dimension_numbers<[1], [0], [0], [1], [0, 0, 1, 1], [], []>} : vector<16x8xf32>, vector<8x96xf32>, vector<16x96xf32> -> vector<16x96xf32>
    %c0_32 = arith.constant 0 : index
    %c768 = arith.constant 768 : index
    %30 = vector.load %arg7[%c0_32, %c768] : memref<16x1152xf32, #tpu.memory_space<vmem>>, vector<16x96xf32>
    tpu.vector_store %arg7[%c0_32, %c768], %29 {strides = array<i32>} : memref<16x1152xf32, #tpu.memory_space<vmem>>, vector<16x96xf32>,
    %c7 = arith.constant 7 : index
    %c0_33 = arith.constant 0 : index
    %c0_34 = arith.constant 0 : index
    %31 = vector.load %arg1[%c7, %c0_33, %c0_34] : memref<8x8x96xf32, #tpu.memory_space<vmem>>, vector<1x8x96xf32>
    %32 = vector.shape_cast %31 : vector<1x8x96xf32> to vector<8x96xf32>
    %cst_35 = arith.constant dense<0.000000e+00> : vector<16x96xf32>
    %33 = tpu.matmul %2, %32, %cst_35 {dimension_numbers = #tpu.dot_dimension_numbers<[1], [0], [0], [1], [0, 0, 1, 1], [], []>} : vector<16x8xf32>, vector<8x96xf32>, vector<16x96xf32> -> vector<16x96xf32>
    %c0_36 = arith.constant 0 : index
    %c896 = arith.constant 896 : index
    %34 = vector.load %arg7[%c0_36, %c896] : memref<16x1152xf32, #tpu.memory_space<vmem>>, vector<16x96xf32>
    tpu.vector_store %arg7[%c0_36, %c896], %33 {strides = array<i32>} : memref<16x1152xf32, #tpu.memory_space<vmem>>, vector<16x96xf32>,
    %c0_37 = arith.constant 0 : index
    %c0_38 = arith.constant 0 : index
    %35 = vector.load %arg3[%c0_37, %c0_38] : memref<16x32xf32, #tpu.memory_space<vmem>>, vector<16x32xf32>
    %36 = vector.extract_strided_slice %35 {offsets = [0, 0], sizes = [16, 1], strides = [1, 1]} : vector<16x32xf32> to vector<16x1xf32>
    %c0_39 = arith.constant 0 : index
    %c0_40 = arith.constant 0 : index
    %37 = vector.load %arg7[%c0_39, %c0_40] : memref<16x1152xf32, #tpu.memory_space<vmem>>, vector<16x1024xf32>
    %38 = vector.broadcast %36 : vector<16x1xf32> to vector<16x1024xf32>
    %39 = arith.mulf %38, %37 : vector<16x1024xf32>
    %40 = vector.extract_strided_slice %35 {offsets = [0, 1], sizes = [16, 1], strides = [1, 1]} : vector<16x32xf32> to vector<16x1xf32>
    %c0_41 = arith.constant 0 : index
    %c1_42 = arith.constant 1 : index
    %41 = vector.load %arg7[%c0_41, %c1_42] : memref<16x1152xf32, #tpu.memory_space<vmem>>, vector<16x1024xf32>
    %42 = vector.broadcast %40 : vector<16x1xf32> to vector<16x1024xf32>
    %43 = arith.mulf %42, %41 : vector<16x1024xf32>
    %44 = arith.addf %39, %43 : vector<16x1024xf32>
    %45 = vector.extract_strided_slice %35 {offsets = [0, 2], sizes = [16, 1], strides = [1, 1]} : vector<16x32xf32> to vector<16x1xf32>
    %c0_43 = arith.constant 0 : index
    %c2_44 = arith.constant 2 : index
    %46 = vector.load %arg7[%c0_43, %c2_44] : memref<16x1152xf32, #tpu.memory_space<vmem>>, vector<16x1024xf32>
    %47 = vector.broadcast %45 : vector<16x1xf32> to vector<16x1024xf32>
    %48 = arith.mulf %47, %46 : vector<16x1024xf32>
    %49 = arith.addf %44, %48 : vector<16x1024xf32>
    %50 = vector.extract_strided_slice %35 {offsets = [0, 3], sizes = [16, 1], strides = [1, 1]} : vector<16x32xf32> to vector<16x1xf32>
    %c0_45 = arith.constant 0 : index
    %c3_46 = arith.constant 3 : index
    %51 = vector.load %arg7[%c0_45, %c3_46] : memref<16x1152xf32, #tpu.memory_space<vmem>>, vector<16x1024xf32>
    %52 = vector.broadcast %50 : vector<16x1xf32> to vector<16x1024xf32>
    %53 = arith.mulf %52, %51 : vector<16x1024xf32>
    %54 = arith.addf %49, %53 : vector<16x1024xf32>
    %55 = vector.extract_strided_slice %35 {offsets = [0, 4], sizes = [16, 1], strides = [1, 1]} : vector<16x32xf32> to vector<16x1xf32>
    %c0_47 = arith.constant 0 : index
    %c4_48 = arith.constant 4 : index
    %56 = vector.load %arg7[%c0_47, %c4_48] : memref<16x1152xf32, #tpu.memory_space<vmem>>, vector<16x1024xf32>
    %57 = vector.broadcast %55 : vector<16x1xf32> to vector<16x1024xf32>
    %58 = arith.mulf %57, %56 : vector<16x1024xf32>
    %59 = arith.addf %54, %58 : vector<16x1024xf32>
    %60 = vector.extract_strided_slice %35 {offsets = [0, 5], sizes = [16, 1], strides = [1, 1]} : vector<16x32xf32> to vector<16x1xf32>
    %c0_49 = arith.constant 0 : index
    %c5_50 = arith.constant 5 : index
    %61 = vector.load %arg7[%c0_49, %c5_50] : memref<16x1152xf32, #tpu.memory_space<vmem>>, vector<16x1024xf32>
    %62 = vector.broadcast %60 : vector<16x1xf32> to vector<16x1024xf32>
    %63 = arith.mulf %62, %61 : vector<16x1024xf32>
    %64 = arith.addf %59, %63 : vector<16x1024xf32>
    %65 = vector.extract_strided_slice %35 {offsets = [0, 6], sizes = [16, 1], strides = [1, 1]} : vector<16x32xf32> to vector<16x1xf32>
    %c0_51 = arith.constant 0 : index
    %c6_52 = arith.constant 6 : index
    %66 = vector.load %arg7[%c0_51, %c6_52] : memref<16x1152xf32, #tpu.memory_space<vmem>>, vector<16x1024xf32>
    %67 = vector.broadcast %65 : vector<16x1xf32> to vector<16x1024xf32>
    %68 = arith.mulf %67, %66 : vector<16x1024xf32>
    %69 = arith.addf %64, %68 : vector<16x1024xf32>
    %70 = vector.extract_strided_slice %35 {offsets = [0, 7], sizes = [16, 1], strides = [1, 1]} : vector<16x32xf32> to vector<16x1xf32>
    %c0_53 = arith.constant 0 : index
    %c7_54 = arith.constant 7 : index
    %71 = vector.load %arg7[%c0_53, %c7_54] : memref<16x1152xf32, #tpu.memory_space<vmem>>, vector<16x1024xf32>
    %72 = vector.broadcast %70 : vector<16x1xf32> to vector<16x1024xf32>
    %73 = arith.mulf %72, %71 : vector<16x1024xf32>
    %74 = arith.addf %69, %73 : vector<16x1024xf32>
    %75 = vector.extract_strided_slice %35 {offsets = [0, 8], sizes = [16, 1], strides = [1, 1]} : vector<16x32xf32> to vector<16x1xf32>
    %c0_55 = arith.constant 0 : index
    %c8 = arith.constant 8 : index
    %76 = vector.load %arg7[%c0_55, %c8] : memref<16x1152xf32, #tpu.memory_space<vmem>>, vector<16x1024xf32>
    %77 = vector.broadcast %75 : vector<16x1xf32> to vector<16x1024xf32>
    %78 = arith.mulf %77, %76 : vector<16x1024xf32>
    %79 = arith.addf %74, %78 : vector<16x1024xf32>
    %80 = vector.extract_strided_slice %35 {offsets = [0, 9], sizes = [16, 1], strides = [1, 1]} : vector<16x32xf32> to vector<16x1xf32>
    %c0_56 = arith.constant 0 : index
    %c9 = arith.constant 9 : index
    %81 = vector.load %arg7[%c0_56, %c9] : memref<16x1152xf32, #tpu.memory_space<vmem>>, vector<16x1024xf32>
    %82 = vector.broadcast %80 : vector<16x1xf32> to vector<16x1024xf32>
    %83 = arith.mulf %82, %81 : vector<16x1024xf32>
    %84 = arith.addf %79, %83 : vector<16x1024xf32>
    %85 = vector.extract_strided_slice %35 {offsets = [0, 10], sizes = [16, 1], strides = [1, 1]} : vector<16x32xf32> to vector<16x1xf32>
    %c0_57 = arith.constant 0 : index
    %c10 = arith.constant 10 : index
    %86 = vector.load %arg7[%c0_57, %c10] : memref<16x1152xf32, #tpu.memory_space<vmem>>, vector<16x1024xf32>
    %87 = vector.broadcast %85 : vector<16x1xf32> to vector<16x1024xf32>
    %88 = arith.mulf %87, %86 : vector<16x1024xf32>
    %89 = arith.addf %84, %88 : vector<16x1024xf32>
    %90 = vector.extract_strided_slice %35 {offsets = [0, 11], sizes = [16, 1], strides = [1, 1]} : vector<16x32xf32> to vector<16x1xf32>
    %c0_58 = arith.constant 0 : index
    %c11 = arith.constant 11 : index
    %91 = vector.load %arg7[%c0_58, %c11] : memref<16x1152xf32, #tpu.memory_space<vmem>>, vector<16x1024xf32>
    %92 = vector.broadcast %90 : vector<16x1xf32> to vector<16x1024xf32>
    %93 = arith.mulf %92, %91 : vector<16x1024xf32>
    %94 = arith.addf %89, %93 : vector<16x1024xf32>
    %95 = vector.extract_strided_slice %35 {offsets = [0, 12], sizes = [16, 1], strides = [1, 1]} : vector<16x32xf32> to vector<16x1xf32>
    %c0_59 = arith.constant 0 : index
    %c12 = arith.constant 12 : index
    %96 = vector.load %arg7[%c0_59, %c12] : memref<16x1152xf32, #tpu.memory_space<vmem>>, vector<16x1024xf32>
    %97 = vector.broadcast %95 : vector<16x1xf32> to vector<16x1024xf32>
    %98 = arith.mulf %97, %96 : vector<16x1024xf32>
    %99 = arith.addf %94, %98 : vector<16x1024xf32>
    %100 = vector.extract_strided_slice %35 {offsets = [0, 13], sizes = [16, 1], strides = [1, 1]} : vector<16x32xf32> to vector<16x1xf32>
    %c0_60 = arith.constant 0 : index
    %c13 = arith.constant 13 : index
    %101 = vector.load %arg7[%c0_60, %c13] : memref<16x1152xf32, #tpu.memory_space<vmem>>, vector<16x1024xf32>
    %102 = vector.broadcast %100 : vector<16x1xf32> to vector<16x1024xf32>
    %103 = arith.mulf %102, %101 : vector<16x1024xf32>
    %104 = arith.addf %99, %103 : vector<16x1024xf32>
    %105 = vector.extract_strided_slice %35 {offsets = [0, 14], sizes = [16, 1], strides = [1, 1]} : vector<16x32xf32> to vector<16x1xf32>
    %c0_61 = arith.constant 0 : index
    %c14 = arith.constant 14 : index
    %106 = vector.load %arg7[%c0_61, %c14] : memref<16x1152xf32, #tpu.memory_space<vmem>>, vector<16x1024xf32>
    %107 = vector.broadcast %105 : vector<16x1xf32> to vector<16x1024xf32>
    %108 = arith.mulf %107, %106 : vector<16x1024xf32>
    %109 = arith.addf %104, %108 : vector<16x1024xf32>
    %110 = vector.extract_strided_slice %35 {offsets = [0, 15], sizes = [16, 1], strides = [1, 1]} : vector<16x32xf32> to vector<16x1xf32>
    %c0_62 = arith.constant 0 : index
    %c15 = arith.constant 15 : index
    %111 = vector.load %arg7[%c0_62, %c15] : memref<16x1152xf32, #tpu.memory_space<vmem>>, vector<16x1024xf32>
    %112 = vector.broadcast %110 : vector<16x1xf32> to vector<16x1024xf32>
    %113 = arith.mulf %112, %111 : vector<16x1024xf32>
    %114 = arith.addf %109, %113 : vector<16x1024xf32>
    %115 = vector.extract_strided_slice %35 {offsets = [0, 16], sizes = [16, 1], strides = [1, 1]} : vector<16x32xf32> to vector<16x1xf32>
    %c0_63 = arith.constant 0 : index
    %c16 = arith.constant 16 : index
    %116 = vector.load %arg7[%c0_63, %c16] : memref<16x1152xf32, #tpu.memory_space<vmem>>, vector<16x1024xf32>
    %117 = vector.broadcast %115 : vector<16x1xf32> to vector<16x1024xf32>
    %118 = arith.mulf %117, %116 : vector<16x1024xf32>
    %119 = arith.addf %114, %118 : vector<16x1024xf32>
    %120 = vector.extract_strided_slice %35 {offsets = [0, 17], sizes = [16, 1], strides = [1, 1]} : vector<16x32xf32> to vector<16x1xf32>
    %c0_64 = arith.constant 0 : index
    %c17 = arith.constant 17 : index
    %121 = vector.load %arg7[%c0_64, %c17] : memref<16x1152xf32, #tpu.memory_space<vmem>>, vector<16x1024xf32>
    %122 = vector.broadcast %120 : vector<16x1xf32> to vector<16x1024xf32>
    %123 = arith.mulf %122, %121 : vector<16x1024xf32>
    %124 = arith.addf %119, %123 : vector<16x1024xf32>
    %125 = vector.extract_strided_slice %35 {offsets = [0, 18], sizes = [16, 1], strides = [1, 1]} : vector<16x32xf32> to vector<16x1xf32>
    %c0_65 = arith.constant 0 : index
    %c18 = arith.constant 18 : index
    %126 = vector.load %arg7[%c0_65, %c18] : memref<16x1152xf32, #tpu.memory_space<vmem>>, vector<16x1024xf32>
    %127 = vector.broadcast %125 : vector<16x1xf32> to vector<16x1024xf32>
    %128 = arith.mulf %127, %126 : vector<16x1024xf32>
    %129 = arith.addf %124, %128 : vector<16x1024xf32>
    %130 = vector.extract_strided_slice %35 {offsets = [0, 19], sizes = [16, 1], strides = [1, 1]} : vector<16x32xf32> to vector<16x1xf32>
    %c0_66 = arith.constant 0 : index
    %c19 = arith.constant 19 : index
    %131 = vector.load %arg7[%c0_66, %c19] : memref<16x1152xf32, #tpu.memory_space<vmem>>, vector<16x1024xf32>
    %132 = vector.broadcast %130 : vector<16x1xf32> to vector<16x1024xf32>
    %133 = arith.mulf %132, %131 : vector<16x1024xf32>
    %134 = arith.addf %129, %133 : vector<16x1024xf32>
    %135 = vector.extract_strided_slice %35 {offsets = [0, 20], sizes = [16, 1], strides = [1, 1]} : vector<16x32xf32> to vector<16x1xf32>
    %c0_67 = arith.constant 0 : index
    %c20 = arith.constant 20 : index
    %136 = vector.load %arg7[%c0_67, %c20] : memref<16x1152xf32, #tpu.memory_space<vmem>>, vector<16x1024xf32>
    %137 = vector.broadcast %135 : vector<16x1xf32> to vector<16x1024xf32>
    %138 = arith.mulf %137, %136 : vector<16x1024xf32>
    %139 = arith.addf %134, %138 : vector<16x1024xf32>
    %140 = vector.extract_strided_slice %35 {offsets = [0, 21], sizes = [16, 1], strides = [1, 1]} : vector<16x32xf32> to vector<16x1xf32>
    %c0_68 = arith.constant 0 : index
    %c21 = arith.constant 21 : index
    %141 = vector.load %arg7[%c0_68, %c21] : memref<16x1152xf32, #tpu.memory_space<vmem>>, vector<16x1024xf32>
    %142 = vector.broadcast %140 : vector<16x1xf32> to vector<16x1024xf32>
    %143 = arith.mulf %142, %141 : vector<16x1024xf32>
    %144 = arith.addf %139, %143 : vector<16x1024xf32>
    %145 = vector.extract_strided_slice %35 {offsets = [0, 22], sizes = [16, 1], strides = [1, 1]} : vector<16x32xf32> to vector<16x1xf32>
    %c0_69 = arith.constant 0 : index
    %c22 = arith.constant 22 : index
    %146 = vector.load %arg7[%c0_69, %c22] : memref<16x1152xf32, #tpu.memory_space<vmem>>, vector<16x1024xf32>
    %147 = vector.broadcast %145 : vector<16x1xf32> to vector<16x1024xf32>
    %148 = arith.mulf %147, %146 : vector<16x1024xf32>
    %149 = arith.addf %144, %148 : vector<16x1024xf32>
    %150 = vector.extract_strided_slice %35 {offsets = [0, 23], sizes = [16, 1], strides = [1, 1]} : vector<16x32xf32> to vector<16x1xf32>
    %c0_70 = arith.constant 0 : index
    %c23 = arith.constant 23 : index
    %151 = vector.load %arg7[%c0_70, %c23] : memref<16x1152xf32, #tpu.memory_space<vmem>>, vector<16x1024xf32>
    %152 = vector.broadcast %150 : vector<16x1xf32> to vector<16x1024xf32>
    %153 = arith.mulf %152, %151 : vector<16x1024xf32>
    %154 = arith.addf %149, %153 : vector<16x1024xf32>
    %155 = vector.extract_strided_slice %35 {offsets = [0, 24], sizes = [16, 1], strides = [1, 1]} : vector<16x32xf32> to vector<16x1xf32>
    %c0_71 = arith.constant 0 : index
    %c24 = arith.constant 24 : index
    %156 = vector.load %arg7[%c0_71, %c24] : memref<16x1152xf32, #tpu.memory_space<vmem>>, vector<16x1024xf32>
    %157 = vector.broadcast %155 : vector<16x1xf32> to vector<16x1024xf32>
    %158 = arith.mulf %157, %156 : vector<16x1024xf32>
    %159 = arith.addf %154, %158 : vector<16x1024xf32>
    %160 = vector.extract_strided_slice %35 {offsets = [0, 25], sizes = [16, 1], strides = [1, 1]} : vector<16x32xf32> to vector<16x1xf32>
    %c0_72 = arith.constant 0 : index
    %c25 = arith.constant 25 : index
    %161 = vector.load %arg7[%c0_72, %c25] : memref<16x1152xf32, #tpu.memory_space<vmem>>, vector<16x1024xf32>
    %162 = vector.broadcast %160 : vector<16x1xf32> to vector<16x1024xf32>
    %163 = arith.mulf %162, %161 : vector<16x1024xf32>
    %164 = arith.addf %159, %163 : vector<16x1024xf32>
    %165 = vector.extract_strided_slice %35 {offsets = [0, 26], sizes = [16, 1], strides = [1, 1]} : vector<16x32xf32> to vector<16x1xf32>
    %c0_73 = arith.constant 0 : index
    %c26 = arith.constant 26 : index
    %166 = vector.load %arg7[%c0_73, %c26] : memref<16x1152xf32, #tpu.memory_space<vmem>>, vector<16x1024xf32>
    %167 = vector.broadcast %165 : vector<16x1xf32> to vector<16x1024xf32>
    %168 = arith.mulf %167, %166 : vector<16x1024xf32>
    %169 = arith.addf %164, %168 : vector<16x1024xf32>
    %170 = vector.extract_strided_slice %35 {offsets = [0, 27], sizes = [16, 1], strides = [1, 1]} : vector<16x32xf32> to vector<16x1xf32>
    %c0_74 = arith.constant 0 : index
    %c27 = arith.constant 27 : index
    %171 = vector.load %arg7[%c0_74, %c27] : memref<16x1152xf32, #tpu.memory_space<vmem>>, vector<16x1024xf32>
    %172 = vector.broadcast %170 : vector<16x1xf32> to vector<16x1024xf32>
    %173 = arith.mulf %172, %171 : vector<16x1024xf32>
    %174 = arith.addf %169, %173 : vector<16x1024xf32>
    %175 = vector.extract_strided_slice %35 {offsets = [0, 28], sizes = [16, 1], strides = [1, 1]} : vector<16x32xf32> to vector<16x1xf32>
    %c0_75 = arith.constant 0 : index
    %c28 = arith.constant 28 : index
    %176 = vector.load %arg7[%c0_75, %c28] : memref<16x1152xf32, #tpu.memory_space<vmem>>, vector<16x1024xf32>
    %177 = vector.broadcast %175 : vector<16x1xf32> to vector<16x1024xf32>
    %178 = arith.mulf %177, %176 : vector<16x1024xf32>
    %179 = arith.addf %174, %178 : vector<16x1024xf32>
    %180 = vector.extract_strided_slice %35 {offsets = [0, 29], sizes = [16, 1], strides = [1, 1]} : vector<16x32xf32> to vector<16x1xf32>
    %c0_76 = arith.constant 0 : index
    %c29 = arith.constant 29 : index
    %181 = vector.load %arg7[%c0_76, %c29] : memref<16x1152xf32, #tpu.memory_space<vmem>>, vector<16x1024xf32>
    %182 = vector.broadcast %180 : vector<16x1xf32> to vector<16x1024xf32>
    %183 = arith.mulf %182, %181 : vector<16x1024xf32>
    %184 = arith.addf %179, %183 : vector<16x1024xf32>
    %185 = vector.extract_strided_slice %35 {offsets = [0, 30], sizes = [16, 1], strides = [1, 1]} : vector<16x32xf32> to vector<16x1xf32>
    %c0_77 = arith.constant 0 : index
    %c30 = arith.constant 30 : index
    %186 = vector.load %arg7[%c0_77, %c30] : memref<16x1152xf32, #tpu.memory_space<vmem>>, vector<16x1024xf32>
    %187 = vector.broadcast %185 : vector<16x1xf32> to vector<16x1024xf32>
    %188 = arith.mulf %187, %186 : vector<16x1024xf32>
    %189 = arith.addf %184, %188 : vector<16x1024xf32>
    %190 = vector.extract_strided_slice %35 {offsets = [0, 31], sizes = [16, 1], strides = [1, 1]} : vector<16x32xf32> to vector<16x1xf32>
    %c0_78 = arith.constant 0 : index
    %c31 = arith.constant 31 : index
    %191 = vector.load %arg7[%c0_78, %c31] : memref<16x1152xf32, #tpu.memory_space<vmem>>, vector<16x1024xf32>
    %192 = vector.broadcast %190 : vector<16x1xf32> to vector<16x1024xf32>
    %193 = arith.mulf %192, %191 : vector<16x1024xf32>
    %194 = arith.addf %189, %193 : vector<16x1024xf32>
    %c0_79 = arith.constant 0 : index
    %c0_80 = arith.constant 0 : index
    %195 = vector.load %arg4[%c0_79, %c0_80] : memref<16x8xf32, #tpu.memory_space<vmem>>, vector<16x1xf32>
    %196 = vector.broadcast %195 : vector<16x1xf32> to vector<16x1024xf32>
    %197 = arith.addf %194, %196 : vector<16x1024xf32>
    %cst_81 = arith.constant 0.000000e+00 : f32
    %198 = vector.broadcast %cst_81 : f32 to vector<16x1024xf32>
    %199 = arith.maximumf %197, %198 : vector<16x1024xf32>
    %c0_82 = arith.constant 0 : index
    %c0_83 = arith.constant 0 : index
    %200 = vector.load %arg5[%c0_82, %c0_83] : memref<1x1024xf32, #tpu.memory_space<vmem>>, vector<1x1024xf32>
    %201 = vector.broadcast %200 : vector<1x1024xf32> to vector<16x1024xf32>
    %202 = arith.mulf %199, %201 : vector<16x1024xf32>
    %203 = vector.extract_strided_slice %202 {offsets = [0, 0], sizes = [16, 128], strides = [1, 1]} : vector<16x1024xf32> to vector<16x128xf32>
    %cst_84 = arith.constant dense<0.000000e+00> : vector<16xf32>
    %204 = vector.multi_reduction <add>, %203, %cst_84 [1] : vector<16x128xf32> to vector<16xf32>
    %205 = vector.shape_cast %204 : vector<16xf32> to vector<16x1xf32>
    %c0_85 = arith.constant 0 : index
    %c0_86 = arith.constant 0 : index
    %206 = vector.load %arg8[%c0_85, %c0_86] : memref<16x8xf32, #tpu.memory_space<vmem>>, vector<16x1xf32>
    tpu.vector_store %arg8[%c0_85, %c0_86], %205 {strides = array<i32>} : memref<16x8xf32, #tpu.memory_space<vmem>>, vector<16x1xf32>,
    %207 = vector.extract_strided_slice %202 {offsets = [0, 128], sizes = [16, 128], strides = [1, 1]} : vector<16x1024xf32> to vector<16x128xf32>
    %cst_87 = arith.constant dense<0.000000e+00> : vector<16xf32>
    %208 = vector.multi_reduction <add>, %207, %cst_87 [1] : vector<16x128xf32> to vector<16xf32>
    %209 = vector.shape_cast %208 : vector<16xf32> to vector<16x1xf32>
    %c0_88 = arith.constant 0 : index
    %c1_89 = arith.constant 1 : index
    %210 = vector.load %arg8[%c0_88, %c1_89] : memref<16x8xf32, #tpu.memory_space<vmem>>, vector<16x1xf32>
    tpu.vector_store %arg8[%c0_88, %c1_89], %209 {strides = array<i32>} : memref<16x8xf32, #tpu.memory_space<vmem>>, vector<16x1xf32>,
    %211 = vector.extract_strided_slice %202 {offsets = [0, 256], sizes = [16, 128], strides = [1, 1]} : vector<16x1024xf32> to vector<16x128xf32>
    %cst_90 = arith.constant dense<0.000000e+00> : vector<16xf32>
    %212 = vector.multi_reduction <add>, %211, %cst_90 [1] : vector<16x128xf32> to vector<16xf32>
    %213 = vector.shape_cast %212 : vector<16xf32> to vector<16x1xf32>
    %c0_91 = arith.constant 0 : index
    %c2_92 = arith.constant 2 : index
    %214 = vector.load %arg8[%c0_91, %c2_92] : memref<16x8xf32, #tpu.memory_space<vmem>>, vector<16x1xf32>
    tpu.vector_store %arg8[%c0_91, %c2_92], %213 {strides = array<i32>} : memref<16x8xf32, #tpu.memory_space<vmem>>, vector<16x1xf32>,
    %215 = vector.extract_strided_slice %202 {offsets = [0, 384], sizes = [16, 128], strides = [1, 1]} : vector<16x1024xf32> to vector<16x128xf32>
    %cst_93 = arith.constant dense<0.000000e+00> : vector<16xf32>
    %216 = vector.multi_reduction <add>, %215, %cst_93 [1] : vector<16x128xf32> to vector<16xf32>
    %217 = vector.shape_cast %216 : vector<16xf32> to vector<16x1xf32>
    %c0_94 = arith.constant 0 : index
    %c3_95 = arith.constant 3 : index
    %218 = vector.load %arg8[%c0_94, %c3_95] : memref<16x8xf32, #tpu.memory_space<vmem>>, vector<16x1xf32>
    tpu.vector_store %arg8[%c0_94, %c3_95], %217 {strides = array<i32>} : memref<16x8xf32, #tpu.memory_space<vmem>>, vector<16x1xf32>,
    %219 = vector.extract_strided_slice %202 {offsets = [0, 512], sizes = [16, 128], strides = [1, 1]} : vector<16x1024xf32> to vector<16x128xf32>
    %cst_96 = arith.constant dense<0.000000e+00> : vector<16xf32>
    %220 = vector.multi_reduction <add>, %219, %cst_96 [1] : vector<16x128xf32> to vector<16xf32>
    %221 = vector.shape_cast %220 : vector<16xf32> to vector<16x1xf32>
    %c0_97 = arith.constant 0 : index
    %c4_98 = arith.constant 4 : index
    %222 = vector.load %arg8[%c0_97, %c4_98] : memref<16x8xf32, #tpu.memory_space<vmem>>, vector<16x1xf32>
    tpu.vector_store %arg8[%c0_97, %c4_98], %221 {strides = array<i32>} : memref<16x8xf32, #tpu.memory_space<vmem>>, vector<16x1xf32>,
    %223 = vector.extract_strided_slice %202 {offsets = [0, 640], sizes = [16, 128], strides = [1, 1]} : vector<16x1024xf32> to vector<16x128xf32>
    %cst_99 = arith.constant dense<0.000000e+00> : vector<16xf32>
    %224 = vector.multi_reduction <add>, %223, %cst_99 [1] : vector<16x128xf32> to vector<16xf32>
    %225 = vector.shape_cast %224 : vector<16xf32> to vector<16x1xf32>
    %c0_100 = arith.constant 0 : index
    %c5_101 = arith.constant 5 : index
    %226 = vector.load %arg8[%c0_100, %c5_101] : memref<16x8xf32, #tpu.memory_space<vmem>>, vector<16x1xf32>
    tpu.vector_store %arg8[%c0_100, %c5_101], %225 {strides = array<i32>} : memref<16x8xf32, #tpu.memory_space<vmem>>, vector<16x1xf32>,
    %227 = vector.extract_strided_slice %202 {offsets = [0, 768], sizes = [16, 128], strides = [1, 1]} : vector<16x1024xf32> to vector<16x128xf32>
    %cst_102 = arith.constant dense<0.000000e+00> : vector<16xf32>
    %228 = vector.multi_reduction <add>, %227, %cst_102 [1] : vector<16x128xf32> to vector<16xf32>
    %229 = vector.shape_cast %228 : vector<16xf32> to vector<16x1xf32>
    %c0_103 = arith.constant 0 : index
    %c6_104 = arith.constant 6 : index
    %230 = vector.load %arg8[%c0_103, %c6_104] : memref<16x8xf32, #tpu.memory_space<vmem>>, vector<16x1xf32>
    tpu.vector_store %arg8[%c0_103, %c6_104], %229 {strides = array<i32>} : memref<16x8xf32, #tpu.memory_space<vmem>>, vector<16x1xf32>,
    %231 = vector.extract_strided_slice %202 {offsets = [0, 896], sizes = [16, 128], strides = [1, 1]} : vector<16x1024xf32> to vector<16x128xf32>
    %cst_105 = arith.constant dense<0.000000e+00> : vector<16xf32>
    %232 = vector.multi_reduction <add>, %231, %cst_105 [1] : vector<16x128xf32> to vector<16xf32>
    %233 = vector.shape_cast %232 : vector<16xf32> to vector<16x1xf32>
    %c0_106 = arith.constant 0 : index
    %c7_107 = arith.constant 7 : index
    %234 = vector.load %arg8[%c0_106, %c7_107] : memref<16x8xf32, #tpu.memory_space<vmem>>, vector<16x1xf32>
    tpu.vector_store %arg8[%c0_106, %c7_107], %233 {strides = array<i32>} : memref<16x8xf32, #tpu.memory_space<vmem>>, vector<16x1xf32>,
    %c0_108 = arith.constant 0 : index
    %c0_109 = arith.constant 0 : index
    %235 = vector.load %arg8[%c0_108, %c0_109] : memref<16x8xf32, #tpu.memory_space<vmem>>, vector<16x8xf32>
    %cst_110 = arith.constant dense<0.000000e+00> : vector<16xf32>
    %236 = vector.multi_reduction <add>, %235, %cst_110 [1] : vector<16x8xf32> to vector<16xf32>
    %237 = vector.shape_cast %236 : vector<16xf32> to vector<16x1xf32>
    %cst_111 = arith.constant 5.200000e+02 : f32
    %238 = vector.broadcast %cst_111 : f32 to vector<16x1xf32>
    %239 = arith.divf %237, %238 : vector<16x1xf32>
    %240 = arith.mulf %202, %202 : vector<16x1024xf32>
    %cst_112 = arith.constant dense<0.000000e+00> : vector<16xf32>
    %241 = vector.multi_reduction <add>, %240, %cst_112 [1] : vector<16x1024xf32> to vector<16xf32>
    %242 = vector.shape_cast %241 : vector<16xf32> to vector<16x1xf32>
    %cst_113 = arith.constant 5.200000e+02 : f32
    %243 = vector.broadcast %cst_113 : f32 to vector<16x1xf32>
    %244 = arith.divf %242, %243 : vector<16x1xf32>
    %245 = arith.mulf %239, %239 : vector<16x1xf32>
    %246 = arith.subf %244, %245 : vector<16x1xf32>
    %c0_114 = arith.constant 0 : index
    %c1_115 = arith.constant 1 : index
    %247 = vector.load %arg4[%c0_114, %c1_115] : memref<16x8xf32, #tpu.memory_space<vmem>>, vector<16x1xf32>
    %cst_116 = arith.constant 9.99999974E-6 : f32
    %248 = vector.broadcast %cst_116 : f32 to vector<16x1xf32>
    %249 = arith.addf %246, %248 : vector<16x1xf32>
    %250 = math.rsqrt %249 : vector<16x1xf32>
    %251 = arith.mulf %247, %250 : vector<16x1xf32>
    %cst_117 = arith.constant 0.0153846154 : f32
    %252 = vector.broadcast %cst_117 : f32 to vector<16x8xf32>
    %253 = arith.mulf %235, %252 : vector<16x8xf32>
    %254 = vector.broadcast %239 : vector<16x1xf32> to vector<16x8xf32>
    %255 = arith.subf %253, %254 : vector<16x8xf32>
    %256 = vector.broadcast %251 : vector<16x1xf32> to vector<16x8xf32>
    %257 = arith.mulf %255, %256 : vector<16x8xf32>
    %c0_118 = arith.constant 0 : index
    %c2_119 = arith.constant 2 : index
    %258 = vector.load %arg4[%c0_118, %c2_119] : memref<16x8xf32, #tpu.memory_space<vmem>>, vector<16x1xf32>
    %259 = vector.broadcast %258 : vector<16x1xf32> to vector<16x8xf32>
    %260 = arith.addf %257, %259 : vector<16x8xf32>
    %c0_120 = arith.constant 0 : index
    %c3_121 = arith.constant 3 : index
    %261 = vector.load %arg4[%c0_120, %c3_121] : memref<16x8xf32, #tpu.memory_space<vmem>>, vector<16x1xf32>
    %262 = vector.broadcast %261 : vector<16x1xf32> to vector<16x8xf32>
    %263 = arith.mulf %260, %262 : vector<16x8xf32>
    %cst_122 = arith.constant dense<0.000000e+00> : vector<8xf32>
    %264 = vector.multi_reduction <add>, %263, %cst_122 [0] : vector<16x8xf32> to vector<8xf32>
    %265 = vector.shape_cast %264 : vector<8xf32> to vector<1x8xf32>
    %c0_123 = arith.constant 0 : index
    %c5_124 = arith.constant 5 : index
    %266 = vector.load %arg4[%c0_123, %c5_124] : memref<16x8xf32, #tpu.memory_space<vmem>>, vector<1x1xf32>
    %267 = vector.broadcast %266 : vector<1x1xf32> to vector<1x8xf32>
    %268 = arith.addf %265, %267 : vector<1x8xf32>
    %c0_125 = arith.constant 0 : index
    %c4_126 = arith.constant 4 : index
    %269 = vector.load %arg4[%c0_125, %c4_126] : memref<16x8xf32, #tpu.memory_space<vmem>>, vector<16x1xf32>
    %270 = vector.broadcast %269 : vector<16x1xf32> to vector<16x8xf32>
    %271 = arith.mulf %260, %270 : vector<16x8xf32>
    %cst_127 = arith.constant dense<0.000000e+00> : vector<8xf32>
    %272 = vector.multi_reduction <add>, %271, %cst_127 [0] : vector<16x8xf32> to vector<8xf32>
    %273 = vector.shape_cast %272 : vector<8xf32> to vector<1x8xf32>
    %c1_128 = arith.constant 1 : index
    %c5_129 = arith.constant 5 : index
    %274 = vector.load %arg4[%c1_128, %c5_129] : memref<16x8xf32, #tpu.memory_space<vmem>>, vector<1x1xf32>
    %275 = vector.broadcast %274 : vector<1x1xf32> to vector<1x8xf32>
    %276 = arith.addf %273, %275 : vector<1x8xf32>
    %277 = tpu.concatenate %268, %276 in 0 : vector<1x8xf32>, vector<1x8xf32> -> vector<2x8xf32>
    %cst_130 = arith.constant dense<0xFF800000> : vector<8xf32>
    %278 = vector.multi_reduction <maximumf>, %277, %cst_130 [0] : vector<2x8xf32> to vector<8xf32>
    %279 = vector.shape_cast %278 : vector<8xf32> to vector<1x8xf32>
    %280 = vector.broadcast %279 : vector<1x8xf32> to vector<2x8xf32>
    %281 = arith.subf %277, %280 : vector<2x8xf32>
    %282 = math.exp %281 : vector<2x8xf32>
    %cst_131 = arith.constant dense<0.000000e+00> : vector<8xf32>
    %283 = vector.multi_reduction <add>, %282, %cst_131 [0] : vector<2x8xf32> to vector<8xf32>
    %284 = vector.shape_cast %283 : vector<8xf32> to vector<1x8xf32>
    %285 = math.log %284 : vector<1x8xf32>
    %286 = vector.broadcast %285 : vector<1x8xf32> to vector<2x8xf32>
    %287 = arith.subf %281, %286 : vector<2x8xf32>
    %c0_132 = arith.constant 0 : index
    %c0_133 = arith.constant 0 : index
    %288 = vector.load %arg6[%c0_132, %c0_133] : memref<2x8xf32, #tpu.memory_space<vmem>>, vector<2x8xf32>
    tpu.vector_store %arg6[%c0_132, %c0_133], %287 {strides = array<i32>} : memref<2x8xf32, #tpu.memory_space<vmem>>, vector<2x8xf32>,
    return
  }
  func.func @transform_0(%arg0: i32) -> (i32, i32, i32) {
    %c0_i32 = arith.constant 0 : i32
    %c0_i32_0 = arith.constant 0 : i32
    %c0_i32_1 = arith.constant 0 : i32
    %c0_i32_2 = arith.constant 0 : i32
    return %c0_i32, %c0_i32_0, %c0_i32_1 : i32, i32, i32
  }
  func.func @transform_1(%arg0: i32) -> (i32, i32) {
    %c0_i32 = arith.constant 0 : i32
    %c0_i32_0 = arith.constant 0 : i32
    %c0_i32_1 = arith.constant 0 : i32
    return %c0_i32, %c0_i32_0 : i32, i32
  }
  func.func @transform_2(%arg0: i32) -> (i32, i32) {
    %c0_i32 = arith.constant 0 : i32
    %c0_i32_0 = arith.constant 0 : i32
    %c0_i32_1 = arith.constant 0 : i32
    return %c0_i32, %c0_i32_0 : i32, i32
  }
  func.func @transform_3(%arg0: i32) -> (i32, i32) {
    %c0_i32 = arith.constant 0 : i32
    %c0_i32_0 = arith.constant 0 : i32
    %c0_i32_1 = arith.constant 0 : i32
    return %c0_i32, %c0_i32_0 : i32, i32
  }
  func.func @transform_4(%arg0: i32) -> (i32, i32) {
    %c0_i32 = arith.constant 0 : i32
    %c0_i32_0 = arith.constant 0 : i32
    %c0_i32_1 = arith.constant 0 : i32
    return %c0_i32, %c0_i32_0 : i32, i32
  }
  func.func @transform_5(%arg0: i32) -> (i32, i32) {
    %c0_i32 = arith.constant 0 : i32
    %c0_i32_0 = arith.constant 0 : i32
    %c0_i32_1 = arith.constant 0 : i32
    return %c0_i32, %c0_i32_0 : i32, i32
  }
}

</mosaic_0001>

<llo_original>
// kernel: interpretable_cnn_forward.1
$region0: #{interpretable_cnn_forward.1}
  #allocation0 [shape = 'u32[]', space=smem, size = 0x4, offset = 0x4, fixed_abs, tag = 'smem constant byte address 0x4 - core index']
  #allocation1 [shape = 'u32[72,128]{1,0:T(1,128)}', space=vmem, size = 0x9000, scoped, tag = 'internal scratch']
  #allocation2 [shape = 'f32[16,1152]{1,0:T(8,128)}', space=vmem, size = 0x12000, scoped, tag = 'scratch operand']
  #allocation3 [shape = 'f32[16,8]{1,0:T(8,128)}', space=vmem, size = 0x2000, scoped, tag = 'scratch operand']
  %s0 = inlined_call_operand.vmem [shape: f32[8,8,96], index: 0, kind: input, shape index: {}]
  %s1 = inlined_call_operand.vmem [shape: f32[16,8], index: 1, kind: input, shape index: {}]
  %s2 = inlined_call_operand.vmem [shape: f32[16,32], index: 2, kind: input, shape index: {}]
  %s3 = inlined_call_operand.vmem [shape: f32[16,8], index: 3, kind: input, shape index: {}]
  %s4 = inlined_call_operand.vmem [shape: f32[1,1024], index: 4, kind: input, shape index: {}]
  %s5 = inlined_call_operand.hbm [shape: f32[2,8], index: 5, kind: output, shape index: {}]
  %s6 = sld [smem:[#allocation0]]
  $region30: #{interpretable_cnn_forward.1} parent=0
    _
  %s8 = ssub.s32 1, %s6
  %s9 = scalar_select 0, %s8, %s6
  $region1: #{interpretable_cnn_forward.1} parent=0
    #allocation4 [shape = 'u8[1024]{0}', space=vmem, size = 0x400, scoped, tag = 'output window, operand 0, single buffered']
    #allocation5 [shape = 's32[1]{0}', space=sflag, size = 0x4, scoped, tag = 'scoped memory for interpretable_cnn_forward.1']
    %10 = vsyncpa [#allocation5], 0
    // Predicated region
    $region2: #{interpretable_cnn_forward.1} parent=1 // pred_check
      _
    $region3: #{interpretable_cnn_forward.1} parent=1 // pred_check_branch
      %12 = sbr.rel (0) target = $region5
    $region4: #{interpretable_cnn_forward.1} parent=1 // pred_region
      _
    $region5: #{interpretable_cnn_forward.1} parent=1 // pred_fallthru
      _
    // Predicated region
    $region6: #{interpretable_cnn_forward.1} parent=1 // pred_check
      _
    $region7: #{interpretable_cnn_forward.1} parent=1 // pred_check_branch
      %14 = sbr.rel (0) target = $region9
    $region8: #{interpretable_cnn_forward.1} parent=1 // pred_region
      _
    $region9: #{interpretable_cnn_forward.1} parent=1 // pred_fallthru
      _
    // Predicated region
    $region10: #{interpretable_cnn_forward.1} parent=1 // pred_check
      _
    $region11: #{interpretable_cnn_forward.1} parent=1 // pred_check_branch
      %16 = sbr.rel (0) target = $region13
    $region12: #{interpretable_cnn_forward.1} parent=1 // pred_region
      _
    $region13: #{interpretable_cnn_forward.1} parent=1 // pred_fallthru
      _
    // Predicated region
    $region14: #{interpretable_cnn_forward.1} parent=1 // pred_check
      _
    $region15: #{interpretable_cnn_forward.1} parent=1 // pred_check_branch
      %18 = sbr.rel (0) target = $region17
    $region16: #{interpretable_cnn_forward.1} parent=1 // pred_region
      _
    $region17: #{interpretable_cnn_forward.1} parent=1 // pred_fallthru
      _
    // Predicated region
    $region18: #{interpretable_cnn_forward.1} parent=1 // pred_check
      _
    $region19: #{interpretable_cnn_forward.1} parent=1 // pred_check_branch
      %20 = sbr.rel (0) target = $region21
    $region20: #{interpretable_cnn_forward.1} parent=1 // pred_region
      _
    $region21: #{interpretable_cnn_forward.1} parent=1 // pred_fallthru
      _
    %21 = vst [vmem:[#allocation2] sm:$0xff] 0.0
    %22 = vst [vmem:[#allocation2 + $0x8] sm:$0xff] 0.0
    %23 = vst [vmem:[#allocation2 + $0x10] sm:$0xff] 0.0
    %24 = vst [vmem:[#allocation2 + $0x18] sm:$0xff] 0.0
    %25 = vst [vmem:[#allocation2 + $0x20] sm:$0xff] 0.0
    %26 = vst [vmem:[#allocation2 + $0x28] sm:$0xff] 0.0
    %27 = vst [vmem:[#allocation2 + $0x30] sm:$0xff] 0.0
    %28 = vst [vmem:[#allocation2 + $0x38] sm:$0xff] 0.0
    %29 = vst [vmem:[#allocation2 + $0x40] sm:$0xff] 0.0
    %30 = vst [vmem:[#allocation2 + $0x48] sm:$0xff] 0.0
    %31 = vst [vmem:[#allocation2 + $0x50] sm:$0xff] 0.0
    %32 = vst [vmem:[#allocation2 + $0x58] sm:$0xff] 0.0
    %33 = vst [vmem:[#allocation2 + $0x60] sm:$0xff] 0.0
    %34 = vst [vmem:[#allocation2 + $0x68] sm:$0xff] 0.0
    %35 = vst [vmem:[#allocation2 + $0x70] sm:$0xff] 0.0
    %36 = vst [vmem:[#allocation2 + $0x78] sm:$0xff] 0.0
    %37 = vst [vmem:[#allocation2 + $0x80] sm:$0xff] 0.0
    %38 = vst [vmem:[#allocation2 + $0x88] sm:$0xff] 0.0
    %v39 = vld [vmem:[%s1] sm:$0xff]
    %v40 = vld [vmem:[%s1 + $0x8] sm:$0xff]
    %v41 = vld [vmem:[%s0] sm:$0xff]
    %vm42 = vcmask 64512
    %v44 = vsel %vm42, %v39, 0
    %v47 = vsel %vm42, %v40, 0
    %49 = vmatpush.msra.mxu0 0.0
    %50 = vmatpush.msra.mxu0 0.0
    %51 = vmatpush.msra.mxu0 0.0
    %52 = vmatpush.msra.mxu0 0.0
    %53 = vmatpush.msra.mxu0 0.0
    %54 = vmatpush.msra.mxu0 0.0
    %55 = vmatpush.msra.mxu0 0.0
    %56 = vmatpush.msra.mxu0 0.0
    %57 = vmatpush.msra.mxu0 0.0
    %58 = vmatpush.msra.mxu0 0.0
    %59 = vmatpush.msra.mxu0 0.0
    %60 = vmatpush.msra.mxu0 0.0
    %61 = vmatpush.msra.mxu0 0.0
    %62 = vmatpush.msra.mxu0 0.0
    %63 = vmatpush.msra.mxu0 0.0
    %64 = vmatpush.msra.mxu0 %v41
    %65 = vmatmul.f32.gmra.mxu0 %v44
    %v66 = vpop.f32.mrf.mxu0
    %v67 = vadd.f32 0.0, %v66
    %68 = vmatmul.f32.gmra.mxu0 %v47
    %v69 = vpop.f32.mrf.mxu0
    %v70 = vadd.f32 0.0, %v69
    %71 = vdwg.mxu0
    %vm72 = vcmask 785408
    %73 = vst.msk [vmem:[#allocation2] sm:$0xff] %vm72, %v67
    %74 = vst.msk [vmem:[#allocation2 + $0x48] sm:$0xff] %vm72, %v70
    %s75 = scalar_lea.vmem %s0, 8
    %v76 = vld [vmem:[%s75] sm:$0xff]
    %77 = vmatpush.msra.mxu0 0.0
    %78 = vmatpush.msra.mxu0 0.0
    %79 = vmatpush.msra.mxu0 0.0
    %80 = vmatpush.msra.mxu0 0.0
    %81 = vmatpush.msra.mxu0 0.0
    %82 = vmatpush.msra.mxu0 0.0
    %83 = vmatpush.msra.mxu0 0.0
    %84 = vmatpush.msra.mxu0 0.0
    %85 = vmatpush.msra.mxu0 0.0
    %86 = vmatpush.msra.mxu0 0.0
    %87 = vmatpush.msra.mxu0 0.0
    %88 = vmatpush.msra.mxu0 0.0
    %89 = vmatpush.msra.mxu0 0.0
    %90 = vmatpush.msra.mxu0 0.0
    %91 = vmatpush.msra.mxu0 0.0
    %92 = vmatpush.msra.mxu0 %v76
    %93 = vmatmul.f32.gmra.mxu0 %v44
    %v94 = vpop.f32.mrf.mxu0
    %v95 = vadd.f32 0.0, %v94
    %96 = vmatmul.f32.gmra.mxu0 %v47
    %v97 = vpop.f32.mrf.mxu0
    %v98 = vadd.f32 0.0, %v97
    %99 = vdwg.mxu0
    %100 = vst.msk [vmem:[#allocation2 + $0x8] sm:$0xff] %vm72, %v95
    %101 = vst.msk [vmem:[#allocation2 + $0x50] sm:$0xff] %vm72, %v98
    %s102 = scalar_lea.vmem %s0, 16
    %v103 = vld [vmem:[%s102] sm:$0xff]
    %104 = vmatpush.msra.mxu0 0.0
    %105 = vmatpush.msra.mxu0 0.0
    %106 = vmatpush.msra.mxu0 0.0
    %107 = vmatpush.msra.mxu0 0.0
    %108 = vmatpush.msra.mxu0 0.0
    %109 = vmatpush.msra.mxu0 0.0
    %110 = vmatpush.msra.mxu0 0.0
    %111 = vmatpush.msra.mxu0 0.0
    %112 = vmatpush.msra.mxu0 0.0
    %113 = vmatpush.msra.mxu0 0.0
    %114 = vmatpush.msra.mxu0 0.0
    %115 = vmatpush.msra.mxu0 0.0
    %116 = vmatpush.msra.mxu0 0.0
    %117 = vmatpush.msra.mxu0 0.0
    %118 = vmatpush.msra.mxu0 0.0
    %119 = vmatpush.msra.mxu0 %v103
    %120 = vmatmul.f32.gmra.mxu0 %v44
    %v121 = vpop.f32.mrf.mxu0
    %v122 = vadd.f32 0.0, %v121
    %123 = vmatmul.f32.gmra.mxu0 %v47
    %v124 = vpop.f32.mrf.mxu0
    %v125 = vadd.f32 0.0, %v124
    %126 = vdwg.mxu0
    %127 = vst.msk [vmem:[#allocation2 + $0x10] sm:$0xff] %vm72, %v122
    %128 = vst.msk [vmem:[#allocation2 + $0x58] sm:$0xff] %vm72, %v125
    %s129 = scalar_lea.vmem %s0, 24
    %v130 = vld [vmem:[%s129] sm:$0xff]
    %131 = vmatpush.msra.mxu0 0.0
    %132 = vmatpush.msra.mxu0 0.0
    %133 = vmatpush.msra.mxu0 0.0
    %134 = vmatpush.msra.mxu0 0.0
    %135 = vmatpush.msra.mxu0 0.0
    %136 = vmatpush.msra.mxu0 0.0
    %137 = vmatpush.msra.mxu0 0.0
    %138 = vmatpush.msra.mxu0 0.0
    %139 = vmatpush.msra.mxu0 0.0
    %140 = vmatpush.msra.mxu0 0.0
    %141 = vmatpush.msra.mxu0 0.0
    %142 = vmatpush.msra.mxu0 0.0
    %143 = vmatpush.msra.mxu0 0.0
    %144 = vmatpush.msra.mxu0 0.0
    %145 = vmatpush.msra.mxu0 0.0
    %146 = vmatpush.msra.mxu0 %v130
    %147 = vmatmul.f32.gmra.mxu0 %v44
    %v148 = vpop.f32.mrf.mxu0
    %v149 = vadd.f32 0.0, %v148
    %150 = vmatmul.f32.gmra.mxu0 %v47
    %v151 = vpop.f32.mrf.mxu0
    %v152 = vadd.f32 0.0, %v151
    %153 = vdwg.mxu0
    %154 = vst.msk [vmem:[#allocation2 + $0x18] sm:$0xff] %vm72, %v149
    %155 = vst.msk [vmem:[#allocation2 + $0x60] sm:$0xff] %vm72, %v152
    %s156 = scalar_lea.vmem %s0, 32
    %v157 = vld [vmem:[%s156] sm:$0xff]
    %158 = vmatpush.msra.mxu0 0.0
    %159 = vmatpush.msra.mxu0 0.0
    %160 = vmatpush.msra.mxu0 0.0
    %161 = vmatpush.msra.mxu0 0.0
    %162 = vmatpush.msra.mxu0 0.0
    %163 = vmatpush.msra.mxu0 0.0
    %164 = vmatpush.msra.mxu0 0.0
    %165 = vmatpush.msra.mxu0 0.0
    %166 = vmatpush.msra.mxu0 0.0
    %167 = vmatpush.msra.mxu0 0.0
    %168 = vmatpush.msra.mxu0 0.0
    %169 = vmatpush.msra.mxu0 0.0
    %170 = vmatpush.msra.mxu0 0.0
    %171 = vmatpush.msra.mxu0 0.0
    %172 = vmatpush.msra.mxu0 0.0
    %173 = vmatpush.msra.mxu0 %v157
    %174 = vmatmul.f32.gmra.mxu0 %v44
    %v175 = vpop.f32.mrf.mxu0
    %v176 = vadd.f32 0.0, %v175
    %177 = vmatmul.f32.gmra.mxu0 %v47
    %v178 = vpop.f32.mrf.mxu0
    %v179 = vadd.f32 0.0, %v178
    %180 = vdwg.mxu0
    %181 = vst.msk [vmem:[#allocation2 + $0x20] sm:$0xff] %vm72, %v176
    %182 = vst.msk [vmem:[#allocation2 + $0x68] sm:$0xff] %vm72, %v179
    %s183 = scalar_lea.vmem %s0, 40
    %v184 = vld [vmem:[%s183] sm:$0xff]
    %185 = vmatpush.msra.mxu0 0.0
    %186 = vmatpush.msra.mxu0 0.0
    %187 = vmatpush.msra.mxu0 0.0
    %188 = vmatpush.msra.mxu0 0.0
    %189 = vmatpush.msra.mxu0 0.0
    %190 = vmatpush.msra.mxu0 0.0
    %191 = vmatpush.msra.mxu0 0.0
    %192 = vmatpush.msra.mxu0 0.0
    %193 = vmatpush.msra.mxu0 0.0
    %194 = vmatpush.msra.mxu0 0.0
    %195 = vmatpush.msra.mxu0 0.0
    %196 = vmatpush.msra.mxu0 0.0
    %197 = vmatpush.msra.mxu0 0.0
    %198 = vmatpush.msra.mxu0 0.0
    %199 = vmatpush.msra.mxu0 0.0
    %200 = vmatpush.msra.mxu0 %v184
    %201 = vmatmul.f32.gmra.mxu0 %v44
    %v202 = vpop.f32.mrf.mxu0
    %v203 = vadd.f32 0.0, %v202
    %204 = vmatmul.f32.gmra.mxu0 %v47
    %v205 = vpop.f32.mrf.mxu0
    %v206 = vadd.f32 0.0, %v205
    %207 = vdwg.mxu0
    %208 = vst.msk [vmem:[#allocation2 + $0x28] sm:$0xff] %vm72, %v203
    %209 = vst.msk [vmem:[#allocation2 + $0x70] sm:$0xff] %vm72, %v206
    %s210 = scalar_lea.vmem %s0, 48
    %v211 = vld [vmem:[%s210] sm:$0xff]
    %212 = vmatpush.msra.mxu0 0.0
    %213 = vmatpush.msra.mxu0 0.0
    %214 = vmatpush.msra.mxu0 0.0
    %215 = vmatpush.msra.mxu0 0.0
    %216 = vmatpush.msra.mxu0 0.0
    %217 = vmatpush.msra.mxu0 0.0
    %218 = vmatpush.msra.mxu0 0.0
    %219 = vmatpush.msra.mxu0 0.0
    %220 = vmatpush.msra.mxu0 0.0
    %221 = vmatpush.msra.mxu0 0.0
    %222 = vmatpush.msra.mxu0 0.0
    %223 = vmatpush.msra.mxu0 0.0
    %224 = vmatpush.msra.mxu0 0.0
    %225 = vmatpush.msra.mxu0 0.0
    %226 = vmatpush.msra.mxu0 0.0
    %227 = vmatpush.msra.mxu0 %v211
    %228 = vmatmul.f32.gmra.mxu0 %v44
    %v229 = vpop.f32.mrf.mxu0
    %v230 = vadd.f32 0.0, %v229
    %231 = vmatmul.f32.gmra.mxu0 %v47
    %v232 = vpop.f32.mrf.mxu0
    %v233 = vadd.f32 0.0, %v232
    %234 = vdwg.mxu0
    %235 = vst.msk [vmem:[#allocation2 + $0x30] sm:$0xff] %vm72, %v230
    %236 = vst.msk [vmem:[#allocation2 + $0x78] sm:$0xff] %vm72, %v233
    %s237 = scalar_lea.vmem %s0, 56
    %v238 = vld [vmem:[%s237] sm:$0xff]
    %239 = vmatpush.msra.mxu0 0.0
    %240 = vmatpush.msra.mxu0 0.0
    %241 = vmatpush.msra.mxu0 0.0
    %242 = vmatpush.msra.mxu0 0.0
    %243 = vmatpush.msra.mxu0 0.0
    %244 = vmatpush.msra.mxu0 0.0
    %245 = vmatpush.msra.mxu0 0.0
    %246 = vmatpush.msra.mxu0 0.0
    %247 = vmatpush.msra.mxu0 0.0
    %248 = vmatpush.msra.mxu0 0.0
    %249 = vmatpush.msra.mxu0 0.0
    %250 = vmatpush.msra.mxu0 0.0
    %251 = vmatpush.msra.mxu0 0.0
    %252 = vmatpush.msra.mxu0 0.0
    %253 = vmatpush.msra.mxu0 0.0
    %254 = vmatpush.msra.mxu0 %v238
    %255 = vmatmul.f32.gmra.mxu0 %v44
    %v256 = vpop.f32.mrf.mxu0
    %v257 = vadd.f32 0.0, %v256
    %258 = vmatmul.f32.gmra.mxu0 %v47
    %v259 = vpop.f32.mrf.mxu0
    %v260 = vadd.f32 0.0, %v259
    %261 = vdwg.mxu0
    %262 = vst.msk [vmem:[#allocation2 + $0x38] sm:$0xff] %vm72, %v257
    %263 = vst.msk [vmem:[#allocation2 + $0x80] sm:$0xff] %vm72, %v260
    %v264 = vld [vmem:[%s2] sm:$0xff]
    %v265 = vld [vmem:[%s2 + $0x8] sm:$0xff]
    %v266 = vld [vmem:[#allocation2] sm:$0xff]
    %v267 = vld [vmem:[#allocation2 + $0x8] sm:$0xff]
    %v268 = vld [vmem:[#allocation2 + $0x10] sm:$0xff]
    %v269 = vld [vmem:[#allocation2 + $0x18] sm:$0xff]
    %v270 = vld [vmem:[#allocation2 + $0x20] sm:$0xff]
    %v271 = vld [vmem:[#allocation2 + $0x28] sm:$0xff]
    %v272 = vld [vmem:[#allocation2 + $0x30] sm:$0xff]
    %v273 = vld [vmem:[#allocation2 + $0x38] sm:$0xff]
    %v274 = vld [vmem:[#allocation2 + $0x48] sm:$0xff]
    %v275 = vld [vmem:[#allocation2 + $0x50] sm:$0xff]
    %v276 = vld [vmem:[#allocation2 + $0x58] sm:$0xff]
    %v277 = vld [vmem:[#allocation2 + $0x60] sm:$0xff]
    %v278 = vld [vmem:[#allocation2 + $0x68] sm:$0xff]
    %v279 = vld [vmem:[#allocation2 + $0x70] sm:$0xff]
    %v280 = vld [vmem:[#allocation2 + $0x78] sm:$0xff]
    %v281 = vld [vmem:[#allocation2 + $0x80] sm:$0xff]
    %283 = vset.pattern.permute.xlu0 0
    %284 = vperm.xlu0 %283, %v264
    %v285 = vpop.permute.xlu0 %284
    %288 = vset.pattern.permute.xlu0 0
    %289 = vperm.xlu0 %288, %v265
    %v290 = vpop.permute.xlu0 %289
    %v292 = vmul.f32 %v285, %v266
    %v293 = vmul.f32 %v285, %v267
    %v294 = vmul.f32 %v285, %v268
    %v295 = vmul.f32 %v285, %v269
    %v296 = vmul.f32 %v285, %v270
    %v297 = vmul.f32 %v285, %v271
    %v298 = vmul.f32 %v285, %v272
    %v299 = vmul.f32 %v285, %v273
    %v300 = vmul.f32 %v290, %v274
    %v301 = vmul.f32 %v290, %v275
    %v302 = vmul.f32 %v290, %v276
    %v303 = vmul.f32 %v290, %v277
    %v304 = vmul.f32 %v290, %v278
    %v305 = vmul.f32 %v290, %v279
    %v306 = vmul.f32 %v290, %v280
    %v307 = vmul.f32 %v290, %v281
    %v308 = vld [vmem:[#allocation2] sm:$0xff]
    %v309 = vld [vmem:[#allocation2 + $0x8] sm:$0xff]
    %v310 = vld [vmem:[#allocation2 + $0x10] sm:$0xff]
    %v311 = vld [vmem:[#allocation2 + $0x18] sm:$0xff]
    %v312 = vld [vmem:[#allocation2 + $0x20] sm:$0xff]
    %v313 = vld [vmem:[#allocation2 + $0x28] sm:$0xff]
    %v314 = vld [vmem:[#allocation2 + $0x30] sm:$0xff]
    %v315 = vld [vmem:[#allocation2 + $0x38] sm:$0xff]
    %v316 = vld [vmem:[#allocation2 + $0x40] sm:$0xff]
    %v317 = vld [vmem:[#allocation2 + $0x48] sm:$0xff]
    %v318 = vld [vmem:[#allocation2 + $0x50] sm:$0xff]
    %v319 = vld [vmem:[#allocation2 + $0x58] sm:$0xff]
    %v320 = vld [vmem:[#allocation2 + $0x60] sm:$0xff]
    %v321 = vld [vmem:[#allocation2 + $0x68] sm:$0xff]
    %v322 = vld [vmem:[#allocation2 + $0x70] sm:$0xff]
    %v323 = vld [vmem:[#allocation2 + $0x78] sm:$0xff]
    %v324 = vld [vmem:[#allocation2 + $0x80] sm:$0xff]
    %v325 = vld [vmem:[#allocation2 + $0x88] sm:$0xff]
    %326 = vset.pattern.permute.xlu0 1
    %327 = vperm.xlu0 %326, %v264
    %v328 = vpop.permute.xlu0 %327
    %330 = vset.pattern.permute.xlu0 1
    %331 = vperm.xlu0 %330, %v265
    %v332 = vpop.permute.xlu0 %331
    %v334 = vmul.f32 %v328, %v308
    %v335 = vmul.f32 %v328, %v309
    %v336 = vmul.f32 %v328, %v310
    %v337 = vmul.f32 %v328, %v311
    %v338 = vmul.f32 %v328, %v312
    %v339 = vmul.f32 %v328, %v313
    %v340 = vmul.f32 %v328, %v314
    %v341 = vmul.f32 %v328, %v315
    %v342 = vmul.f32 %v328, %v316
    %v343 = vmul.f32 %v332, %v317
    %v344 = vmul.f32 %v332, %v318
    %v345 = vmul.f32 %v332, %v319
    %v346 = vmul.f32 %v332, %v320
    %v347 = vmul.f32 %v332, %v321
    %v348 = vmul.f32 %v332, %v322
    %v349 = vmul.f32 %v332, %v323
    %v350 = vmul.f32 %v332, %v324
    %v351 = vmul.f32 %v332, %v325
    %370 = vrot.lane.b32.xlu0 %v334, 127
    %v371 = vpop.permute.xlu0 %370
    %372 = vrot.lane.b32.xlu0 %v335, 127
    %v373 = vpop.permute.xlu0 %372
    %374 = vrot.lane.b32.xlu0 %v336, 127
    %v375 = vpop.permute.xlu0 %374
    %376 = vrot.lane.b32.xlu0 %v337, 127
    %v377 = vpop.permute.xlu0 %376
    %378 = vrot.lane.b32.xlu0 %v338, 127
    %v379 = vpop.permute.xlu0 %378
    %380 = vrot.lane.b32.xlu0 %v339, 127
    %v381 = vpop.permute.xlu0 %380
    %382 = vrot.lane.b32.xlu0 %v340, 127
    %v383 = vpop.permute.xlu0 %382
    %384 = vrot.lane.b32.xlu0 %v341, 127
    %v385 = vpop.permute.xlu0 %384
    %386 = vrot.lane.b32.xlu0 %v342, 127
    %v387 = vpop.permute.xlu0 %386
    %388 = vrot.lane.b32.xlu0 %v343, 127
    %v389 = vpop.permute.xlu0 %388
    %390 = vrot.lane.b32.xlu0 %v344, 127
    %v391 = vpop.permute.xlu0 %390
    %392 = vrot.lane.b32.xlu0 %v345, 127
    %v393 = vpop.permute.xlu0 %392
    %394 = vrot.lane.b32.xlu0 %v346, 127
    %v395 = vpop.permute.xlu0 %394
    %396 = vrot.lane.b32.xlu0 %v347, 127
    %v397 = vpop.permute.xlu0 %396
    %398 = vrot.lane.b32.xlu0 %v348, 127
    %v399 = vpop.permute.xlu0 %398
    %400 = vrot.lane.b32.xlu0 %v349, 127
    %v401 = vpop.permute.xlu0 %400
    %402 = vrot.lane.b32.xlu0 %v350, 127
    %v403 = vpop.permute.xlu0 %402
    %404 = vrot.lane.b32.xlu0 %v351, 127
    %v405 = vpop.permute.xlu0 %404
    %vm406 = vcmask 1039360
    %v407 = vsel %vm406, %v371, %v373
    %v408 = vsel %vm406, %v373, %v375
    %v409 = vsel %vm406, %v375, %v377
    %v410 = vsel %vm406, %v377, %v379
    %v411 = vsel %vm406, %v379, %v381
    %v412 = vsel %vm406, %v381, %v383
    %v413 = vsel %vm406, %v383, %v385
    %v414 = vsel %vm406, %v385, %v387
    %v415 = vsel %vm406, %v389, %v391
    %v416 = vsel %vm406, %v391, %v393
    %v417 = vsel %vm406, %v393, %v395
    %v418 = vsel %vm406, %v395, %v397
    %v419 = vsel %vm406, %v397, %v399
    %v420 = vsel %vm406, %v399, %v401
    %v421 = vsel %vm406, %v401, %v403
    %v422 = vsel %vm406, %v403, %v405
    %v439 = vadd.f32 %v292, %v407
    %v440 = vadd.f32 %v293, %v408
    %v441 = vadd.f32 %v294, %v409
    %v442 = vadd.f32 %v295, %v410
    %v443 = vadd.f32 %v296, %v411
    %v444 = vadd.f32 %v297, %v412
    %v445 = vadd.f32 %v298, %v413
    %v446 = vadd.f32 %v299, %v414
    %v447 = vadd.f32 %v300, %v415
    %v448 = vadd.f32 %v301, %v416
    %v449 = vadd.f32 %v302, %v417
    %v450 = vadd.f32 %v303, %v418
    %v451 = vadd.f32 %v304, %v419
    %v452 = vadd.f32 %v305, %v420
    %v453 = vadd.f32 %v306, %v421
    %v454 = vadd.f32 %v307, %v422
    %455 = vset.pattern.permute.xlu0 2
    %456 = vperm.xlu0 %455, %v264
    %v457 = vpop.permute.xlu0 %456
    %459 = vset.pattern.permute.xlu0 2
    %460 = vperm.xlu0 %459, %v265
    %v461 = vpop.permute.xlu0 %460
    %v463 = vmul.f32 %v457, %v308
    %v464 = vmul.f32 %v457, %v309
    %v465 = vmul.f32 %v457, %v310
    %v466 = vmul.f32 %v457, %v311
    %v467 = vmul.f32 %v457, %v312
    %v468 = vmul.f32 %v457, %v313
    %v469 = vmul.f32 %v457, %v314
    %v470 = vmul.f32 %v457, %v315
    %v471 = vmul.f32 %v457, %v316
    %v472 = vmul.f32 %v461, %v317
    %v473 = vmul.f32 %v461, %v318
    %v474 = vmul.f32 %v461, %v319
    %v475 = vmul.f32 %v461, %v320
    %v476 = vmul.f32 %v461, %v321
    %v477 = vmul.f32 %v461, %v322
    %v478 = vmul.f32 %v461, %v323
    %v479 = vmul.f32 %v461, %v324
    %v480 = vmul.f32 %v461, %v325
    %499 = vrot.lane.b32.xlu0 %v463, 126
    %v500 = vpop.permute.xlu0 %499
    %501 = vrot.lane.b32.xlu0 %v464, 126
    %v502 = vpop.permute.xlu0 %501
    %503 = vrot.lane.b32.xlu0 %v465, 126
    %v504 = vpop.permute.xlu0 %503
    %505 = vrot.lane.b32.xlu0 %v466, 126
    %v506 = vpop.permute.xlu0 %505
    %507 = vrot.lane.b32.xlu0 %v467, 126
    %v508 = vpop.permute.xlu0 %507
    %509 = vrot.lane.b32.xlu0 %v468, 126
    %v510 = vpop.permute.xlu0 %509
    %511 = vrot.lane.b32.xlu0 %v469, 126
    %v512 = vpop.permute.xlu0 %511
    %513 = vrot.lane.b32.xlu0 %v470, 126
    %v514 = vpop.permute.xlu0 %513
    %515 = vrot.lane.b32.xlu0 %v471, 126
    %v516 = vpop.permute.xlu0 %515
    %517 = vrot.lane.b32.xlu0 %v472, 126
    %v518 = vpop.permute.xlu0 %517
    %519 = vrot.lane.b32.xlu0 %v473, 126
    %v520 = vpop.permute.xlu0 %519
    %521 = vrot.lane.b32.xlu0 %v474, 126
    %v522 = vpop.permute.xlu0 %521
    %523 = vrot.lane.b32.xlu0 %v475, 126
    %v524 = vpop.permute.xlu0 %523
    %525 = vrot.lane.b32.xlu0 %v476, 126
    %v526 = vpop.permute.xlu0 %525
    %527 = vrot.lane.b32.xlu0 %v477, 126
    %v528 = vpop.permute.xlu0 %527
    %529 = vrot.lane.b32.xlu0 %v478, 126
    %v530 = vpop.permute.xlu0 %529
    %531 = vrot.lane.b32.xlu0 %v479, 126
    %v532 = vpop.permute.xlu0 %531
    %533 = vrot.lane.b32.xlu0 %v480, 126
    %v534 = vpop.permute.xlu0 %533
    %vm535 = vcmask 1031168
    %v536 = vsel %vm535, %v500, %v502
    %v537 = vsel %vm535, %v502, %v504
    %v538 = vsel %vm535, %v504, %v506
    %v539 = vsel %vm535, %v506, %v508
    %v540 = vsel %vm535, %v508, %v510
    %v541 = vsel %vm535, %v510, %v512
    %v542 = vsel %vm535, %v512, %v514
    %v543 = vsel %vm535, %v514, %v516
    %v544 = vsel %vm535, %v518, %v520
    %v545 = vsel %vm535, %v520, %v522
    %v546 = vsel %vm535, %v522, %v524
    %v547 = vsel %vm535, %v524, %v526
    %v548 = vsel %vm535, %v526, %v528
    %v549 = vsel %vm535, %v528, %v530
    %v550 = vsel %vm535, %v530, %v532
    %v551 = vsel %vm535, %v532, %v534
    %v568 = vadd.f32 %v439, %v536
    %v569 = vadd.f32 %v440, %v537
    %v570 = vadd.f32 %v441, %v538
    %v571 = vadd.f32 %v442, %v539
    %v572 = vadd.f32 %v443, %v540
    %v573 = vadd.f32 %v444, %v541
    %v574 = vadd.f32 %v445, %v542
    %v575 = vadd.f32 %v446, %v543
    %v576 = vadd.f32 %v447, %v544
    %v577 = vadd.f32 %v448, %v545
    %v578 = vadd.f32 %v449, %v546
    %v579 = vadd.f32 %v450, %v547
    %v580 = vadd.f32 %v451, %v548
    %v581 = vadd.f32 %v452, %v549
    %v582 = vadd.f32 %v453, %v550
    %v583 = vadd.f32 %v454, %v551
    %584 = vset.pattern.permute.xlu0 3
    %585 = vperm.xlu0 %584, %v264
    %v586 = vpop.permute.xlu0 %585
    %588 = vset.pattern.permute.xlu0 3
    %589 = vperm.xlu0 %588, %v265
    %v590 = vpop.permute.xlu0 %589
    %v592 = vmul.f32 %v586, %v308
    %v593 = vmul.f32 %v586, %v309
    %v594 = vmul.f32 %v586, %v310
    %v595 = vmul.f32 %v586, %v311
    %v596 = vmul.f32 %v586, %v312
    %v597 = vmul.f32 %v586, %v313
    %v598 = vmul.f32 %v586, %v314
    %v599 = vmul.f32 %v586, %v315
    %v600 = vmul.f32 %v586, %v316
    %v601 = vmul.f32 %v590, %v317
    %v602 = vmul.f32 %v590, %v318
    %v603 = vmul.f32 %v590, %v319
    %v604 = vmul.f32 %v590, %v320
    %v605 = vmul.f32 %v590, %v321
    %v606 = vmul.f32 %v590, %v322
    %v607 = vmul.f32 %v590, %v323
    %v608 = vmul.f32 %v590, %v324
    %v609 = vmul.f32 %v590, %v325
    %628 = vrot.lane.b32.xlu0 %v592, 125
    %v629 = vpop.permute.xlu0 %628
    %630 = vrot.lane.b32.xlu0 %v593, 125
    %v631 = vpop.permute.xlu0 %630
    %632 = vrot.lane.b32.xlu0 %v594, 125
    %v633 = vpop.permute.xlu0 %632
    %634 = vrot.lane.b32.xlu0 %v595, 125
    %v635 = vpop.permute.xlu0 %634
    %636 = vrot.lane.b32.xlu0 %v596, 125
    %v637 = vpop.permute.xlu0 %636
    %638 = vrot.lane.b32.xlu0 %v597, 125
    %v639 = vpop.permute.xlu0 %638
    %640 = vrot.lane.b32.xlu0 %v598, 125
    %v641 = vpop.permute.xlu0 %640
    %642 = vrot.lane.b32.xlu0 %v599, 125
    %v643 = vpop.permute.xlu0 %642
    %644 = vrot.lane.b32.xlu0 %v600, 125
    %v645 = vpop.permute.xlu0 %644
    %646 = vrot.lane.b32.xlu0 %v601, 125
    %v647 = vpop.permute.xlu0 %646
    %648 = vrot.lane.b32.xlu0 %v602, 125
    %v649 = vpop.permute.xlu0 %648
    %650 = vrot.lane.b32.xlu0 %v603, 125
    %v651 = vpop.permute.xlu0 %650
    %652 = vrot.lane.b32.xlu0 %v604, 125
    %v653 = vpop.permute.xlu0 %652
    %654 = vrot.lane.b32.xlu0 %v605, 125
    %v655 = vpop.permute.xlu0 %654
    %656 = vrot.lane.b32.xlu0 %v606, 125
    %v657 = vpop.permute.xlu0 %656
    %658 = vrot.lane.b32.xlu0 %v607, 125
    %v659 = vpop.permute.xlu0 %658
    %660 = vrot.lane.b32.xlu0 %v608, 125
    %v661 = vpop.permute.xlu0 %660
    %662 = vrot.lane.b32.xlu0 %v609, 125
    %v663 = vpop.permute.xlu0 %662
    %vm664 = vcmask 1022976
    %v665 = vsel %vm664, %v629, %v631
    %v666 = vsel %vm664, %v631, %v633
    %v667 = vsel %vm664, %v633, %v635
    %v668 = vsel %vm664, %v635, %v637
    %v669 = vsel %vm664, %v637, %v639
    %v670 = vsel %vm664, %v639, %v641
    %v671 = vsel %vm664, %v641, %v643
    %v672 = vsel %vm664, %v643, %v645
    %v673 = vsel %vm664, %v647, %v649
    %v674 = vsel %vm664, %v649, %v651
    %v675 = vsel %vm664, %v651, %v653
    %v676 = vsel %vm664, %v653, %v655
    %v677 = vsel %vm664, %v655, %v657
    %v678 = vsel %vm664, %v657, %v659
    %v679 = vsel %vm664, %v659, %v661
    %v680 = vsel %vm664, %v661, %v663
    %v697 = vadd.f32 %v568, %v665
    %v698 = vadd.f32 %v569, %v666
    %v699 = vadd.f32 %v570, %v667
    %v700 = vadd.f32 %v571, %v668
    %v701 = vadd.f32 %v572, %v669
    %v702 = vadd.f32 %v573, %v670
    %v703 = vadd.f32 %v574, %v671
    %v704 = vadd.f32 %v575, %v672
    %v705 = vadd.f32 %v576, %v673
    %v706 = vadd.f32 %v577, %v674
    %v707 = vadd.f32 %v578, %v675
    %v708 = vadd.f32 %v579, %v676
    %v709 = vadd.f32 %v580, %v677
    %v710 = vadd.f32 %v581, %v678
    %v711 = vadd.f32 %v582, %v679
    %v712 = vadd.f32 %v583, %v680
    %713 = vset.pattern.permute.xlu0 4
    %714 = vperm.xlu0 %713, %v264
    %v715 = vpop.permute.xlu0 %714
    %717 = vset.pattern.permute.xlu0 4
    %718 = vperm.xlu0 %717, %v265
    %v719 = vpop.permute.xlu0 %718
    %v721 = vmul.f32 %v715, %v308
    %v722 = vmul.f32 %v715, %v309
    %v723 = vmul.f32 %v715, %v310
    %v724 = vmul.f32 %v715, %v311
    %v725 = vmul.f32 %v715, %v312
    %v726 = vmul.f32 %v715, %v313
    %v727 = vmul.f32 %v715, %v314
    %v728 = vmul.f32 %v715, %v315
    %v729 = vmul.f32 %v715, %v316
    %v730 = vmul.f32 %v719, %v317
    %v731 = vmul.f32 %v719, %v318
    %v732 = vmul.f32 %v719, %v319
    %v733 = vmul.f32 %v719, %v320
    %v734 = vmul.f32 %v719, %v321
    %v735 = vmul.f32 %v719, %v322
    %v736 = vmul.f32 %v719, %v323
    %v737 = vmul.f32 %v719, %v324
    %v738 = vmul.f32 %v719, %v325
    %757 = vrot.lane.b32.xlu0 %v721, 124
    %v758 = vpop.permute.xlu0 %757
    %759 = vrot.lane.b32.xlu0 %v722, 124
    %v760 = vpop.permute.xlu0 %759
    %761 = vrot.lane.b32.xlu0 %v723, 124
    %v762 = vpop.permute.xlu0 %761
    %763 = vrot.lane.b32.xlu0 %v724, 124
    %v764 = vpop.permute.xlu0 %763
    %765 = vrot.lane.b32.xlu0 %v725, 124
    %v766 = vpop.permute.xlu0 %765
    %767 = vrot.lane.b32.xlu0 %v726, 124
    %v768 = vpop.permute.xlu0 %767
    %769 = vrot.lane.b32.xlu0 %v727, 124
    %v770 = vpop.permute.xlu0 %769
    %771 = vrot.lane.b32.xlu0 %v728, 124
    %v772 = vpop.permute.xlu0 %771
    %773 = vrot.lane.b32.xlu0 %v729, 124
    %v774 = vpop.permute.xlu0 %773
    %775 = vrot.lane.b32.xlu0 %v730, 124
    %v776 = vpop.permute.xlu0 %775
    %777 = vrot.lane.b32.xlu0 %v731, 124
    %v778 = vpop.permute.xlu0 %777
    %779 = vrot.lane.b32.xlu0 %v732, 124
    %v780 = vpop.permute.xlu0 %779
    %781 = vrot.lane.b32.xlu0 %v733, 124
    %v782 = vpop.permute.xlu0 %781
    %783 = vrot.lane.b32.xlu0 %v734, 124
    %v784 = vpop.permute.xlu0 %783
    %785 = vrot.lane.b32.xlu0 %v735, 124
    %v786 = vpop.permute.xlu0 %785
    %787 = vrot.lane.b32.xlu0 %v736, 124
    %v788 = vpop.permute.xlu0 %787
    %789 = vrot.lane.b32.xlu0 %v737, 124
    %v790 = vpop.permute.xlu0 %789
    %791 = vrot.lane.b32.xlu0 %v738, 124
    %v792 = vpop.permute.xlu0 %791
    %vm793 = vcmask 1014784
    %v794 = vsel %vm793, %v758, %v760
    %v795 = vsel %vm793, %v760, %v762
    %v796 = vsel %vm793, %v762, %v764
    %v797 = vsel %vm793, %v764, %v766
    %v798 = vsel %vm793, %v766, %v768
    %v799 = vsel %vm793, %v768, %v770
    %v800 = vsel %vm793, %v770, %v772
    %v801 = vsel %vm793, %v772, %v774
    %v802 = vsel %vm793, %v776, %v778
    %v803 = vsel %vm793, %v778, %v780
    %v804 = vsel %vm793, %v780, %v782
    %v805 = vsel %vm793, %v782, %v784
    %v806 = vsel %vm793, %v784, %v786
    %v807 = vsel %vm793, %v786, %v788
    %v808 = vsel %vm793, %v788, %v790
    %v809 = vsel %vm793, %v790, %v792
    %v826 = vadd.f32 %v697, %v794
    %v827 = vadd.f32 %v698, %v795
    %v828 = vadd.f32 %v699, %v796
    %v829 = vadd.f32 %v700, %v797
    %v830 = vadd.f32 %v701, %v798
    %v831 = vadd.f32 %v702, %v799
    %v832 = vadd.f32 %v703, %v800
    %v833 = vadd.f32 %v704, %v801
    %v834 = vadd.f32 %v705, %v802
    %v835 = vadd.f32 %v706, %v803
    %v836 = vadd.f32 %v707, %v804
    %v837 = vadd.f32 %v708, %v805
    %v838 = vadd.f32 %v709, %v806
    %v839 = vadd.f32 %v710, %v807
    %v840 = vadd.f32 %v711, %v808
    %v841 = vadd.f32 %v712, %v809
    %842 = vset.pattern.permute.xlu0 5
    %843 = vperm.xlu0 %842, %v264
    %v844 = vpop.permute.xlu0 %843
    %846 = vset.pattern.permute.xlu0 5
    %847 = vperm.xlu0 %846, %v265
    %v848 = vpop.permute.xlu0 %847
    %v850 = vmul.f32 %v844, %v308
    %v851 = vmul.f32 %v844, %v309
    %v852 = vmul.f32 %v844, %v310
    %v853 = vmul.f32 %v844, %v311
    %v854 = vmul.f32 %v844, %v312
    %v855 = vmul.f32 %v844, %v313
    %v856 = vmul.f32 %v844, %v314
    %v857 = vmul.f32 %v844, %v315
    %v858 = vmul.f32 %v844, %v316
    %v859 = vmul.f32 %v848, %v317
    %v860 = vmul.f32 %v848, %v318
    %v861 = vmul.f32 %v848, %v319
    %v862 = vmul.f32 %v848, %v320
    %v863 = vmul.f32 %v848, %v321
    %v864 = vmul.f32 %v848, %v322
    %v865 = vmul.f32 %v848, %v323
    %v866 = vmul.f32 %v848, %v324
    %v867 = vmul.f32 %v848, %v325
    %886 = vrot.lane.b32.xlu0 %v850, 123
    %v887 = vpop.permute.xlu0 %886
    %888 = vrot.lane.b32.xlu0 %v851, 123
    %v889 = vpop.permute.xlu0 %888
    %890 = vrot.lane.b32.xlu0 %v852, 123
    %v891 = vpop.permute.xlu0 %890
    %892 = vrot.lane.b32.xlu0 %v853, 123
    %v893 = vpop.permute.xlu0 %892
    %894 = vrot.lane.b32.xlu0 %v854, 123
    %v895 = vpop.permute.xlu0 %894
    %896 = vrot.lane.b32.xlu0 %v855, 123
    %v897 = vpop.permute.xlu0 %896
    %898 = vrot.lane.b32.xlu0 %v856, 123
    %v899 = vpop.permute.xlu0 %898
    %900 = vrot.lane.b32.xlu0 %v857, 123
    %v901 = vpop.permute.xlu0 %900
    %902 = vrot.lane.b32.xlu0 %v858, 123
    %v903 = vpop.permute.xlu0 %902
    %904 = vrot.lane.b32.xlu0 %v859, 123
    %v905 = vpop.permute.xlu0 %904
    %906 = vrot.lane.b32.xlu0 %v860, 123
    %v907 = vpop.permute.xlu0 %906
    %908 = vrot.lane.b32.xlu0 %v861, 123
    %v909 = vpop.permute.xlu0 %908
    %910 = vrot.lane.b32.xlu0 %v862, 123
    %v911 = vpop.permute.xlu0 %910
    %912 = vrot.lane.b32.xlu0 %v863, 123
    %v913 = vpop.permute.xlu0 %912
    %914 = vrot.lane.b32.xlu0 %v864, 123
    %v915 = vpop.permute.xlu0 %914
    %916 = vrot.lane.b32.xlu0 %v865, 123
    %v917 = vpop.permute.xlu0 %916
    %918 = vrot.lane.b32.xlu0 %v866, 123
    %v919 = vpop.permute.xlu0 %918
    %920 = vrot.lane.b32.xlu0 %v867, 123
    %v921 = vpop.permute.xlu0 %920
    %vm922 = vcmask 1006592
    %v923 = vsel %vm922, %v887, %v889
    %v924 = vsel %vm922, %v889, %v891
    %v925 = vsel %vm922, %v891, %v893
    %v926 = vsel %vm922, %v893, %v895
    %v927 = vsel %vm922, %v895, %v897
    %v928 = vsel %vm922, %v897, %v899
    %v929 = vsel %vm922, %v899, %v901
    %v930 = vsel %vm922, %v901, %v903
    %v931 = vsel %vm922, %v905, %v907
    %v932 = vsel %vm922, %v907, %v909
    %v933 = vsel %vm922, %v909, %v911
    %v934 = vsel %vm922, %v911, %v913
    %v935 = vsel %vm922, %v913, %v915
    %v936 = vsel %vm922, %v915, %v917
    %v937 = vsel %vm922, %v917, %v919
    %v938 = vsel %vm922, %v919, %v921
    %v955 = vadd.f32 %v826, %v923
    %v956 = vadd.f32 %v827, %v924
    %v957 = vadd.f32 %v828, %v925
    %v958 = vadd.f32 %v829, %v926
    %v959 = vadd.f32 %v830, %v927
    %v960 = vadd.f32 %v831, %v928
    %v961 = vadd.f32 %v832, %v929
    %v962 = vadd.f32 %v833, %v930
    %v963 = vadd.f32 %v834, %v931
    %v964 = vadd.f32 %v835, %v932
    %v965 = vadd.f32 %v836, %v933
    %v966 = vadd.f32 %v837, %v934
    %v967 = vadd.f32 %v838, %v935
    %v968 = vadd.f32 %v839, %v936
    %v969 = vadd.f32 %v840, %v937
    %v970 = vadd.f32 %v841, %v938
    %971 = vset.pattern.permute.xlu0 6
    %972 = vperm.xlu0 %971, %v264
    %v973 = vpop.permute.xlu0 %972
    %975 = vset.pattern.permute.xlu0 6
    %976 = vperm.xlu0 %975, %v265
    %v977 = vpop.permute.xlu0 %976
    %v979 = vmul.f32 %v973, %v308
    %v980 = vmul.f32 %v973, %v309
    %v981 = vmul.f32 %v973, %v310
    %v982 = vmul.f32 %v973, %v311
    %v983 = vmul.f32 %v973, %v312
    %v984 = vmul.f32 %v973, %v313
    %v985 = vmul.f32 %v973, %v314
    %v986 = vmul.f32 %v973, %v315
    %v987 = vmul.f32 %v973, %v316
    %v988 = vmul.f32 %v977, %v317
    %v989 = vmul.f32 %v977, %v318
    %v990 = vmul.f32 %v977, %v319
    %v991 = vmul.f32 %v977, %v320
    %v992 = vmul.f32 %v977, %v321
    %v993 = vmul.f32 %v977, %v322
    %v994 = vmul.f32 %v977, %v323
    %v995 = vmul.f32 %v977, %v324
    %v996 = vmul.f32 %v977, %v325
    %1015 = vrot.lane.b32.xlu0 %v979, 122
    %v1016 = vpop.permute.xlu0 %1015
    %1017 = vrot.lane.b32.xlu0 %v980, 122
    %v1018 = vpop.permute.xlu0 %1017
    %1019 = vrot.lane.b32.xlu0 %v981, 122
    %v1020 = vpop.permute.xlu0 %1019
    %1021 = vrot.lane.b32.xlu0 %v982, 122
    %v1022 = vpop.permute.xlu0 %1021
    %1023 = vrot.lane.b32.xlu0 %v983, 122
    %v1024 = vpop.permute.xlu0 %1023
    %1025 = vrot.lane.b32.xlu0 %v984, 122
    %v1026 = vpop.permute.xlu0 %1025
    %1027 = vrot.lane.b32.xlu0 %v985, 122
    %v1028 = vpop.permute.xlu0 %1027
    %1029 = vrot.lane.b32.xlu0 %v986, 122
    %v1030 = vpop.permute.xlu0 %1029
    %1031 = vrot.lane.b32.xlu0 %v987, 122
    %v1032 = vpop.permute.xlu0 %1031
    %1033 = vrot.lane.b32.xlu0 %v988, 122
    %v1034 = vpop.permute.xlu0 %1033
    %1035 = vrot.lane.b32.xlu0 %v989, 122
    %v1036 = vpop.permute.xlu0 %1035
    %1037 = vrot.lane.b32.xlu0 %v990, 122
    %v1038 = vpop.permute.xlu0 %1037
    %1039 = vrot.lane.b32.xlu0 %v991, 122
    %v1040 = vpop.permute.xlu0 %1039
    %1041 = vrot.lane.b32.xlu0 %v992, 122
    %v1042 = vpop.permute.xlu0 %1041
    %1043 = vrot.lane.b32.xlu0 %v993, 122
    %v1044 = vpop.permute.xlu0 %1043
    %1045 = vrot.lane.b32.xlu0 %v994, 122
    %v1046 = vpop.permute.xlu0 %1045
    %1047 = vrot.lane.b32.xlu0 %v995, 122
    %v1048 = vpop.permute.xlu0 %1047
    %1049 = vrot.lane.b32.xlu0 %v996, 122
    %v1050 = vpop.permute.xlu0 %1049
    %vm1051 = vcmask 998400
    %v1052 = vsel %vm1051, %v1016, %v1018
    %v1053 = vsel %vm1051, %v1018, %v1020
    %v1054 = vsel %vm1051, %v1020, %v1022
    %v1055 = vsel %vm1051, %v1022, %v1024
    %v1056 = vsel %vm1051, %v1024, %v1026
    %v1057 = vsel %vm1051, %v1026, %v1028
    %v1058 = vsel %vm1051, %v1028, %v1030
    %v1059 = vsel %vm1051, %v1030, %v1032
    %v1060 = vsel %vm1051, %v1034, %v1036
    %v1061 = vsel %vm1051, %v1036, %v1038
    %v1062 = vsel %vm1051, %v1038, %v1040
    %v1063 = vsel %vm1051, %v1040, %v1042
    %v1064 = vsel %vm1051, %v1042, %v1044
    %v1065 = vsel %vm1051, %v1044, %v1046
    %v1066 = vsel %vm1051, %v1046, %v1048
    %v1067 = vsel %vm1051, %v1048, %v1050
    %v1084 = vadd.f32 %v955, %v1052
    %v1085 = vadd.f32 %v956, %v1053
    %v1086 = vadd.f32 %v957, %v1054
    %v1087 = vadd.f32 %v958, %v1055
    %v1088 = vadd.f32 %v959, %v1056
    %v1089 = vadd.f32 %v960, %v1057
    %v1090 = vadd.f32 %v961, %v1058
    %v1091 = vadd.f32 %v962, %v1059
    %v1092 = vadd.f32 %v963, %v1060
    %v1093 = vadd.f32 %v964, %v1061
    %v1094 = vadd.f32 %v965, %v1062
    %v1095 = vadd.f32 %v966, %v1063
    %v1096 = vadd.f32 %v967, %v1064
    %v1097 = vadd.f32 %v968, %v1065
    %v1098 = vadd.f32 %v969, %v1066
    %v1099 = vadd.f32 %v970, %v1067
    %1100 = vset.pattern.permute.xlu0 7
    %1101 = vperm.xlu0 %1100, %v264
    %v1102 = vpop.permute.xlu0 %1101
    %1104 = vset.pattern.permute.xlu0 7
    %1105 = vperm.xlu0 %1104, %v265
    %v1106 = vpop.permute.xlu0 %1105
    %v1108 = vmul.f32 %v1102, %v308
    %v1109 = vmul.f32 %v1102, %v309
    %v1110 = vmul.f32 %v1102, %v310
    %v1111 = vmul.f32 %v1102, %v311
    %v1112 = vmul.f32 %v1102, %v312
    %v1113 = vmul.f32 %v1102, %v313
    %v1114 = vmul.f32 %v1102, %v314
    %v1115 = vmul.f32 %v1102, %v315
    %v1116 = vmul.f32 %v1102, %v316
    %v1117 = vmul.f32 %v1106, %v317
    %v1118 = vmul.f32 %v1106, %v318
    %v1119 = vmul.f32 %v1106, %v319
    %v1120 = vmul.f32 %v1106, %v320
    %v1121 = vmul.f32 %v1106, %v321
    %v1122 = vmul.f32 %v1106, %v322
    %v1123 = vmul.f32 %v1106, %v323
    %v1124 = vmul.f32 %v1106, %v324
    %v1125 = vmul.f32 %v1106, %v325
    %1144 = vrot.lane.b32.xlu0 %v1108, 121
    %v1145 = vpop.permute.xlu0 %1144
    %1146 = vrot.lane.b32.xlu0 %v1109, 121
    %v1147 = vpop.permute.xlu0 %1146
    %1148 = vrot.lane.b32.xlu0 %v1110, 121
    %v1149 = vpop.permute.xlu0 %1148
    %1150 = vrot.lane.b32.xlu0 %v1111, 121
    %v1151 = vpop.permute.xlu0 %1150
    %1152 = vrot.lane.b32.xlu0 %v1112, 121
    %v1153 = vpop.permute.xlu0 %1152
    %1154 = vrot.lane.b32.xlu0 %v1113, 121
    %v1155 = vpop.permute.xlu0 %1154
    %1156 = vrot.lane.b32.xlu0 %v1114, 121
    %v1157 = vpop.permute.xlu0 %1156
    %1158 = vrot.lane.b32.xlu0 %v1115, 121
    %v1159 = vpop.permute.xlu0 %1158
    %1160 = vrot.lane.b32.xlu0 %v1116, 121
    %v1161 = vpop.permute.xlu0 %1160
    %1162 = vrot.lane.b32.xlu0 %v1117, 121
    %v1163 = vpop.permute.xlu0 %1162
    %1164 = vrot.lane.b32.xlu0 %v1118, 121
    %v1165 = vpop.permute.xlu0 %1164
    %1166 = vrot.lane.b32.xlu0 %v1119, 121
    %v1167 = vpop.permute.xlu0 %1166
    %1168 = vrot.lane.b32.xlu0 %v1120, 121
    %v1169 = vpop.permute.xlu0 %1168
    %1170 = vrot.lane.b32.xlu0 %v1121, 121
    %v1171 = vpop.permute.xlu0 %1170
    %1172 = vrot.lane.b32.xlu0 %v1122, 121
    %v1173 = vpop.permute.xlu0 %1172
    %1174 = vrot.lane.b32.xlu0 %v1123, 121
    %v1175 = vpop.permute.xlu0 %1174
    %1176 = vrot.lane.b32.xlu0 %v1124, 121
    %v1177 = vpop.permute.xlu0 %1176
    %1178 = vrot.lane.b32.xlu0 %v1125, 121
    %v1179 = vpop.permute.xlu0 %1178
    %vm1180 = vcmask 990208
    %v1181 = vsel %vm1180, %v1145, %v1147
    %v1182 = vsel %vm1180, %v1147, %v1149
    %v1183 = vsel %vm1180, %v1149, %v1151
    %v1184 = vsel %vm1180, %v1151, %v1153
    %v1185 = vsel %vm1180, %v1153, %v1155
    %v1186 = vsel %vm1180, %v1155, %v1157
    %v1187 = vsel %vm1180, %v1157, %v1159
    %v1188 = vsel %vm1180, %v1159, %v1161
    %v1189 = vsel %vm1180, %v1163, %v1165
    %v1190 = vsel %vm1180, %v1165, %v1167
    %v1191 = vsel %vm1180, %v1167, %v1169
    %v1192 = vsel %vm1180, %v1169, %v1171
    %v1193 = vsel %vm1180, %v1171, %v1173
    %v1194 = vsel %vm1180, %v1173, %v1175
    %v1195 = vsel %vm1180, %v1175, %v1177
    %v1196 = vsel %vm1180, %v1177, %v1179
    %v1213 = vadd.f32 %v1084, %v1181
    %v1214 = vadd.f32 %v1085, %v1182
    %v1215 = vadd.f32 %v1086, %v1183
    %v1216 = vadd.f32 %v1087, %v1184
    %v1217 = vadd.f32 %v1088, %v1185
    %v1218 = vadd.f32 %v1089, %v1186
    %v1219 = vadd.f32 %v1090, %v1187
    %v1220 = vadd.f32 %v1091, %v1188
    %v1221 = vadd.f32 %v1092, %v1189
    %v1222 = vadd.f32 %v1093, %v1190
    %v1223 = vadd.f32 %v1094, %v1191
    %v1224 = vadd.f32 %v1095, %v1192
    %v1225 = vadd.f32 %v1096, %v1193
    %v1226 = vadd.f32 %v1097, %v1194
    %v1227 = vadd.f32 %v1098, %v1195
    %v1228 = vadd.f32 %v1099, %v1196
    %1229 = vset.pattern.permute.xlu0 8
    %1230 = vperm.xlu0 %1229, %v264
    %v1231 = vpop.permute.xlu0 %1230
    %1233 = vset.pattern.permute.xlu0 8
    %1234 = vperm.xlu0 %1233, %v265
    %v1235 = vpop.permute.xlu0 %1234
    %v1237 = vmul.f32 %v1231, %v308
    %v1238 = vmul.f32 %v1231, %v309
    %v1239 = vmul.f32 %v1231, %v310
    %v1240 = vmul.f32 %v1231, %v311
    %v1241 = vmul.f32 %v1231, %v312
    %v1242 = vmul.f32 %v1231, %v313
    %v1243 = vmul.f32 %v1231, %v314
    %v1244 = vmul.f32 %v1231, %v315
    %v1245 = vmul.f32 %v1231, %v316
    %v1246 = vmul.f32 %v1235, %v317
    %v1247 = vmul.f32 %v1235, %v318
    %v1248 = vmul.f32 %v1235, %v319
    %v1249 = vmul.f32 %v1235, %v320
    %v1250 = vmul.f32 %v1235, %v321
    %v1251 = vmul.f32 %v1235, %v322
    %v1252 = vmul.f32 %v1235, %v323
    %v1253 = vmul.f32 %v1235, %v324
    %v1254 = vmul.f32 %v1235, %v325
    %1273 = vrot.lane.b32.xlu0 %v1237, 120
    %v1274 = vpop.permute.xlu0 %1273
    %1275 = vrot.lane.b32.xlu0 %v1238, 120
    %v1276 = vpop.permute.xlu0 %1275
    %1277 = vrot.lane.b32.xlu0 %v1239, 120
    %v1278 = vpop.permute.xlu0 %1277
    %1279 = vrot.lane.b32.xlu0 %v1240, 120
    %v1280 = vpop.permute.xlu0 %1279
    %1281 = vrot.lane.b32.xlu0 %v1241, 120
    %v1282 = vpop.permute.xlu0 %1281
    %1283 = vrot.lane.b32.xlu0 %v1242, 120
    %v1284 = vpop.permute.xlu0 %1283
    %1285 = vrot.lane.b32.xlu0 %v1243, 120
    %v1286 = vpop.permute.xlu0 %1285
    %1287 = vrot.lane.b32.xlu0 %v1244, 120
    %v1288 = vpop.permute.xlu0 %1287
    %1289 = vrot.lane.b32.xlu0 %v1245, 120
    %v1290 = vpop.permute.xlu0 %1289
    %1291 = vrot.lane.b32.xlu0 %v1246, 120
    %v1292 = vpop.permute.xlu0 %1291
    %1293 = vrot.lane.b32.xlu0 %v1247, 120
    %v1294 = vpop.permute.xlu0 %1293
    %1295 = vrot.lane.b32.xlu0 %v1248, 120
    %v1296 = vpop.permute.xlu0 %1295
    %1297 = vrot.lane.b32.xlu0 %v1249, 120
    %v1298 = vpop.permute.xlu0 %1297
    %1299 = vrot.lane.b32.xlu0 %v1250, 120
    %v1300 = vpop.permute.xlu0 %1299
    %1301 = vrot.lane.b32.xlu0 %v1251, 120
    %v1302 = vpop.permute.xlu0 %1301
    %1303 = vrot.lane.b32.xlu0 %v1252, 120
    %v1304 = vpop.permute.xlu0 %1303
    %1305 = vrot.lane.b32.xlu0 %v1253, 120
    %v1306 = vpop.permute.xlu0 %1305
    %1307 = vrot.lane.b32.xlu0 %v1254, 120
    %v1308 = vpop.permute.xlu0 %1307
    %vm1309 = vcmask 982016
    %v1310 = vsel %vm1309, %v1274, %v1276
    %v1311 = vsel %vm1309, %v1276, %v1278
    %v1312 = vsel %vm1309, %v1278, %v1280
    %v1313 = vsel %vm1309, %v1280, %v1282
    %v1314 = vsel %vm1309, %v1282, %v1284
    %v1315 = vsel %vm1309, %v1284, %v1286
    %v1316 = vsel %vm1309, %v1286, %v1288
    %v1317 = vsel %vm1309, %v1288, %v1290
    %v1318 = vsel %vm1309, %v1292, %v1294
    %v1319 = vsel %vm1309, %v1294, %v1296
    %v1320 = vsel %vm1309, %v1296, %v1298
    %v1321 = vsel %vm1309, %v1298, %v1300
    %v1322 = vsel %vm1309, %v1300, %v1302
    %v1323 = vsel %vm1309, %v1302, %v1304
    %v1324 = vsel %vm1309, %v1304, %v1306
    %v1325 = vsel %vm1309, %v1306, %v1308
    %v1342 = vadd.f32 %v1213, %v1310
    %v1343 = vadd.f32 %v1214, %v1311
    %v1344 = vadd.f32 %v1215, %v1312
    %v1345 = vadd.f32 %v1216, %v1313
    %v1346 = vadd.f32 %v1217, %v1314
    %v1347 = vadd.f32 %v1218, %v1315
    %v1348 = vadd.f32 %v1219, %v1316
    %v1349 = vadd.f32 %v1220, %v1317
    %v1350 = vadd.f32 %v1221, %v1318
    %v1351 = vadd.f32 %v1222, %v1319
    %v1352 = vadd.f32 %v1223, %v1320
    %v1353 = vadd.f32 %v1224, %v1321
    %v1354 = vadd.f32 %v1225, %v1322
    %v1355 = vadd.f32 %v1226, %v1323
    %v1356 = vadd.f32 %v1227, %v1324
    %v1357 = vadd.f32 %v1228, %v1325
    %1358 = vset.pattern.permute.xlu0 9
    %1359 = vperm.xlu0 %1358, %v264
    %v1360 = vpop.permute.xlu0 %1359
    %1362 = vset.pattern.permute.xlu0 9
    %1363 = vperm.xlu0 %1362, %v265
    %v1364 = vpop.permute.xlu0 %1363
    %v1366 = vmul.f32 %v1360, %v308
    %v1367 = vmul.f32 %v1360, %v309
    %v1368 = vmul.f32 %v1360, %v310
    %v1369 = vmul.f32 %v1360, %v311
    %v1370 = vmul.f32 %v1360, %v312
    %v1371 = vmul.f32 %v1360, %v313
    %v1372 = vmul.f32 %v1360, %v314
    %v1373 = vmul.f32 %v1360, %v315
    %v1374 = vmul.f32 %v1360, %v316
    %v1375 = vmul.f32 %v1364, %v317
    %v1376 = vmul.f32 %v1364, %v318
    %v1377 = vmul.f32 %v1364, %v319
    %v1378 = vmul.f32 %v1364, %v320
    %v1379 = vmul.f32 %v1364, %v321
    %v1380 = vmul.f32 %v1364, %v322
    %v1381 = vmul.f32 %v1364, %v323
    %v1382 = vmul.f32 %v1364, %v324
    %v1383 = vmul.f32 %v1364, %v325
    %1402 = vrot.lane.b32.xlu0 %v1366, 119
    %v1403 = vpop.permute.xlu0 %1402
    %1404 = vrot.lane.b32.xlu0 %v1367, 119
    %v1405 = vpop.permute.xlu0 %1404
    %1406 = vrot.lane.b32.xlu0 %v1368, 119
    %v1407 = vpop.permute.xlu0 %1406
    %1408 = vrot.lane.b32.xlu0 %v1369, 119
    %v1409 = vpop.permute.xlu0 %1408
    %1410 = vrot.lane.b32.xlu0 %v1370, 119
    %v1411 = vpop.permute.xlu0 %1410
    %1412 = vrot.lane.b32.xlu0 %v1371, 119
    %v1413 = vpop.permute.xlu0 %1412
    %1414 = vrot.lane.b32.xlu0 %v1372, 119
    %v1415 = vpop.permute.xlu0 %1414
    %1416 = vrot.lane.b32.xlu0 %v1373, 119
    %v1417 = vpop.permute.xlu0 %1416
    %1418 = vrot.lane.b32.xlu0 %v1374, 119
    %v1419 = vpop.permute.xlu0 %1418
    %1420 = vrot.lane.b32.xlu0 %v1375, 119
    %v1421 = vpop.permute.xlu0 %1420
    %1422 = vrot.lane.b32.xlu0 %v1376, 119
    %v1423 = vpop.permute.xlu0 %1422
    %1424 = vrot.lane.b32.xlu0 %v1377, 119
    %v1425 = vpop.permute.xlu0 %1424
    %1426 = vrot.lane.b32.xlu0 %v1378, 119
    %v1427 = vpop.permute.xlu0 %1426
    %1428 = vrot.lane.b32.xlu0 %v1379, 119
    %v1429 = vpop.permute.xlu0 %1428
    %1430 = vrot.lane.b32.xlu0 %v1380, 119
    %v1431 = vpop.permute.xlu0 %1430
    %1432 = vrot.lane.b32.xlu0 %v1381, 119
    %v1433 = vpop.permute.xlu0 %1432
    %1434 = vrot.lane.b32.xlu0 %v1382, 119
    %v1435 = vpop.permute.xlu0 %1434
    %1436 = vrot.lane.b32.xlu0 %v1383, 119
    %v1437 = vpop.permute.xlu0 %1436
    %vm1438 = vcmask 973824
    %v1439 = vsel %vm1438, %v1403, %v1405
    %v1440 = vsel %vm1438, %v1405, %v1407
    %v1441 = vsel %vm1438, %v1407, %v1409
    %v1442 = vsel %vm1438, %v1409, %v1411
    %v1443 = vsel %vm1438, %v1411, %v1413
    %v1444 = vsel %vm1438, %v1413, %v1415
    %v1445 = vsel %vm1438, %v1415, %v1417
    %v1446 = vsel %vm1438, %v1417, %v1419
    %v1447 = vsel %vm1438, %v1421, %v1423
    %v1448 = vsel %vm1438, %v1423, %v1425
    %v1449 = vsel %vm1438, %v1425, %v1427
    %v1450 = vsel %vm1438, %v1427, %v1429
    %v1451 = vsel %vm1438, %v1429, %v1431
    %v1452 = vsel %vm1438, %v1431, %v1433
    %v1453 = vsel %vm1438, %v1433, %v1435
    %v1454 = vsel %vm1438, %v1435, %v1437
    %v1471 = vadd.f32 %v1342, %v1439
    %v1472 = vadd.f32 %v1343, %v1440
    %v1473 = vadd.f32 %v1344, %v1441
    %v1474 = vadd.f32 %v1345, %v1442
    %v1475 = vadd.f32 %v1346, %v1443
    %v1476 = vadd.f32 %v1347, %v1444
    %v1477 = vadd.f32 %v1348, %v1445
    %v1478 = vadd.f32 %v1349, %v1446
    %v1479 = vadd.f32 %v1350, %v1447
    %v1480 = vadd.f32 %v1351, %v1448
    %v1481 = vadd.f32 %v1352, %v1449
    %v1482 = vadd.f32 %v1353, %v1450
    %v1483 = vadd.f32 %v1354, %v1451
    %v1484 = vadd.f32 %v1355, %v1452
    %v1485 = vadd.f32 %v1356, %v1453
    %v1486 = vadd.f32 %v1357, %v1454
    %1487 = vset.pattern.permute.xlu0 10
    %1488 = vperm.xlu0 %1487, %v264
    %v1489 = vpop.permute.xlu0 %1488
    %1491 = vset.pattern.permute.xlu0 10
    %1492 = vperm.xlu0 %1491, %v265
    %v1493 = vpop.permute.xlu0 %1492
    %v1495 = vmul.f32 %v1489, %v308
    %v1496 = vmul.f32 %v1489, %v309
    %v1497 = vmul.f32 %v1489, %v310
    %v1498 = vmul.f32 %v1489, %v311
    %v1499 = vmul.f32 %v1489, %v312
    %v1500 = vmul.f32 %v1489, %v313
    %v1501 = vmul.f32 %v1489, %v314
    %v1502 = vmul.f32 %v1489, %v315
    %v1503 = vmul.f32 %v1489, %v316
    %v1504 = vmul.f32 %v1493, %v317
    %v1505 = vmul.f32 %v1493, %v318
    %v1506 = vmul.f32 %v1493, %v319
    %v1507 = vmul.f32 %v1493, %v320
    %v1508 = vmul.f32 %v1493, %v321
    %v1509 = vmul.f32 %v1493, %v322
    %v1510 = vmul.f32 %v1493, %v323
    %v1511 = vmul.f32 %v1493, %v324
    %v1512 = vmul.f32 %v1493, %v325
    %1531 = vrot.lane.b32.xlu0 %v1495, 118
    %v1532 = vpop.permute.xlu0 %1531
    %1533 = vrot.lane.b32.xlu0 %v1496, 118
    %v1534 = vpop.permute.xlu0 %1533
    %1535 = vrot.lane.b32.xlu0 %v1497, 118
    %v1536 = vpop.permute.xlu0 %1535
    %1537 = vrot.lane.b32.xlu0 %v1498, 118
    %v1538 = vpop.permute.xlu0 %1537
    %1539 = vrot.lane.b32.xlu0 %v1499, 118
    %v1540 = vpop.permute.xlu0 %1539
    %1541 = vrot.lane.b32.xlu0 %v1500, 118
    %v1542 = vpop.permute.xlu0 %1541
    %1543 = vrot.lane.b32.xlu0 %v1501, 118
    %v1544 = vpop.permute.xlu0 %1543
    %1545 = vrot.lane.b32.xlu0 %v1502, 118
    %v1546 = vpop.permute.xlu0 %1545
    %1547 = vrot.lane.b32.xlu0 %v1503, 118
    %v1548 = vpop.permute.xlu0 %1547
    %1549 = vrot.lane.b32.xlu0 %v1504, 118
    %v1550 = vpop.permute.xlu0 %1549
    %1551 = vrot.lane.b32.xlu0 %v1505, 118
    %v1552 = vpop.permute.xlu0 %1551
    %1553 = vrot.lane.b32.xlu0 %v1506, 118
    %v1554 = vpop.permute.xlu0 %1553
    %1555 = vrot.lane.b32.xlu0 %v1507, 118
    %v1556 = vpop.permute.xlu0 %1555
    %1557 = vrot.lane.b32.xlu0 %v1508, 118
    %v1558 = vpop.permute.xlu0 %1557
    %1559 = vrot.lane.b32.xlu0 %v1509, 118
    %v1560 = vpop.permute.xlu0 %1559
    %1561 = vrot.lane.b32.xlu0 %v1510, 118
    %v1562 = vpop.permute.xlu0 %1561
    %1563 = vrot.lane.b32.xlu0 %v1511, 118
    %v1564 = vpop.permute.xlu0 %1563
    %1565 = vrot.lane.b32.xlu0 %v1512, 118
    %v1566 = vpop.permute.xlu0 %1565
    %vm1567 = vcmask 965632
    %v1568 = vsel %vm1567, %v1532, %v1534
    %v1569 = vsel %vm1567, %v1534, %v1536
    %v1570 = vsel %vm1567, %v1536, %v1538
    %v1571 = vsel %vm1567, %v1538, %v1540
    %v1572 = vsel %vm1567, %v1540, %v1542
    %v1573 = vsel %vm1567, %v1542, %v1544
    %v1574 = vsel %vm1567, %v1544, %v1546
    %v1575 = vsel %vm1567, %v1546, %v1548
    %v1576 = vsel %vm1567, %v1550, %v1552
    %v1577 = vsel %vm1567, %v1552, %v1554
    %v1578 = vsel %vm1567, %v1554, %v1556
    %v1579 = vsel %vm1567, %v1556, %v1558
    %v1580 = vsel %vm1567, %v1558, %v1560
    %v1581 = vsel %vm1567, %v1560, %v1562
    %v1582 = vsel %vm1567, %v1562, %v1564
    %v1583 = vsel %vm1567, %v1564, %v1566
    %v1600 = vadd.f32 %v1471, %v1568
    %v1601 = vadd.f32 %v1472, %v1569
    %v1602 = vadd.f32 %v1473, %v1570
    %v1603 = vadd.f32 %v1474, %v1571
    %v1604 = vadd.f32 %v1475, %v1572
    %v1605 = vadd.f32 %v1476, %v1573
    %v1606 = vadd.f32 %v1477, %v1574
    %v1607 = vadd.f32 %v1478, %v1575
    %v1608 = vadd.f32 %v1479, %v1576
    %v1609 = vadd.f32 %v1480, %v1577
    %v1610 = vadd.f32 %v1481, %v1578
    %v1611 = vadd.f32 %v1482, %v1579
    %v1612 = vadd.f32 %v1483, %v1580
    %v1613 = vadd.f32 %v1484, %v1581
    %v1614 = vadd.f32 %v1485, %v1582
    %v1615 = vadd.f32 %v1486, %v1583
    %1616 = vset.pattern.permute.xlu0 11
    %1617 = vperm.xlu0 %1616, %v264
    %v1618 = vpop.permute.xlu0 %1617
    %1620 = vset.pattern.permute.xlu0 11
    %1621 = vperm.xlu0 %1620, %v265
    %v1622 = vpop.permute.xlu0 %1621
    %v1624 = vmul.f32 %v1618, %v308
    %v1625 = vmul.f32 %v1618, %v309
    %v1626 = vmul.f32 %v1618, %v310
    %v1627 = vmul.f32 %v1618, %v311
    %v1628 = vmul.f32 %v1618, %v312
    %v1629 = vmul.f32 %v1618, %v313
    %v1630 = vmul.f32 %v1618, %v314
    %v1631 = vmul.f32 %v1618, %v315
    %v1632 = vmul.f32 %v1618, %v316
    %v1633 = vmul.f32 %v1622, %v317
    %v1634 = vmul.f32 %v1622, %v318
    %v1635 = vmul.f32 %v1622, %v319
    %v1636 = vmul.f32 %v1622, %v320
    %v1637 = vmul.f32 %v1622, %v321
    %v1638 = vmul.f32 %v1622, %v322
    %v1639 = vmul.f32 %v1622, %v323
    %v1640 = vmul.f32 %v1622, %v324
    %v1641 = vmul.f32 %v1622, %v325
    %1660 = vrot.lane.b32.xlu0 %v1624, 117
    %v1661 = vpop.permute.xlu0 %1660
    %1662 = vrot.lane.b32.xlu0 %v1625, 117
    %v1663 = vpop.permute.xlu0 %1662
    %1664 = vrot.lane.b32.xlu0 %v1626, 117
    %v1665 = vpop.permute.xlu0 %1664
    %1666 = vrot.lane.b32.xlu0 %v1627, 117
    %v1667 = vpop.permute.xlu0 %1666
    %1668 = vrot.lane.b32.xlu0 %v1628, 117
    %v1669 = vpop.permute.xlu0 %1668
    %1670 = vrot.lane.b32.xlu0 %v1629, 117
    %v1671 = vpop.permute.xlu0 %1670
    %1672 = vrot.lane.b32.xlu0 %v1630, 117
    %v1673 = vpop.permute.xlu0 %1672
    %1674 = vrot.lane.b32.xlu0 %v1631, 117
    %v1675 = vpop.permute.xlu0 %1674
    %1676 = vrot.lane.b32.xlu0 %v1632, 117
    %v1677 = vpop.permute.xlu0 %1676
    %1678 = vrot.lane.b32.xlu0 %v1633, 117
    %v1679 = vpop.permute.xlu0 %1678
    %1680 = vrot.lane.b32.xlu0 %v1634, 117
    %v1681 = vpop.permute.xlu0 %1680
    %1682 = vrot.lane.b32.xlu0 %v1635, 117
    %v1683 = vpop.permute.xlu0 %1682
    %1684 = vrot.lane.b32.xlu0 %v1636, 117
    %v1685 = vpop.permute.xlu0 %1684
    %1686 = vrot.lane.b32.xlu0 %v1637, 117
    %v1687 = vpop.permute.xlu0 %1686
    %1688 = vrot.lane.b32.xlu0 %v1638, 117
    %v1689 = vpop.permute.xlu0 %1688
    %1690 = vrot.lane.b32.xlu0 %v1639, 117
    %v1691 = vpop.permute.xlu0 %1690
    %1692 = vrot.lane.b32.xlu0 %v1640, 117
    %v1693 = vpop.permute.xlu0 %1692
    %1694 = vrot.lane.b32.xlu0 %v1641, 117
    %v1695 = vpop.permute.xlu0 %1694
    %vm1696 = vcmask 957440
    %v1697 = vsel %vm1696, %v1661, %v1663
    %v1698 = vsel %vm1696, %v1663, %v1665
    %v1699 = vsel %vm1696, %v1665, %v1667
    %v1700 = vsel %vm1696, %v1667, %v1669
    %v1701 = vsel %vm1696, %v1669, %v1671
    %v1702 = vsel %vm1696, %v1671, %v1673
    %v1703 = vsel %vm1696, %v1673, %v1675
    %v1704 = vsel %vm1696, %v1675, %v1677
    %v1705 = vsel %vm1696, %v1679, %v1681
    %v1706 = vsel %vm1696, %v1681, %v1683
    %v1707 = vsel %vm1696, %v1683, %v1685
    %v1708 = vsel %vm1696, %v1685, %v1687
    %v1709 = vsel %vm1696, %v1687, %v1689
    %v1710 = vsel %vm1696, %v1689, %v1691
    %v1711 = vsel %vm1696, %v1691, %v1693
    %v1712 = vsel %vm1696, %v1693, %v1695
    %v1729 = vadd.f32 %v1600, %v1697
    %v1730 = vadd.f32 %v1601, %v1698
    %v1731 = vadd.f32 %v1602, %v1699
    %v1732 = vadd.f32 %v1603, %v1700
    %v1733 = vadd.f32 %v1604, %v1701
    %v1734 = vadd.f32 %v1605, %v1702
    %v1735 = vadd.f32 %v1606, %v1703
    %v1736 = vadd.f32 %v1607, %v1704
    %v1737 = vadd.f32 %v1608, %v1705
    %v1738 = vadd.f32 %v1609, %v1706
    %v1739 = vadd.f32 %v1610, %v1707
    %v1740 = vadd.f32 %v1611, %v1708
    %v1741 = vadd.f32 %v1612, %v1709
    %v1742 = vadd.f32 %v1613, %v1710
    %v1743 = vadd.f32 %v1614, %v1711
    %v1744 = vadd.f32 %v1615, %v1712
    %1745 = vset.pattern.permute.xlu0 12
    %1746 = vperm.xlu0 %1745, %v264
    %v1747 = vpop.permute.xlu0 %1746
    %1749 = vset.pattern.permute.xlu0 12
    %1750 = vperm.xlu0 %1749, %v265
    %v1751 = vpop.permute.xlu0 %1750
    %v1753 = vmul.f32 %v1747, %v308
    %v1754 = vmul.f32 %v1747, %v309
    %v1755 = vmul.f32 %v1747, %v310
    %v1756 = vmul.f32 %v1747, %v311
    %v1757 = vmul.f32 %v1747, %v312
    %v1758 = vmul.f32 %v1747, %v313
    %v1759 = vmul.f32 %v1747, %v314
    %v1760 = vmul.f32 %v1747, %v315
    %v1761 = vmul.f32 %v1747, %v316
    %v1762 = vmul.f32 %v1751, %v317
    %v1763 = vmul.f32 %v1751, %v318
    %v1764 = vmul.f32 %v1751, %v319
    %v1765 = vmul.f32 %v1751, %v320
    %v1766 = vmul.f32 %v1751, %v321
    %v1767 = vmul.f32 %v1751, %v322
    %v1768 = vmul.f32 %v1751, %v323
    %v1769 = vmul.f32 %v1751, %v324
    %v1770 = vmul.f32 %v1751, %v325
    %1789 = vrot.lane.b32.xlu0 %v1753, 116
    %v1790 = vpop.permute.xlu0 %1789
    %1791 = vrot.lane.b32.xlu0 %v1754, 116
    %v1792 = vpop.permute.xlu0 %1791
    %1793 = vrot.lane.b32.xlu0 %v1755, 116
    %v1794 = vpop.permute.xlu0 %1793
    %1795 = vrot.lane.b32.xlu0 %v1756, 116
    %v1796 = vpop.permute.xlu0 %1795
    %1797 = vrot.lane.b32.xlu0 %v1757, 116
    %v1798 = vpop.permute.xlu0 %1797
    %1799 = vrot.lane.b32.xlu0 %v1758, 116
    %v1800 = vpop.permute.xlu0 %1799
    %1801 = vrot.lane.b32.xlu0 %v1759, 116
    %v1802 = vpop.permute.xlu0 %1801
    %1803 = vrot.lane.b32.xlu0 %v1760, 116
    %v1804 = vpop.permute.xlu0 %1803
    %1805 = vrot.lane.b32.xlu0 %v1761, 116
    %v1806 = vpop.permute.xlu0 %1805
    %1807 = vrot.lane.b32.xlu0 %v1762, 116
    %v1808 = vpop.permute.xlu0 %1807
    %1809 = vrot.lane.b32.xlu0 %v1763, 116
    %v1810 = vpop.permute.xlu0 %1809
    %1811 = vrot.lane.b32.xlu0 %v1764, 116
    %v1812 = vpop.permute.xlu0 %1811
    %1813 = vrot.lane.b32.xlu0 %v1765, 116
    %v1814 = vpop.permute.xlu0 %1813
    %1815 = vrot.lane.b32.xlu0 %v1766, 116
    %v1816 = vpop.permute.xlu0 %1815
    %1817 = vrot.lane.b32.xlu0 %v1767, 116
    %v1818 = vpop.permute.xlu0 %1817
    %1819 = vrot.lane.b32.xlu0 %v1768, 116
    %v1820 = vpop.permute.xlu0 %1819
    %1821 = vrot.lane.b32.xlu0 %v1769, 116
    %v1822 = vpop.permute.xlu0 %1821
    %1823 = vrot.lane.b32.xlu0 %v1770, 116
    %v1824 = vpop.permute.xlu0 %1823
    %vm1825 = vcmask 949248
    %v1826 = vsel %vm1825, %v1790, %v1792
    %v1827 = vsel %vm1825, %v1792, %v1794
    %v1828 = vsel %vm1825, %v1794, %v1796
    %v1829 = vsel %vm1825, %v1796, %v1798
    %v1830 = vsel %vm1825, %v1798, %v1800
    %v1831 = vsel %vm1825, %v1800, %v1802
    %v1832 = vsel %vm1825, %v1802, %v1804
    %v1833 = vsel %vm1825, %v1804, %v1806
    %v1834 = vsel %vm1825, %v1808, %v1810
    %v1835 = vsel %vm1825, %v1810, %v1812
    %v1836 = vsel %vm1825, %v1812, %v1814
    %v1837 = vsel %vm1825, %v1814, %v1816
    %v1838 = vsel %vm1825, %v1816, %v1818
    %v1839 = vsel %vm1825, %v1818, %v1820
    %v1840 = vsel %vm1825, %v1820, %v1822
    %v1841 = vsel %vm1825, %v1822, %v1824
    %v1858 = vadd.f32 %v1729, %v1826
    %v1859 = vadd.f32 %v1730, %v1827
    %v1860 = vadd.f32 %v1731, %v1828
    %v1861 = vadd.f32 %v1732, %v1829
    %v1862 = vadd.f32 %v1733, %v1830
    %v1863 = vadd.f32 %v1734, %v1831
    %v1864 = vadd.f32 %v1735, %v1832
    %v1865 = vadd.f32 %v1736, %v1833
    %v1866 = vadd.f32 %v1737, %v1834
    %v1867 = vadd.f32 %v1738, %v1835
    %v1868 = vadd.f32 %v1739, %v1836
    %v1869 = vadd.f32 %v1740, %v1837
    %v1870 = vadd.f32 %v1741, %v1838
    %v1871 = vadd.f32 %v1742, %v1839
    %v1872 = vadd.f32 %v1743, %v1840
    %v1873 = vadd.f32 %v1744, %v1841
    %1874 = vset.pattern.permute.xlu0 13
    %1875 = vperm.xlu0 %1874, %v264
    %v1876 = vpop.permute.xlu0 %1875
    %1878 = vset.pattern.permute.xlu0 13
    %1879 = vperm.xlu0 %1878, %v265
    %v1880 = vpop.permute.xlu0 %1879
    %v1882 = vmul.f32 %v1876, %v308
    %v1883 = vmul.f32 %v1876, %v309
    %v1884 = vmul.f32 %v1876, %v310
    %v1885 = vmul.f32 %v1876, %v311
    %v1886 = vmul.f32 %v1876, %v312
    %v1887 = vmul.f32 %v1876, %v313
    %v1888 = vmul.f32 %v1876, %v314
    %v1889 = vmul.f32 %v1876, %v315
    %v1890 = vmul.f32 %v1876, %v316
    %v1891 = vmul.f32 %v1880, %v317
    %v1892 = vmul.f32 %v1880, %v318
    %v1893 = vmul.f32 %v1880, %v319
    %v1894 = vmul.f32 %v1880, %v320
    %v1895 = vmul.f32 %v1880, %v321
    %v1896 = vmul.f32 %v1880, %v322
    %v1897 = vmul.f32 %v1880, %v323
    %v1898 = vmul.f32 %v1880, %v324
    %v1899 = vmul.f32 %v1880, %v325
    %1918 = vrot.lane.b32.xlu0 %v1882, 115
    %v1919 = vpop.permute.xlu0 %1918
    %1920 = vrot.lane.b32.xlu0 %v1883, 115
    %v1921 = vpop.permute.xlu0 %1920
    %1922 = vrot.lane.b32.xlu0 %v1884, 115
    %v1923 = vpop.permute.xlu0 %1922
    %1924 = vrot.lane.b32.xlu0 %v1885, 115
    %v1925 = vpop.permute.xlu0 %1924
    %1926 = vrot.lane.b32.xlu0 %v1886, 115
    %v1927 = vpop.permute.xlu0 %1926
    %1928 = vrot.lane.b32.xlu0 %v1887, 115
    %v1929 = vpop.permute.xlu0 %1928
    %1930 = vrot.lane.b32.xlu0 %v1888, 115
    %v1931 = vpop.permute.xlu0 %1930
    %1932 = vrot.lane.b32.xlu0 %v1889, 115
    %v1933 = vpop.permute.xlu0 %1932
    %1934 = vrot.lane.b32.xlu0 %v1890, 115
    %v1935 = vpop.permute.xlu0 %1934
    %1936 = vrot.lane.b32.xlu0 %v1891, 115
    %v1937 = vpop.permute.xlu0 %1936
    %1938 = vrot.lane.b32.xlu0 %v1892, 115
    %v1939 = vpop.permute.xlu0 %1938
    %1940 = vrot.lane.b32.xlu0 %v1893, 115
    %v1941 = vpop.permute.xlu0 %1940
    %1942 = vrot.lane.b32.xlu0 %v1894, 115
    %v1943 = vpop.permute.xlu0 %1942
    %1944 = vrot.lane.b32.xlu0 %v1895, 115
    %v1945 = vpop.permute.xlu0 %1944
    %1946 = vrot.lane.b32.xlu0 %v1896, 115
    %v1947 = vpop.permute.xlu0 %1946
    %1948 = vrot.lane.b32.xlu0 %v1897, 115
    %v1949 = vpop.permute.xlu0 %1948
    %1950 = vrot.lane.b32.xlu0 %v1898, 115
    %v1951 = vpop.permute.xlu0 %1950
    %1952 = vrot.lane.b32.xlu0 %v1899, 115
    %v1953 = vpop.permute.xlu0 %1952
    %vm1954 = vcmask 941056
    %v1955 = vsel %vm1954, %v1919, %v1921
    %v1956 = vsel %vm1954, %v1921, %v1923
    %v1957 = vsel %vm1954, %v1923, %v1925
    %v1958 = vsel %vm1954, %v1925, %v1927
    %v1959 = vsel %vm1954, %v1927, %v1929
    %v1960 = vsel %vm1954, %v1929, %v1931
    %v1961 = vsel %vm1954, %v1931, %v1933
    %v1962 = vsel %vm1954, %v1933, %v1935
    %v1963 = vsel %vm1954, %v1937, %v1939
    %v1964 = vsel %vm1954, %v1939, %v1941
    %v1965 = vsel %vm1954, %v1941, %v1943
    %v1966 = vsel %vm1954, %v1943, %v1945
    %v1967 = vsel %vm1954, %v1945, %v1947
    %v1968 = vsel %vm1954, %v1947, %v1949
    %v1969 = vsel %vm1954, %v1949, %v1951
    %v1970 = vsel %vm1954, %v1951, %v1953
    %v1987 = vadd.f32 %v1858, %v1955
    %v1988 = vadd.f32 %v1859, %v1956
    %v1989 = vadd.f32 %v1860, %v1957
    %v1990 = vadd.f32 %v1861, %v1958
    %v1991 = vadd.f32 %v1862, %v1959
    %v1992 = vadd.f32 %v1863, %v1960
    %v1993 = vadd.f32 %v1864, %v1961
    %v1994 = vadd.f32 %v1865, %v1962
    %v1995 = vadd.f32 %v1866, %v1963
    %v1996 = vadd.f32 %v1867, %v1964
    %v1997 = vadd.f32 %v1868, %v1965
    %v1998 = vadd.f32 %v1869, %v1966
    %v1999 = vadd.f32 %v1870, %v1967
    %v2000 = vadd.f32 %v1871, %v1968
    %v2001 = vadd.f32 %v1872, %v1969
    %v2002 = vadd.f32 %v1873, %v1970
    %2003 = vset.pattern.permute.xlu0 14
    %2004 = vperm.xlu0 %2003, %v264
    %v2005 = vpop.permute.xlu0 %2004
    %2007 = vset.pattern.permute.xlu0 14
    %2008 = vperm.xlu0 %2007, %v265
    %v2009 = vpop.permute.xlu0 %2008
    %v2011 = vmul.f32 %v2005, %v308
    %v2012 = vmul.f32 %v2005, %v309
    %v2013 = vmul.f32 %v2005, %v310
    %v2014 = vmul.f32 %v2005, %v311
    %v2015 = vmul.f32 %v2005, %v312
    %v2016 = vmul.f32 %v2005, %v313
    %v2017 = vmul.f32 %v2005, %v314
    %v2018 = vmul.f32 %v2005, %v315
    %v2019 = vmul.f32 %v2005, %v316
    %v2020 = vmul.f32 %v2009, %v317
    %v2021 = vmul.f32 %v2009, %v318
    %v2022 = vmul.f32 %v2009, %v319
    %v2023 = vmul.f32 %v2009, %v320
    %v2024 = vmul.f32 %v2009, %v321
    %v2025 = vmul.f32 %v2009, %v322
    %v2026 = vmul.f32 %v2009, %v323
    %v2027 = vmul.f32 %v2009, %v324
    %v2028 = vmul.f32 %v2009, %v325
    %2047 = vrot.lane.b32.xlu0 %v2011, 114
    %v2048 = vpop.permute.xlu0 %2047
    %2049 = vrot.lane.b32.xlu0 %v2012, 114
    %v2050 = vpop.permute.xlu0 %2049
    %2051 = vrot.lane.b32.xlu0 %v2013, 114
    %v2052 = vpop.permute.xlu0 %2051
    %2053 = vrot.lane.b32.xlu0 %v2014, 114
    %v2054 = vpop.permute.xlu0 %2053
    %2055 = vrot.lane.b32.xlu0 %v2015, 114
    %v2056 = vpop.permute.xlu0 %2055
    %2057 = vrot.lane.b32.xlu0 %v2016, 114
    %v2058 = vpop.permute.xlu0 %2057
    %2059 = vrot.lane.b32.xlu0 %v2017, 114
    %v2060 = vpop.permute.xlu0 %2059
    %2061 = vrot.lane.b32.xlu0 %v2018, 114
    %v2062 = vpop.permute.xlu0 %2061
    %2063 = vrot.lane.b32.xlu0 %v2019, 114
    %v2064 = vpop.permute.xlu0 %2063
    %2065 = vrot.lane.b32.xlu0 %v2020, 114
    %v2066 = vpop.permute.xlu0 %2065
    %2067 = vrot.lane.b32.xlu0 %v2021, 114
    %v2068 = vpop.permute.xlu0 %2067
    %2069 = vrot.lane.b32.xlu0 %v2022, 114
    %v2070 = vpop.permute.xlu0 %2069
    %2071 = vrot.lane.b32.xlu0 %v2023, 114
    %v2072 = vpop.permute.xlu0 %2071
    %2073 = vrot.lane.b32.xlu0 %v2024, 114
    %v2074 = vpop.permute.xlu0 %2073
    %2075 = vrot.lane.b32.xlu0 %v2025, 114
    %v2076 = vpop.permute.xlu0 %2075
    %2077 = vrot.lane.b32.xlu0 %v2026, 114
    %v2078 = vpop.permute.xlu0 %2077
    %2079 = vrot.lane.b32.xlu0 %v2027, 114
    %v2080 = vpop.permute.xlu0 %2079
    %2081 = vrot.lane.b32.xlu0 %v2028, 114
    %v2082 = vpop.permute.xlu0 %2081
    %vm2083 = vcmask 932864
    %v2084 = vsel %vm2083, %v2048, %v2050
    %v2085 = vsel %vm2083, %v2050, %v2052
    %v2086 = vsel %vm2083, %v2052, %v2054
    %v2087 = vsel %vm2083, %v2054, %v2056
    %v2088 = vsel %vm2083, %v2056, %v2058
    %v2089 = vsel %vm2083, %v2058, %v2060
    %v2090 = vsel %vm2083, %v2060, %v2062
    %v2091 = vsel %vm2083, %v2062, %v2064
    %v2092 = vsel %vm2083, %v2066, %v2068
    %v2093 = vsel %vm2083, %v2068, %v2070
    %v2094 = vsel %vm2083, %v2070, %v2072
    %v2095 = vsel %vm2083, %v2072, %v2074
    %v2096 = vsel %vm2083, %v2074, %v2076
    %v2097 = vsel %vm2083, %v2076, %v2078
    %v2098 = vsel %vm2083, %v2078, %v2080
    %v2099 = vsel %vm2083, %v2080, %v2082
    %v2116 = vadd.f32 %v1987, %v2084
    %v2117 = vadd.f32 %v1988, %v2085
    %v2118 = vadd.f32 %v1989, %v2086
    %v2119 = vadd.f32 %v1990, %v2087
    %v2120 = vadd.f32 %v1991, %v2088
    %v2121 = vadd.f32 %v1992, %v2089
    %v2122 = vadd.f32 %v1993, %v2090
    %v2123 = vadd.f32 %v1994, %v2091
    %v2124 = vadd.f32 %v1995, %v2092
    %v2125 = vadd.f32 %v1996, %v2093
    %v2126 = vadd.f32 %v1997, %v2094
    %v2127 = vadd.f32 %v1998, %v2095
    %v2128 = vadd.f32 %v1999, %v2096
    %v2129 = vadd.f32 %v2000, %v2097
    %v2130 = vadd.f32 %v2001, %v2098
    %v2131 = vadd.f32 %v2002, %v2099
    %2132 = vset.pattern.permute.xlu0 15
    %2133 = vperm.xlu0 %2132, %v264
    %v2134 = vpop.permute.xlu0 %2133
    %2136 = vset.pattern.permute.xlu0 15
    %2137 = vperm.xlu0 %2136, %v265
    %v2138 = vpop.permute.xlu0 %2137
    %v2140 = vmul.f32 %v2134, %v308
    %v2141 = vmul.f32 %v2134, %v309
    %v2142 = vmul.f32 %v2134, %v310
    %v2143 = vmul.f32 %v2134, %v311
    %v2144 = vmul.f32 %v2134, %v312
    %v2145 = vmul.f32 %v2134, %v313
    %v2146 = vmul.f32 %v2134, %v314
    %v2147 = vmul.f32 %v2134, %v315
    %v2148 = vmul.f32 %v2134, %v316
    %v2149 = vmul.f32 %v2138, %v317
    %v2150 = vmul.f32 %v2138, %v318
    %v2151 = vmul.f32 %v2138, %v319
    %v2152 = vmul.f32 %v2138, %v320
    %v2153 = vmul.f32 %v2138, %v321
    %v2154 = vmul.f32 %v2138, %v322
    %v2155 = vmul.f32 %v2138, %v323
    %v2156 = vmul.f32 %v2138, %v324
    %v2157 = vmul.f32 %v2138, %v325
    %2176 = vrot.lane.b32.xlu0 %v2140, 113
    %v2177 = vpop.permute.xlu0 %2176
    %2178 = vrot.lane.b32.xlu0 %v2141, 113
    %v2179 = vpop.permute.xlu0 %2178
    %2180 = vrot.lane.b32.xlu0 %v2142, 113
    %v2181 = vpop.permute.xlu0 %2180
    %2182 = vrot.lane.b32.xlu0 %v2143, 113
    %v2183 = vpop.permute.xlu0 %2182
    %2184 = vrot.lane.b32.xlu0 %v2144, 113
    %v2185 = vpop.permute.xlu0 %2184
    %2186 = vrot.lane.b32.xlu0 %v2145, 113
    %v2187 = vpop.permute.xlu0 %2186
    %2188 = vrot.lane.b32.xlu0 %v2146, 113
    %v2189 = vpop.permute.xlu0 %2188
    %2190 = vrot.lane.b32.xlu0 %v2147, 113
    %v2191 = vpop.permute.xlu0 %2190
    %2192 = vrot.lane.b32.xlu0 %v2148, 113
    %v2193 = vpop.permute.xlu0 %2192
    %2194 = vrot.lane.b32.xlu0 %v2149, 113
    %v2195 = vpop.permute.xlu0 %2194
    %2196 = vrot.lane.b32.xlu0 %v2150, 113
    %v2197 = vpop.permute.xlu0 %2196
    %2198 = vrot.lane.b32.xlu0 %v2151, 113
    %v2199 = vpop.permute.xlu0 %2198
    %2200 = vrot.lane.b32.xlu0 %v2152, 113
    %v2201 = vpop.permute.xlu0 %2200
    %2202 = vrot.lane.b32.xlu0 %v2153, 113
    %v2203 = vpop.permute.xlu0 %2202
    %2204 = vrot.lane.b32.xlu0 %v2154, 113
    %v2205 = vpop.permute.xlu0 %2204
    %2206 = vrot.lane.b32.xlu0 %v2155, 113
    %v2207 = vpop.permute.xlu0 %2206
    %2208 = vrot.lane.b32.xlu0 %v2156, 113
    %v2209 = vpop.permute.xlu0 %2208
    %2210 = vrot.lane.b32.xlu0 %v2157, 113
    %v2211 = vpop.permute.xlu0 %2210
    %vm2212 = vcmask 924672
    %v2213 = vsel %vm2212, %v2177, %v2179
    %v2214 = vsel %vm2212, %v2179, %v2181
    %v2215 = vsel %vm2212, %v2181, %v2183
    %v2216 = vsel %vm2212, %v2183, %v2185
    %v2217 = vsel %vm2212, %v2185, %v2187
    %v2218 = vsel %vm2212, %v2187, %v2189
    %v2219 = vsel %vm2212, %v2189, %v2191
    %v2220 = vsel %vm2212, %v2191, %v2193
    %v2221 = vsel %vm2212, %v2195, %v2197
    %v2222 = vsel %vm2212, %v2197, %v2199
    %v2223 = vsel %vm2212, %v2199, %v2201
    %v2224 = vsel %vm2212, %v2201, %v2203
    %v2225 = vsel %vm2212, %v2203, %v2205
    %v2226 = vsel %vm2212, %v2205, %v2207
    %v2227 = vsel %vm2212, %v2207, %v2209
    %v2228 = vsel %vm2212, %v2209, %v2211
    %v2245 = vadd.f32 %v2116, %v2213
    %v2246 = vadd.f32 %v2117, %v2214
    %v2247 = vadd.f32 %v2118, %v2215
    %v2248 = vadd.f32 %v2119, %v2216
    %v2249 = vadd.f32 %v2120, %v2217
    %v2250 = vadd.f32 %v2121, %v2218
    %v2251 = vadd.f32 %v2122, %v2219
    %v2252 = vadd.f32 %v2123, %v2220
    %v2253 = vadd.f32 %v2124, %v2221
    %v2254 = vadd.f32 %v2125, %v2222
    %v2255 = vadd.f32 %v2126, %v2223
    %v2256 = vadd.f32 %v2127, %v2224
    %v2257 = vadd.f32 %v2128, %v2225
    %v2258 = vadd.f32 %v2129, %v2226
    %v2259 = vadd.f32 %v2130, %v2227
    %v2260 = vadd.f32 %v2131, %v2228
    %2261 = vset.pattern.permute.xlu0 16
    %2262 = vperm.xlu0 %2261, %v264
    %v2263 = vpop.permute.xlu0 %2262
    %2265 = vset.pattern.permute.xlu0 16
    %2266 = vperm.xlu0 %2265, %v265
    %v2267 = vpop.permute.xlu0 %2266
    %v2269 = vmul.f32 %v2263, %v308
    %v2270 = vmul.f32 %v2263, %v309
    %v2271 = vmul.f32 %v2263, %v310
    %v2272 = vmul.f32 %v2263, %v311
    %v2273 = vmul.f32 %v2263, %v312
    %v2274 = vmul.f32 %v2263, %v313
    %v2275 = vmul.f32 %v2263, %v314
    %v2276 = vmul.f32 %v2263, %v315
    %v2277 = vmul.f32 %v2263, %v316
    %v2278 = vmul.f32 %v2267, %v317
    %v2279 = vmul.f32 %v2267, %v318
    %v2280 = vmul.f32 %v2267, %v319
    %v2281 = vmul.f32 %v2267, %v320
    %v2282 = vmul.f32 %v2267, %v321
    %v2283 = vmul.f32 %v2267, %v322
    %v2284 = vmul.f32 %v2267, %v323
    %v2285 = vmul.f32 %v2267, %v324
    %v2286 = vmul.f32 %v2267, %v325
    %2305 = vrot.lane.b32.xlu0 %v2269, 112
    %v2306 = vpop.permute.xlu0 %2305
    %2307 = vrot.lane.b32.xlu0 %v2270, 112
    %v2308 = vpop.permute.xlu0 %2307
    %2309 = vrot.lane.b32.xlu0 %v2271, 112
    %v2310 = vpop.permute.xlu0 %2309
    %2311 = vrot.lane.b32.xlu0 %v2272, 112
    %v2312 = vpop.permute.xlu0 %2311
    %2313 = vrot.lane.b32.xlu0 %v2273, 112
    %v2314 = vpop.permute.xlu0 %2313
    %2315 = vrot.lane.b32.xlu0 %v2274, 112
    %v2316 = vpop.permute.xlu0 %2315
    %2317 = vrot.lane.b32.xlu0 %v2275, 112
    %v2318 = vpop.permute.xlu0 %2317
    %2319 = vrot.lane.b32.xlu0 %v2276, 112
    %v2320 = vpop.permute.xlu0 %2319
    %2321 = vrot.lane.b32.xlu0 %v2277, 112
    %v2322 = vpop.permute.xlu0 %2321
    %2323 = vrot.lane.b32.xlu0 %v2278, 112
    %v2324 = vpop.permute.xlu0 %2323
    %2325 = vrot.lane.b32.xlu0 %v2279, 112
    %v2326 = vpop.permute.xlu0 %2325
    %2327 = vrot.lane.b32.xlu0 %v2280, 112
    %v2328 = vpop.permute.xlu0 %2327
    %2329 = vrot.lane.b32.xlu0 %v2281, 112
    %v2330 = vpop.permute.xlu0 %2329
    %2331 = vrot.lane.b32.xlu0 %v2282, 112
    %v2332 = vpop.permute.xlu0 %2331
    %2333 = vrot.lane.b32.xlu0 %v2283, 112
    %v2334 = vpop.permute.xlu0 %2333
    %2335 = vrot.lane.b32.xlu0 %v2284, 112
    %v2336 = vpop.permute.xlu0 %2335
    %2337 = vrot.lane.b32.xlu0 %v2285, 112
    %v2338 = vpop.permute.xlu0 %2337
    %2339 = vrot.lane.b32.xlu0 %v2286, 112
    %v2340 = vpop.permute.xlu0 %2339
    %vm2341 = vcmask 916480
    %v2342 = vsel %vm2341, %v2306, %v2308
    %v2343 = vsel %vm2341, %v2308, %v2310
    %v2344 = vsel %vm2341, %v2310, %v2312
    %v2345 = vsel %vm2341, %v2312, %v2314
    %v2346 = vsel %vm2341, %v2314, %v2316
    %v2347 = vsel %vm2341, %v2316, %v2318
    %v2348 = vsel %vm2341, %v2318, %v2320
    %v2349 = vsel %vm2341, %v2320, %v2322
    %v2350 = vsel %vm2341, %v2324, %v2326
    %v2351 = vsel %vm2341, %v2326, %v2328
    %v2352 = vsel %vm2341, %v2328, %v2330
    %v2353 = vsel %vm2341, %v2330, %v2332
    %v2354 = vsel %vm2341, %v2332, %v2334
    %v2355 = vsel %vm2341, %v2334, %v2336
    %v2356 = vsel %vm2341, %v2336, %v2338
    %v2357 = vsel %vm2341, %v2338, %v2340
    %v2374 = vadd.f32 %v2245, %v2342
    %v2375 = vadd.f32 %v2246, %v2343
    %v2376 = vadd.f32 %v2247, %v2344
    %v2377 = vadd.f32 %v2248, %v2345
    %v2378 = vadd.f32 %v2249, %v2346
    %v2379 = vadd.f32 %v2250, %v2347
    %v2380 = vadd.f32 %v2251, %v2348
    %v2381 = vadd.f32 %v2252, %v2349
    %v2382 = vadd.f32 %v2253, %v2350
    %v2383 = vadd.f32 %v2254, %v2351
    %v2384 = vadd.f32 %v2255, %v2352
    %v2385 = vadd.f32 %v2256, %v2353
    %v2386 = vadd.f32 %v2257, %v2354
    %v2387 = vadd.f32 %v2258, %v2355
    %v2388 = vadd.f32 %v2259, %v2356
    %v2389 = vadd.f32 %v2260, %v2357
    %2390 = vset.pattern.permute.xlu0 17
    %2391 = vperm.xlu0 %2390, %v264
    %v2392 = vpop.permute.xlu0 %2391
    %2394 = vset.pattern.permute.xlu0 17
    %2395 = vperm.xlu0 %2394, %v265
    %v2396 = vpop.permute.xlu0 %2395
    %v2398 = vmul.f32 %v2392, %v308
    %v2399 = vmul.f32 %v2392, %v309
    %v2400 = vmul.f32 %v2392, %v310
    %v2401 = vmul.f32 %v2392, %v311
    %v2402 = vmul.f32 %v2392, %v312
    %v2403 = vmul.f32 %v2392, %v313
    %v2404 = vmul.f32 %v2392, %v314
    %v2405 = vmul.f32 %v2392, %v315
    %v2406 = vmul.f32 %v2392, %v316
    %v2407 = vmul.f32 %v2396, %v317
    %v2408 = vmul.f32 %v2396, %v318
    %v2409 = vmul.f32 %v2396, %v319
    %v2410 = vmul.f32 %v2396, %v320
    %v2411 = vmul.f32 %v2396, %v321
    %v2412 = vmul.f32 %v2396, %v322
    %v2413 = vmul.f32 %v2396, %v323
    %v2414 = vmul.f32 %v2396, %v324
    %v2415 = vmul.f32 %v2396, %v325
    %2434 = vrot.lane.b32.xlu0 %v2398, 111
    %v2435 = vpop.permute.xlu0 %2434
    %2436 = vrot.lane.b32.xlu0 %v2399, 111
    %v2437 = vpop.permute.xlu0 %2436
    %2438 = vrot.lane.b32.xlu0 %v2400, 111
    %v2439 = vpop.permute.xlu0 %2438
    %2440 = vrot.lane.b32.xlu0 %v2401, 111
    %v2441 = vpop.permute.xlu0 %2440
    %2442 = vrot.lane.b32.xlu0 %v2402, 111
    %v2443 = vpop.permute.xlu0 %2442
    %2444 = vrot.lane.b32.xlu0 %v2403, 111
    %v2445 = vpop.permute.xlu0 %2444
    %2446 = vrot.lane.b32.xlu0 %v2404, 111
    %v2447 = vpop.permute.xlu0 %2446
    %2448 = vrot.lane.b32.xlu0 %v2405, 111
    %v2449 = vpop.permute.xlu0 %2448
    %2450 = vrot.lane.b32.xlu0 %v2406, 111
    %v2451 = vpop.permute.xlu0 %2450
    %2452 = vrot.lane.b32.xlu0 %v2407, 111
    %v2453 = vpop.permute.xlu0 %2452
    %2454 = vrot.lane.b32.xlu0 %v2408, 111
    %v2455 = vpop.permute.xlu0 %2454
    %2456 = vrot.lane.b32.xlu0 %v2409, 111
    %v2457 = vpop.permute.xlu0 %2456
    %2458 = vrot.lane.b32.xlu0 %v2410, 111
    %v2459 = vpop.permute.xlu0 %2458
    %2460 = vrot.lane.b32.xlu0 %v2411, 111
    %v2461 = vpop.permute.xlu0 %2460
    %2462 = vrot.lane.b32.xlu0 %v2412, 111
    %v2463 = vpop.permute.xlu0 %2462
    %2464 = vrot.lane.b32.xlu0 %v2413, 111
    %v2465 = vpop.permute.xlu0 %2464
    %2466 = vrot.lane.b32.xlu0 %v2414, 111
    %v2467 = vpop.permute.xlu0 %2466
    %2468 = vrot.lane.b32.xlu0 %v2415, 111
    %v2469 = vpop.permute.xlu0 %2468
    %vm2470 = vcmask 908288
    %v2471 = vsel %vm2470, %v2435, %v2437
    %v2472 = vsel %vm2470, %v2437, %v2439
    %v2473 = vsel %vm2470, %v2439, %v2441
    %v2474 = vsel %vm2470, %v2441, %v2443
    %v2475 = vsel %vm2470, %v2443, %v2445
    %v2476 = vsel %vm2470, %v2445, %v2447
    %v2477 = vsel %vm2470, %v2447, %v2449
    %v2478 = vsel %vm2470, %v2449, %v2451
    %v2479 = vsel %vm2470, %v2453, %v2455
    %v2480 = vsel %vm2470, %v2455, %v2457
    %v2481 = vsel %vm2470, %v2457, %v2459
    %v2482 = vsel %vm2470, %v2459, %v2461
    %v2483 = vsel %vm2470, %v2461, %v2463
    %v2484 = vsel %vm2470, %v2463, %v2465
    %v2485 = vsel %vm2470, %v2465, %v2467
    %v2486 = vsel %vm2470, %v2467, %v2469
    %v2503 = vadd.f32 %v2374, %v2471
    %v2504 = vadd.f32 %v2375, %v2472
    %v2505 = vadd.f32 %v2376, %v2473
    %v2506 = vadd.f32 %v2377, %v2474
    %v2507 = vadd.f32 %v2378, %v2475
    %v2508 = vadd.f32 %v2379, %v2476
    %v2509 = vadd.f32 %v2380, %v2477
    %v2510 = vadd.f32 %v2381, %v2478
    %v2511 = vadd.f32 %v2382, %v2479
    %v2512 = vadd.f32 %v2383, %v2480
    %v2513 = vadd.f32 %v2384, %v2481
    %v2514 = vadd.f32 %v2385, %v2482
    %v2515 = vadd.f32 %v2386, %v2483
    %v2516 = vadd.f32 %v2387, %v2484
    %v2517 = vadd.f32 %v2388, %v2485
    %v2518 = vadd.f32 %v2389, %v2486
    %2519 = vset.pattern.permute.xlu0 18
    %2520 = vperm.xlu0 %2519, %v264
    %v2521 = vpop.permute.xlu0 %2520
    %2523 = vset.pattern.permute.xlu0 18
    %2524 = vperm.xlu0 %2523, %v265
    %v2525 = vpop.permute.xlu0 %2524
    %v2527 = vmul.f32 %v2521, %v308
    %v2528 = vmul.f32 %v2521, %v309
    %v2529 = vmul.f32 %v2521, %v310
    %v2530 = vmul.f32 %v2521, %v311
    %v2531 = vmul.f32 %v2521, %v312
    %v2532 = vmul.f32 %v2521, %v313
    %v2533 = vmul.f32 %v2521, %v314
    %v2534 = vmul.f32 %v2521, %v315
    %v2535 = vmul.f32 %v2521, %v316
    %v2536 = vmul.f32 %v2525, %v317
    %v2537 = vmul.f32 %v2525, %v318
    %v2538 = vmul.f32 %v2525, %v319
    %v2539 = vmul.f32 %v2525, %v320
    %v2540 = vmul.f32 %v2525, %v321
    %v2541 = vmul.f32 %v2525, %v322
    %v2542 = vmul.f32 %v2525, %v323
    %v2543 = vmul.f32 %v2525, %v324
    %v2544 = vmul.f32 %v2525, %v325
    %2563 = vrot.lane.b32.xlu0 %v2527, 110
    %v2564 = vpop.permute.xlu0 %2563
    %2565 = vrot.lane.b32.xlu0 %v2528, 110
    %v2566 = vpop.permute.xlu0 %2565
    %2567 = vrot.lane.b32.xlu0 %v2529, 110
    %v2568 = vpop.permute.xlu0 %2567
    %2569 = vrot.lane.b32.xlu0 %v2530, 110
    %v2570 = vpop.permute.xlu0 %2569
    %2571 = vrot.lane.b32.xlu0 %v2531, 110
    %v2572 = vpop.permute.xlu0 %2571
    %2573 = vrot.lane.b32.xlu0 %v2532, 110
    %v2574 = vpop.permute.xlu0 %2573
    %2575 = vrot.lane.b32.xlu0 %v2533, 110
    %v2576 = vpop.permute.xlu0 %2575
    %2577 = vrot.lane.b32.xlu0 %v2534, 110
    %v2578 = vpop.permute.xlu0 %2577
    %2579 = vrot.lane.b32.xlu0 %v2535, 110
    %v2580 = vpop.permute.xlu0 %2579
    %2581 = vrot.lane.b32.xlu0 %v2536, 110
    %v2582 = vpop.permute.xlu0 %2581
    %2583 = vrot.lane.b32.xlu0 %v2537, 110
    %v2584 = vpop.permute.xlu0 %2583
    %2585 = vrot.lane.b32.xlu0 %v2538, 110
    %v2586 = vpop.permute.xlu0 %2585
    %2587 = vrot.lane.b32.xlu0 %v2539, 110
    %v2588 = vpop.permute.xlu0 %2587
    %2589 = vrot.lane.b32.xlu0 %v2540, 110
    %v2590 = vpop.permute.xlu0 %2589
    %2591 = vrot.lane.b32.xlu0 %v2541, 110
    %v2592 = vpop.permute.xlu0 %2591
    %2593 = vrot.lane.b32.xlu0 %v2542, 110
    %v2594 = vpop.permute.xlu0 %2593
    %2595 = vrot.lane.b32.xlu0 %v2543, 110
    %v2596 = vpop.permute.xlu0 %2595
    %2597 = vrot.lane.b32.xlu0 %v2544, 110
    %v2598 = vpop.permute.xlu0 %2597
    %vm2599 = vcmask 900096
    %v2600 = vsel %vm2599, %v2564, %v2566
    %v2601 = vsel %vm2599, %v2566, %v2568
    %v2602 = vsel %vm2599, %v2568, %v2570
    %v2603 = vsel %vm2599, %v2570, %v2572
    %v2604 = vsel %vm2599, %v2572, %v2574
    %v2605 = vsel %vm2599, %v2574, %v2576
    %v2606 = vsel %vm2599, %v2576, %v2578
    %v2607 = vsel %vm2599, %v2578, %v2580
    %v2608 = vsel %vm2599, %v2582, %v2584
    %v2609 = vsel %vm2599, %v2584, %v2586
    %v2610 = vsel %vm2599, %v2586, %v2588
    %v2611 = vsel %vm2599, %v2588, %v2590
    %v2612 = vsel %vm2599, %v2590, %v2592
    %v2613 = vsel %vm2599, %v2592, %v2594
    %v2614 = vsel %vm2599, %v2594, %v2596
    %v2615 = vsel %vm2599, %v2596, %v2598
    %v2632 = vadd.f32 %v2503, %v2600
    %v2633 = vadd.f32 %v2504, %v2601
    %v2634 = vadd.f32 %v2505, %v2602
    %v2635 = vadd.f32 %v2506, %v2603
    %v2636 = vadd.f32 %v2507, %v2604
    %v2637 = vadd.f32 %v2508, %v2605
    %v2638 = vadd.f32 %v2509, %v2606
    %v2639 = vadd.f32 %v2510, %v2607
    %v2640 = vadd.f32 %v2511, %v2608
    %v2641 = vadd.f32 %v2512, %v2609
    %v2642 = vadd.f32 %v2513, %v2610
    %v2643 = vadd.f32 %v2514, %v2611
    %v2644 = vadd.f32 %v2515, %v2612
    %v2645 = vadd.f32 %v2516, %v2613
    %v2646 = vadd.f32 %v2517, %v2614
    %v2647 = vadd.f32 %v2518, %v2615
    %2648 = vset.pattern.permute.xlu0 19
    %2649 = vperm.xlu0 %2648, %v264
    %v2650 = vpop.permute.xlu0 %2649
    %2652 = vset.pattern.permute.xlu0 19
    %2653 = vperm.xlu0 %2652, %v265
    %v2654 = vpop.permute.xlu0 %2653
    %v2656 = vmul.f32 %v2650, %v308
    %v2657 = vmul.f32 %v2650, %v309
    %v2658 = vmul.f32 %v2650, %v310
    %v2659 = vmul.f32 %v2650, %v311
    %v2660 = vmul.f32 %v2650, %v312
    %v2661 = vmul.f32 %v2650, %v313
    %v2662 = vmul.f32 %v2650, %v314
    %v2663 = vmul.f32 %v2650, %v315
    %v2664 = vmul.f32 %v2650, %v316
    %v2665 = vmul.f32 %v2654, %v317
    %v2666 = vmul.f32 %v2654, %v318
    %v2667 = vmul.f32 %v2654, %v319
    %v2668 = vmul.f32 %v2654, %v320
    %v2669 = vmul.f32 %v2654, %v321
    %v2670 = vmul.f32 %v2654, %v322
    %v2671 = vmul.f32 %v2654, %v323
    %v2672 = vmul.f32 %v2654, %v324
    %v2673 = vmul.f32 %v2654, %v325
    %2692 = vrot.lane.b32.xlu0 %v2656, 109
    %v2693 = vpop.permute.xlu0 %2692
    %2694 = vrot.lane.b32.xlu0 %v2657, 109
    %v2695 = vpop.permute.xlu0 %2694
    %2696 = vrot.lane.b32.xlu0 %v2658, 109
    %v2697 = vpop.permute.xlu0 %2696
    %2698 = vrot.lane.b32.xlu0 %v2659, 109
    %v2699 = vpop.permute.xlu0 %2698
    %2700 = vrot.lane.b32.xlu0 %v2660, 109
    %v2701 = vpop.permute.xlu0 %2700
    %2702 = vrot.lane.b32.xlu0 %v2661, 109
    %v2703 = vpop.permute.xlu0 %2702
    %2704 = vrot.lane.b32.xlu0 %v2662, 109
    %v2705 = vpop.permute.xlu0 %2704
    %2706 = vrot.lane.b32.xlu0 %v2663, 109
    %v2707 = vpop.permute.xlu0 %2706
    %2708 = vrot.lane.b32.xlu0 %v2664, 109
    %v2709 = vpop.permute.xlu0 %2708
    %2710 = vrot.lane.b32.xlu0 %v2665, 109
    %v2711 = vpop.permute.xlu0 %2710
    %2712 = vrot.lane.b32.xlu0 %v2666, 109
    %v2713 = vpop.permute.xlu0 %2712
    %2714 = vrot.lane.b32.xlu0 %v2667, 109
    %v2715 = vpop.permute.xlu0 %2714
    %2716 = vrot.lane.b32.xlu0 %v2668, 109
    %v2717 = vpop.permute.xlu0 %2716
    %2718 = vrot.lane.b32.xlu0 %v2669, 109
    %v2719 = vpop.permute.xlu0 %2718
    %2720 = vrot.lane.b32.xlu0 %v2670, 109
    %v2721 = vpop.permute.xlu0 %2720
    %2722 = vrot.lane.b32.xlu0 %v2671, 109
    %v2723 = vpop.permute.xlu0 %2722
    %2724 = vrot.lane.b32.xlu0 %v2672, 109
    %v2725 = vpop.permute.xlu0 %2724
    %2726 = vrot.lane.b32.xlu0 %v2673, 109
    %v2727 = vpop.permute.xlu0 %2726
    %vm2728 = vcmask 891904
    %v2729 = vsel %vm2728, %v2693, %v2695
    %v2730 = vsel %vm2728, %v2695, %v2697
    %v2731 = vsel %vm2728, %v2697, %v2699
    %v2732 = vsel %vm2728, %v2699, %v2701
    %v2733 = vsel %vm2728, %v2701, %v2703
    %v2734 = vsel %vm2728, %v2703, %v2705
    %v2735 = vsel %vm2728, %v2705, %v2707
    %v2736 = vsel %vm2728, %v2707, %v2709
    %v2737 = vsel %vm2728, %v2711, %v2713
    %v2738 = vsel %vm2728, %v2713, %v2715
    %v2739 = vsel %vm2728, %v2715, %v2717
    %v2740 = vsel %vm2728, %v2717, %v2719
    %v2741 = vsel %vm2728, %v2719, %v2721
    %v2742 = vsel %vm2728, %v2721, %v2723
    %v2743 = vsel %vm2728, %v2723, %v2725
    %v2744 = vsel %vm2728, %v2725, %v2727
    %v2761 = vadd.f32 %v2632, %v2729
    %v2762 = vadd.f32 %v2633, %v2730
    %v2763 = vadd.f32 %v2634, %v2731
    %v2764 = vadd.f32 %v2635, %v2732
    %v2765 = vadd.f32 %v2636, %v2733
    %v2766 = vadd.f32 %v2637, %v2734
    %v2767 = vadd.f32 %v2638, %v2735
    %v2768 = vadd.f32 %v2639, %v2736
    %v2769 = vadd.f32 %v2640, %v2737
    %v2770 = vadd.f32 %v2641, %v2738
    %v2771 = vadd.f32 %v2642, %v2739
    %v2772 = vadd.f32 %v2643, %v2740
    %v2773 = vadd.f32 %v2644, %v2741
    %v2774 = vadd.f32 %v2645, %v2742
    %v2775 = vadd.f32 %v2646, %v2743
    %v2776 = vadd.f32 %v2647, %v2744
    %2777 = vset.pattern.permute.xlu0 20
    %2778 = vperm.xlu0 %2777, %v264
    %v2779 = vpop.permute.xlu0 %2778
    %2781 = vset.pattern.permute.xlu0 20
    %2782 = vperm.xlu0 %2781, %v265
    %v2783 = vpop.permute.xlu0 %2782
    %v2785 = vmul.f32 %v2779, %v308
    %v2786 = vmul.f32 %v2779, %v309
    %v2787 = vmul.f32 %v2779, %v310
    %v2788 = vmul.f32 %v2779, %v311
    %v2789 = vmul.f32 %v2779, %v312
    %v2790 = vmul.f32 %v2779, %v313
    %v2791 = vmul.f32 %v2779, %v314
    %v2792 = vmul.f32 %v2779, %v315
    %v2793 = vmul.f32 %v2779, %v316
    %v2794 = vmul.f32 %v2783, %v317
    %v2795 = vmul.f32 %v2783, %v318
    %v2796 = vmul.f32 %v2783, %v319
    %v2797 = vmul.f32 %v2783, %v320
    %v2798 = vmul.f32 %v2783, %v321
    %v2799 = vmul.f32 %v2783, %v322
    %v2800 = vmul.f32 %v2783, %v323
    %v2801 = vmul.f32 %v2783, %v324
    %v2802 = vmul.f32 %v2783, %v325
    %2821 = vrot.lane.b32.xlu0 %v2785, 108
    %v2822 = vpop.permute.xlu0 %2821
    %2823 = vrot.lane.b32.xlu0 %v2786, 108
    %v2824 = vpop.permute.xlu0 %2823
    %2825 = vrot.lane.b32.xlu0 %v2787, 108
    %v2826 = vpop.permute.xlu0 %2825
    %2827 = vrot.lane.b32.xlu0 %v2788, 108
    %v2828 = vpop.permute.xlu0 %2827
    %2829 = vrot.lane.b32.xlu0 %v2789, 108
    %v2830 = vpop.permute.xlu0 %2829
    %2831 = vrot.lane.b32.xlu0 %v2790, 108
    %v2832 = vpop.permute.xlu0 %2831
    %2833 = vrot.lane.b32.xlu0 %v2791, 108
    %v2834 = vpop.permute.xlu0 %2833
    %2835 = vrot.lane.b32.xlu0 %v2792, 108
    %v2836 = vpop.permute.xlu0 %2835
    %2837 = vrot.lane.b32.xlu0 %v2793, 108
    %v2838 = vpop.permute.xlu0 %2837
    %2839 = vrot.lane.b32.xlu0 %v2794, 108
    %v2840 = vpop.permute.xlu0 %2839
    %2841 = vrot.lane.b32.xlu0 %v2795, 108
    %v2842 = vpop.permute.xlu0 %2841
    %2843 = vrot.lane.b32.xlu0 %v2796, 108
    %v2844 = vpop.permute.xlu0 %2843
    %2845 = vrot.lane.b32.xlu0 %v2797, 108
    %v2846 = vpop.permute.xlu0 %2845
    %2847 = vrot.lane.b32.xlu0 %v2798, 108
    %v2848 = vpop.permute.xlu0 %2847
    %2849 = vrot.lane.b32.xlu0 %v2799, 108
    %v2850 = vpop.permute.xlu0 %2849
    %2851 = vrot.lane.b32.xlu0 %v2800, 108
    %v2852 = vpop.permute.xlu0 %2851
    %2853 = vrot.lane.b32.xlu0 %v2801, 108
    %v2854 = vpop.permute.xlu0 %2853
    %2855 = vrot.lane.b32.xlu0 %v2802, 108
    %v2856 = vpop.permute.xlu0 %2855
    %vm2857 = vcmask 883712
    %v2858 = vsel %vm2857, %v2822, %v2824
    %v2859 = vsel %vm2857, %v2824, %v2826
    %v2860 = vsel %vm2857, %v2826, %v2828
    %v2861 = vsel %vm2857, %v2828, %v2830
    %v2862 = vsel %vm2857, %v2830, %v2832
    %v2863 = vsel %vm2857, %v2832, %v2834
    %v2864 = vsel %vm2857, %v2834, %v2836
    %v2865 = vsel %vm2857, %v2836, %v2838
    %v2866 = vsel %vm2857, %v2840, %v2842
    %v2867 = vsel %vm2857, %v2842, %v2844
    %v2868 = vsel %vm2857, %v2844, %v2846
    %v2869 = vsel %vm2857, %v2846, %v2848
    %v2870 = vsel %vm2857, %v2848, %v2850
    %v2871 = vsel %vm2857, %v2850, %v2852
    %v2872 = vsel %vm2857, %v2852, %v2854
    %v2873 = vsel %vm2857, %v2854, %v2856
    %v2890 = vadd.f32 %v2761, %v2858
    %v2891 = vadd.f32 %v2762, %v2859
    %v2892 = vadd.f32 %v2763, %v2860
    %v2893 = vadd.f32 %v2764, %v2861
    %v2894 = vadd.f32 %v2765, %v2862
    %v2895 = vadd.f32 %v2766, %v2863
    %v2896 = vadd.f32 %v2767, %v2864
    %v2897 = vadd.f32 %v2768, %v2865
    %v2898 = vadd.f32 %v2769, %v2866
    %v2899 = vadd.f32 %v2770, %v2867
    %v2900 = vadd.f32 %v2771, %v2868
    %v2901 = vadd.f32 %v2772, %v2869
    %v2902 = vadd.f32 %v2773, %v2870
    %v2903 = vadd.f32 %v2774, %v2871
    %v2904 = vadd.f32 %v2775, %v2872
    %v2905 = vadd.f32 %v2776, %v2873
    %2906 = vset.pattern.permute.xlu0 21
    %2907 = vperm.xlu0 %2906, %v264
    %v2908 = vpop.permute.xlu0 %2907
    %2910 = vset.pattern.permute.xlu0 21
    %2911 = vperm.xlu0 %2910, %v265
    %v2912 = vpop.permute.xlu0 %2911
    %v2914 = vmul.f32 %v2908, %v308
    %v2915 = vmul.f32 %v2908, %v309
    %v2916 = vmul.f32 %v2908, %v310
    %v2917 = vmul.f32 %v2908, %v311
    %v2918 = vmul.f32 %v2908, %v312
    %v2919 = vmul.f32 %v2908, %v313
    %v2920 = vmul.f32 %v2908, %v314
    %v2921 = vmul.f32 %v2908, %v315
    %v2922 = vmul.f32 %v2908, %v316
    %v2923 = vmul.f32 %v2912, %v317
    %v2924 = vmul.f32 %v2912, %v318
    %v2925 = vmul.f32 %v2912, %v319
    %v2926 = vmul.f32 %v2912, %v320
    %v2927 = vmul.f32 %v2912, %v321
    %v2928 = vmul.f32 %v2912, %v322
    %v2929 = vmul.f32 %v2912, %v323
    %v2930 = vmul.f32 %v2912, %v324
    %v2931 = vmul.f32 %v2912, %v325
    %2950 = vrot.lane.b32.xlu0 %v2914, 107
    %v2951 = vpop.permute.xlu0 %2950
    %2952 = vrot.lane.b32.xlu0 %v2915, 107
    %v2953 = vpop.permute.xlu0 %2952
    %2954 = vrot.lane.b32.xlu0 %v2916, 107
    %v2955 = vpop.permute.xlu0 %2954
    %2956 = vrot.lane.b32.xlu0 %v2917, 107
    %v2957 = vpop.permute.xlu0 %2956
    %2958 = vrot.lane.b32.xlu0 %v2918, 107
    %v2959 = vpop.permute.xlu0 %2958
    %2960 = vrot.lane.b32.xlu0 %v2919, 107
    %v2961 = vpop.permute.xlu0 %2960
    %2962 = vrot.lane.b32.xlu0 %v2920, 107
    %v2963 = vpop.permute.xlu0 %2962
    %2964 = vrot.lane.b32.xlu0 %v2921, 107
    %v2965 = vpop.permute.xlu0 %2964
    %2966 = vrot.lane.b32.xlu0 %v2922, 107
    %v2967 = vpop.permute.xlu0 %2966
    %2968 = vrot.lane.b32.xlu0 %v2923, 107
    %v2969 = vpop.permute.xlu0 %2968
    %2970 = vrot.lane.b32.xlu0 %v2924, 107
    %v2971 = vpop.permute.xlu0 %2970
    %2972 = vrot.lane.b32.xlu0 %v2925, 107
    %v2973 = vpop.permute.xlu0 %2972
    %2974 = vrot.lane.b32.xlu0 %v2926, 107
    %v2975 = vpop.permute.xlu0 %2974
    %2976 = vrot.lane.b32.xlu0 %v2927, 107
    %v2977 = vpop.permute.xlu0 %2976
    %2978 = vrot.lane.b32.xlu0 %v2928, 107
    %v2979 = vpop.permute.xlu0 %2978
    %2980 = vrot.lane.b32.xlu0 %v2929, 107
    %v2981 = vpop.permute.xlu0 %2980
    %2982 = vrot.lane.b32.xlu0 %v2930, 107
    %v2983 = vpop.permute.xlu0 %2982
    %2984 = vrot.lane.b32.xlu0 %v2931, 107
    %v2985 = vpop.permute.xlu0 %2984
    %vm2986 = vcmask 875520
    %v2987 = vsel %vm2986, %v2951, %v2953
    %v2988 = vsel %vm2986, %v2953, %v2955
    %v2989 = vsel %vm2986, %v2955, %v2957
    %v2990 = vsel %vm2986, %v2957, %v2959
    %v2991 = vsel %vm2986, %v2959, %v2961
    %v2992 = vsel %vm2986, %v2961, %v2963
    %v2993 = vsel %vm2986, %v2963, %v2965
    %v2994 = vsel %vm2986, %v2965, %v2967
    %v2995 = vsel %vm2986, %v2969, %v2971
    %v2996 = vsel %vm2986, %v2971, %v2973
    %v2997 = vsel %vm2986, %v2973, %v2975
    %v2998 = vsel %vm2986, %v2975, %v2977
    %v2999 = vsel %vm2986, %v2977, %v2979
    %v3000 = vsel %vm2986, %v2979, %v2981
    %v3001 = vsel %vm2986, %v2981, %v2983
    %v3002 = vsel %vm2986, %v2983, %v2985
    %v3019 = vadd.f32 %v2890, %v2987
    %v3020 = vadd.f32 %v2891, %v2988
    %v3021 = vadd.f32 %v2892, %v2989
    %v3022 = vadd.f32 %v2893, %v2990
    %v3023 = vadd.f32 %v2894, %v2991
    %v3024 = vadd.f32 %v2895, %v2992
    %v3025 = vadd.f32 %v2896, %v2993
    %v3026 = vadd.f32 %v2897, %v2994
    %v3027 = vadd.f32 %v2898, %v2995
    %v3028 = vadd.f32 %v2899, %v2996
    %v3029 = vadd.f32 %v2900, %v2997
    %v3030 = vadd.f32 %v2901, %v2998
    %v3031 = vadd.f32 %v2902, %v2999
    %v3032 = vadd.f32 %v2903, %v3000
    %v3033 = vadd.f32 %v2904, %v3001
    %v3034 = vadd.f32 %v2905, %v3002
    %3035 = vset.pattern.permute.xlu0 22
    %3036 = vperm.xlu0 %3035, %v264
    %v3037 = vpop.permute.xlu0 %3036
    %3039 = vset.pattern.permute.xlu0 22
    %3040 = vperm.xlu0 %3039, %v265
    %v3041 = vpop.permute.xlu0 %3040
    %v3043 = vmul.f32 %v3037, %v308
    %v3044 = vmul.f32 %v3037, %v309
    %v3045 = vmul.f32 %v3037, %v310
    %v3046 = vmul.f32 %v3037, %v311
    %v3047 = vmul.f32 %v3037, %v312
    %v3048 = vmul.f32 %v3037, %v313
    %v3049 = vmul.f32 %v3037, %v314
    %v3050 = vmul.f32 %v3037, %v315
    %v3051 = vmul.f32 %v3037, %v316
    %v3052 = vmul.f32 %v3041, %v317
    %v3053 = vmul.f32 %v3041, %v318
    %v3054 = vmul.f32 %v3041, %v319
    %v3055 = vmul.f32 %v3041, %v320
    %v3056 = vmul.f32 %v3041, %v321
    %v3057 = vmul.f32 %v3041, %v322
    %v3058 = vmul.f32 %v3041, %v323
    %v3059 = vmul.f32 %v3041, %v324
    %v3060 = vmul.f32 %v3041, %v325
    %3079 = vrot.lane.b32.xlu0 %v3043, 106
    %v3080 = vpop.permute.xlu0 %3079
    %3081 = vrot.lane.b32.xlu0 %v3044, 106
    %v3082 = vpop.permute.xlu0 %3081
    %3083 = vrot.lane.b32.xlu0 %v3045, 106
    %v3084 = vpop.permute.xlu0 %3083
    %3085 = vrot.lane.b32.xlu0 %v3046, 106
    %v3086 = vpop.permute.xlu0 %3085
    %3087 = vrot.lane.b32.xlu0 %v3047, 106
    %v3088 = vpop.permute.xlu0 %3087
    %3089 = vrot.lane.b32.xlu0 %v3048, 106
    %v3090 = vpop.permute.xlu0 %3089
    %3091 = vrot.lane.b32.xlu0 %v3049, 106
    %v3092 = vpop.permute.xlu0 %3091
    %3093 = vrot.lane.b32.xlu0 %v3050, 106
    %v3094 = vpop.permute.xlu0 %3093
    %3095 = vrot.lane.b32.xlu0 %v3051, 106
    %v3096 = vpop.permute.xlu0 %3095
    %3097 = vrot.lane.b32.xlu0 %v3052, 106
    %v3098 = vpop.permute.xlu0 %3097
    %3099 = vrot.lane.b32.xlu0 %v3053, 106
    %v3100 = vpop.permute.xlu0 %3099
    %3101 = vrot.lane.b32.xlu0 %v3054, 106
    %v3102 = vpop.permute.xlu0 %3101
    %3103 = vrot.lane.b32.xlu0 %v3055, 106
    %v3104 = vpop.permute.xlu0 %3103
    %3105 = vrot.lane.b32.xlu0 %v3056, 106
    %v3106 = vpop.permute.xlu0 %3105
    %3107 = vrot.lane.b32.xlu0 %v3057, 106
    %v3108 = vpop.permute.xlu0 %3107
    %3109 = vrot.lane.b32.xlu0 %v3058, 106
    %v3110 = vpop.permute.xlu0 %3109
    %3111 = vrot.lane.b32.xlu0 %v3059, 106
    %v3112 = vpop.permute.xlu0 %3111
    %3113 = vrot.lane.b32.xlu0 %v3060, 106
    %v3114 = vpop.permute.xlu0 %3113
    %vm3115 = vcmask 867328
    %v3116 = vsel %vm3115, %v3080, %v3082
    %v3117 = vsel %vm3115, %v3082, %v3084
    %v3118 = vsel %vm3115, %v3084, %v3086
    %v3119 = vsel %vm3115, %v3086, %v3088
    %v3120 = vsel %vm3115, %v3088, %v3090
    %v3121 = vsel %vm3115, %v3090, %v3092
    %v3122 = vsel %vm3115, %v3092, %v3094
    %v3123 = vsel %vm3115, %v3094, %v3096
    %v3124 = vsel %vm3115, %v3098, %v3100
    %v3125 = vsel %vm3115, %v3100, %v3102
    %v3126 = vsel %vm3115, %v3102, %v3104
    %v3127 = vsel %vm3115, %v3104, %v3106
    %v3128 = vsel %vm3115, %v3106, %v3108
    %v3129 = vsel %vm3115, %v3108, %v3110
    %v3130 = vsel %vm3115, %v3110, %v3112
    %v3131 = vsel %vm3115, %v3112, %v3114
    %v3148 = vadd.f32 %v3019, %v3116
    %v3149 = vadd.f32 %v3020, %v3117
    %v3150 = vadd.f32 %v3021, %v3118
    %v3151 = vadd.f32 %v3022, %v3119
    %v3152 = vadd.f32 %v3023, %v3120
    %v3153 = vadd.f32 %v3024, %v3121
    %v3154 = vadd.f32 %v3025, %v3122
    %v3155 = vadd.f32 %v3026, %v3123
    %v3156 = vadd.f32 %v3027, %v3124
    %v3157 = vadd.f32 %v3028, %v3125
    %v3158 = vadd.f32 %v3029, %v3126
    %v3159 = vadd.f32 %v3030, %v3127
    %v3160 = vadd.f32 %v3031, %v3128
    %v3161 = vadd.f32 %v3032, %v3129
    %v3162 = vadd.f32 %v3033, %v3130
    %v3163 = vadd.f32 %v3034, %v3131
    %3164 = vset.pattern.permute.xlu0 23
    %3165 = vperm.xlu0 %3164, %v264
    %v3166 = vpop.permute.xlu0 %3165
    %3168 = vset.pattern.permute.xlu0 23
    %3169 = vperm.xlu0 %3168, %v265
    %v3170 = vpop.permute.xlu0 %3169
    %v3172 = vmul.f32 %v3166, %v308
    %v3173 = vmul.f32 %v3166, %v309
    %v3174 = vmul.f32 %v3166, %v310
    %v3175 = vmul.f32 %v3166, %v311
    %v3176 = vmul.f32 %v3166, %v312
    %v3177 = vmul.f32 %v3166, %v313
    %v3178 = vmul.f32 %v3166, %v314
    %v3179 = vmul.f32 %v3166, %v315
    %v3180 = vmul.f32 %v3166, %v316
    %v3181 = vmul.f32 %v3170, %v317
    %v3182 = vmul.f32 %v3170, %v318
    %v3183 = vmul.f32 %v3170, %v319
    %v3184 = vmul.f32 %v3170, %v320
    %v3185 = vmul.f32 %v3170, %v321
    %v3186 = vmul.f32 %v3170, %v322
    %v3187 = vmul.f32 %v3170, %v323
    %v3188 = vmul.f32 %v3170, %v324
    %v3189 = vmul.f32 %v3170, %v325
    %3208 = vrot.lane.b32.xlu0 %v3172, 105
    %v3209 = vpop.permute.xlu0 %3208
    %3210 = vrot.lane.b32.xlu0 %v3173, 105
    %v3211 = vpop.permute.xlu0 %3210
    %3212 = vrot.lane.b32.xlu0 %v3174, 105
    %v3213 = vpop.permute.xlu0 %3212
    %3214 = vrot.lane.b32.xlu0 %v3175, 105
    %v3215 = vpop.permute.xlu0 %3214
    %3216 = vrot.lane.b32.xlu0 %v3176, 105
    %v3217 = vpop.permute.xlu0 %3216
    %3218 = vrot.lane.b32.xlu0 %v3177, 105
    %v3219 = vpop.permute.xlu0 %3218
    %3220 = vrot.lane.b32.xlu0 %v3178, 105
    %v3221 = vpop.permute.xlu0 %3220
    %3222 = vrot.lane.b32.xlu0 %v3179, 105
    %v3223 = vpop.permute.xlu0 %3222
    %3224 = vrot.lane.b32.xlu0 %v3180, 105
    %v3225 = vpop.permute.xlu0 %3224
    %3226 = vrot.lane.b32.xlu0 %v3181, 105
    %v3227 = vpop.permute.xlu0 %3226
    %3228 = vrot.lane.b32.xlu0 %v3182, 105
    %v3229 = vpop.permute.xlu0 %3228
    %3230 = vrot.lane.b32.xlu0 %v3183, 105
    %v3231 = vpop.permute.xlu0 %3230
    %3232 = vrot.lane.b32.xlu0 %v3184, 105
    %v3233 = vpop.permute.xlu0 %3232
    %3234 = vrot.lane.b32.xlu0 %v3185, 105
    %v3235 = vpop.permute.xlu0 %3234
    %3236 = vrot.lane.b32.xlu0 %v3186, 105
    %v3237 = vpop.permute.xlu0 %3236
    %3238 = vrot.lane.b32.xlu0 %v3187, 105
    %v3239 = vpop.permute.xlu0 %3238
    %3240 = vrot.lane.b32.xlu0 %v3188, 105
    %v3241 = vpop.permute.xlu0 %3240
    %3242 = vrot.lane.b32.xlu0 %v3189, 105
    %v3243 = vpop.permute.xlu0 %3242
    %vm3244 = vcmask 859136
    %v3245 = vsel %vm3244, %v3209, %v3211
    %v3246 = vsel %vm3244, %v3211, %v3213
    %v3247 = vsel %vm3244, %v3213, %v3215
    %v3248 = vsel %vm3244, %v3215, %v3217
    %v3249 = vsel %vm3244, %v3217, %v3219
    %v3250 = vsel %vm3244, %v3219, %v3221
    %v3251 = vsel %vm3244, %v3221, %v3223
    %v3252 = vsel %vm3244, %v3223, %v3225
    %v3253 = vsel %vm3244, %v3227, %v3229
    %v3254 = vsel %vm3244, %v3229, %v3231
    %v3255 = vsel %vm3244, %v3231, %v3233
    %v3256 = vsel %vm3244, %v3233, %v3235
    %v3257 = vsel %vm3244, %v3235, %v3237
    %v3258 = vsel %vm3244, %v3237, %v3239
    %v3259 = vsel %vm3244, %v3239, %v3241
    %v3260 = vsel %vm3244, %v3241, %v3243
    %v3277 = vadd.f32 %v3148, %v3245
    %v3278 = vadd.f32 %v3149, %v3246
    %v3279 = vadd.f32 %v3150, %v3247
    %v3280 = vadd.f32 %v3151, %v3248
    %v3281 = vadd.f32 %v3152, %v3249
    %v3282 = vadd.f32 %v3153, %v3250
    %v3283 = vadd.f32 %v3154, %v3251
    %v3284 = vadd.f32 %v3155, %v3252
    %v3285 = vadd.f32 %v3156, %v3253
    %v3286 = vadd.f32 %v3157, %v3254
    %v3287 = vadd.f32 %v3158, %v3255
    %v3288 = vadd.f32 %v3159, %v3256
    %v3289 = vadd.f32 %v3160, %v3257
    %v3290 = vadd.f32 %v3161, %v3258
    %v3291 = vadd.f32 %v3162, %v3259
    %v3292 = vadd.f32 %v3163, %v3260
    %3293 = vset.pattern.permute.xlu0 24
    %3294 = vperm.xlu0 %3293, %v264
    %v3295 = vpop.permute.xlu0 %3294
    %3297 = vset.pattern.permute.xlu0 24
    %3298 = vperm.xlu0 %3297, %v265
    %v3299 = vpop.permute.xlu0 %3298
    %v3301 = vmul.f32 %v3295, %v308
    %v3302 = vmul.f32 %v3295, %v309
    %v3303 = vmul.f32 %v3295, %v310
    %v3304 = vmul.f32 %v3295, %v311
    %v3305 = vmul.f32 %v3295, %v312
    %v3306 = vmul.f32 %v3295, %v313
    %v3307 = vmul.f32 %v3295, %v314
    %v3308 = vmul.f32 %v3295, %v315
    %v3309 = vmul.f32 %v3295, %v316
    %v3310 = vmul.f32 %v3299, %v317
    %v3311 = vmul.f32 %v3299, %v318
    %v3312 = vmul.f32 %v3299, %v319
    %v3313 = vmul.f32 %v3299, %v320
    %v3314 = vmul.f32 %v3299, %v321
    %v3315 = vmul.f32 %v3299, %v322
    %v3316 = vmul.f32 %v3299, %v323
    %v3317 = vmul.f32 %v3299, %v324
    %v3318 = vmul.f32 %v3299, %v325
    %3337 = vrot.lane.b32.xlu0 %v3301, 104
    %v3338 = vpop.permute.xlu0 %3337
    %3339 = vrot.lane.b32.xlu0 %v3302, 104
    %v3340 = vpop.permute.xlu0 %3339
    %3341 = vrot.lane.b32.xlu0 %v3303, 104
    %v3342 = vpop.permute.xlu0 %3341
    %3343 = vrot.lane.b32.xlu0 %v3304, 104
    %v3344 = vpop.permute.xlu0 %3343
    %3345 = vrot.lane.b32.xlu0 %v3305, 104
    %v3346 = vpop.permute.xlu0 %3345
    %3347 = vrot.lane.b32.xlu0 %v3306, 104
    %v3348 = vpop.permute.xlu0 %3347
    %3349 = vrot.lane.b32.xlu0 %v3307, 104
    %v3350 = vpop.permute.xlu0 %3349
    %3351 = vrot.lane.b32.xlu0 %v3308, 104
    %v3352 = vpop.permute.xlu0 %3351
    %3353 = vrot.lane.b32.xlu0 %v3309, 104
    %v3354 = vpop.permute.xlu0 %3353
    %3355 = vrot.lane.b32.xlu0 %v3310, 104
    %v3356 = vpop.permute.xlu0 %3355
    %3357 = vrot.lane.b32.xlu0 %v3311, 104
    %v3358 = vpop.permute.xlu0 %3357
    %3359 = vrot.lane.b32.xlu0 %v3312, 104
    %v3360 = vpop.permute.xlu0 %3359
    %3361 = vrot.lane.b32.xlu0 %v3313, 104
    %v3362 = vpop.permute.xlu0 %3361
    %3363 = vrot.lane.b32.xlu0 %v3314, 104
    %v3364 = vpop.permute.xlu0 %3363
    %3365 = vrot.lane.b32.xlu0 %v3315, 104
    %v3366 = vpop.permute.xlu0 %3365
    %3367 = vrot.lane.b32.xlu0 %v3316, 104
    %v3368 = vpop.permute.xlu0 %3367
    %3369 = vrot.lane.b32.xlu0 %v3317, 104
    %v3370 = vpop.permute.xlu0 %3369
    %3371 = vrot.lane.b32.xlu0 %v3318, 104
    %v3372 = vpop.permute.xlu0 %3371
    %vm3373 = vcmask 850944
    %v3374 = vsel %vm3373, %v3338, %v3340
    %v3375 = vsel %vm3373, %v3340, %v3342
    %v3376 = vsel %vm3373, %v3342, %v3344
    %v3377 = vsel %vm3373, %v3344, %v3346
    %v3378 = vsel %vm3373, %v3346, %v3348
    %v3379 = vsel %vm3373, %v3348, %v3350
    %v3380 = vsel %vm3373, %v3350, %v3352
    %v3381 = vsel %vm3373, %v3352, %v3354
    %v3382 = vsel %vm3373, %v3356, %v3358
    %v3383 = vsel %vm3373, %v3358, %v3360
    %v3384 = vsel %vm3373, %v3360, %v3362
    %v3385 = vsel %vm3373, %v3362, %v3364
    %v3386 = vsel %vm3373, %v3364, %v3366
    %v3387 = vsel %vm3373, %v3366, %v3368
    %v3388 = vsel %vm3373, %v3368, %v3370
    %v3389 = vsel %vm3373, %v3370, %v3372
    %v3406 = vadd.f32 %v3277, %v3374
    %v3407 = vadd.f32 %v3278, %v3375
    %v3408 = vadd.f32 %v3279, %v3376
    %v3409 = vadd.f32 %v3280, %v3377
    %v3410 = vadd.f32 %v3281, %v3378
    %v3411 = vadd.f32 %v3282, %v3379
    %v3412 = vadd.f32 %v3283, %v3380
    %v3413 = vadd.f32 %v3284, %v3381
    %v3414 = vadd.f32 %v3285, %v3382
    %v3415 = vadd.f32 %v3286, %v3383
    %v3416 = vadd.f32 %v3287, %v3384
    %v3417 = vadd.f32 %v3288, %v3385
    %v3418 = vadd.f32 %v3289, %v3386
    %v3419 = vadd.f32 %v3290, %v3387
    %v3420 = vadd.f32 %v3291, %v3388
    %v3421 = vadd.f32 %v3292, %v3389
    %3422 = vset.pattern.permute.xlu0 25
    %3423 = vperm.xlu0 %3422, %v264
    %v3424 = vpop.permute.xlu0 %3423
    %3426 = vset.pattern.permute.xlu0 25
    %3427 = vperm.xlu0 %3426, %v265
    %v3428 = vpop.permute.xlu0 %3427
    %v3430 = vmul.f32 %v3424, %v308
    %v3431 = vmul.f32 %v3424, %v309
    %v3432 = vmul.f32 %v3424, %v310
    %v3433 = vmul.f32 %v3424, %v311
    %v3434 = vmul.f32 %v3424, %v312
    %v3435 = vmul.f32 %v3424, %v313
    %v3436 = vmul.f32 %v3424, %v314
    %v3437 = vmul.f32 %v3424, %v315
    %v3438 = vmul.f32 %v3424, %v316
    %v3439 = vmul.f32 %v3428, %v317
    %v3440 = vmul.f32 %v3428, %v318
    %v3441 = vmul.f32 %v3428, %v319
    %v3442 = vmul.f32 %v3428, %v320
    %v3443 = vmul.f32 %v3428, %v321
    %v3444 = vmul.f32 %v3428, %v322
    %v3445 = vmul.f32 %v3428, %v323
    %v3446 = vmul.f32 %v3428, %v324
    %v3447 = vmul.f32 %v3428, %v325
    %3466 = vrot.lane.b32.xlu0 %v3430, 103
    %v3467 = vpop.permute.xlu0 %3466
    %3468 = vrot.lane.b32.xlu0 %v3431, 103
    %v3469 = vpop.permute.xlu0 %3468
    %3470 = vrot.lane.b32.xlu0 %v3432, 103
    %v3471 = vpop.permute.xlu0 %3470
    %3472 = vrot.lane.b32.xlu0 %v3433, 103
    %v3473 = vpop.permute.xlu0 %3472
    %3474 = vrot.lane.b32.xlu0 %v3434, 103
    %v3475 = vpop.permute.xlu0 %3474
    %3476 = vrot.lane.b32.xlu0 %v3435, 103
    %v3477 = vpop.permute.xlu0 %3476
    %3478 = vrot.lane.b32.xlu0 %v3436, 103
    %v3479 = vpop.permute.xlu0 %3478
    %3480 = vrot.lane.b32.xlu0 %v3437, 103
    %v3481 = vpop.permute.xlu0 %3480
    %3482 = vrot.lane.b32.xlu0 %v3438, 103
    %v3483 = vpop.permute.xlu0 %3482
    %3484 = vrot.lane.b32.xlu0 %v3439, 103
    %v3485 = vpop.permute.xlu0 %3484
    %3486 = vrot.lane.b32.xlu0 %v3440, 103
    %v3487 = vpop.permute.xlu0 %3486
    %3488 = vrot.lane.b32.xlu0 %v3441, 103
    %v3489 = vpop.permute.xlu0 %3488
    %3490 = vrot.lane.b32.xlu0 %v3442, 103
    %v3491 = vpop.permute.xlu0 %3490
    %3492 = vrot.lane.b32.xlu0 %v3443, 103
    %v3493 = vpop.permute.xlu0 %3492
    %3494 = vrot.lane.b32.xlu0 %v3444, 103
    %v3495 = vpop.permute.xlu0 %3494
    %3496 = vrot.lane.b32.xlu0 %v3445, 103
    %v3497 = vpop.permute.xlu0 %3496
    %3498 = vrot.lane.b32.xlu0 %v3446, 103
    %v3499 = vpop.permute.xlu0 %3498
    %3500 = vrot.lane.b32.xlu0 %v3447, 103
    %v3501 = vpop.permute.xlu0 %3500
    %vm3502 = vcmask 842752
    %v3503 = vsel %vm3502, %v3467, %v3469
    %v3504 = vsel %vm3502, %v3469, %v3471
    %v3505 = vsel %vm3502, %v3471, %v3473
    %v3506 = vsel %vm3502, %v3473, %v3475
    %v3507 = vsel %vm3502, %v3475, %v3477
    %v3508 = vsel %vm3502, %v3477, %v3479
    %v3509 = vsel %vm3502, %v3479, %v3481
    %v3510 = vsel %vm3502, %v3481, %v3483
    %v3511 = vsel %vm3502, %v3485, %v3487
    %v3512 = vsel %vm3502, %v3487, %v3489
    %v3513 = vsel %vm3502, %v3489, %v3491
    %v3514 = vsel %vm3502, %v3491, %v3493
    %v3515 = vsel %vm3502, %v3493, %v3495
    %v3516 = vsel %vm3502, %v3495, %v3497
    %v3517 = vsel %vm3502, %v3497, %v3499
    %v3518 = vsel %vm3502, %v3499, %v3501
    %v3535 = vadd.f32 %v3406, %v3503
    %v3536 = vadd.f32 %v3407, %v3504
    %v3537 = vadd.f32 %v3408, %v3505
    %v3538 = vadd.f32 %v3409, %v3506
    %v3539 = vadd.f32 %v3410, %v3507
    %v3540 = vadd.f32 %v3411, %v3508
    %v3541 = vadd.f32 %v3412, %v3509
    %v3542 = vadd.f32 %v3413, %v3510
    %v3543 = vadd.f32 %v3414, %v3511
    %v3544 = vadd.f32 %v3415, %v3512
    %v3545 = vadd.f32 %v3416, %v3513
    %v3546 = vadd.f32 %v3417, %v3514
    %v3547 = vadd.f32 %v3418, %v3515
    %v3548 = vadd.f32 %v3419, %v3516
    %v3549 = vadd.f32 %v3420, %v3517
    %v3550 = vadd.f32 %v3421, %v3518
    %3551 = vset.pattern.permute.xlu0 26
    %3552 = vperm.xlu0 %3551, %v264
    %v3553 = vpop.permute.xlu0 %3552
    %3555 = vset.pattern.permute.xlu0 26
    %3556 = vperm.xlu0 %3555, %v265
    %v3557 = vpop.permute.xlu0 %3556
    %v3559 = vmul.f32 %v3553, %v308
    %v3560 = vmul.f32 %v3553, %v309
    %v3561 = vmul.f32 %v3553, %v310
    %v3562 = vmul.f32 %v3553, %v311
    %v3563 = vmul.f32 %v3553, %v312
    %v3564 = vmul.f32 %v3553, %v313
    %v3565 = vmul.f32 %v3553, %v314
    %v3566 = vmul.f32 %v3553, %v315
    %v3567 = vmul.f32 %v3553, %v316
    %v3568 = vmul.f32 %v3557, %v317
    %v3569 = vmul.f32 %v3557, %v318
    %v3570 = vmul.f32 %v3557, %v319
    %v3571 = vmul.f32 %v3557, %v320
    %v3572 = vmul.f32 %v3557, %v321
    %v3573 = vmul.f32 %v3557, %v322
    %v3574 = vmul.f32 %v3557, %v323
    %v3575 = vmul.f32 %v3557, %v324
    %v3576 = vmul.f32 %v3557, %v325
    %3595 = vrot.lane.b32.xlu0 %v3559, 102
    %v3596 = vpop.permute.xlu0 %3595
    %3597 = vrot.lane.b32.xlu0 %v3560, 102
    %v3598 = vpop.permute.xlu0 %3597
    %3599 = vrot.lane.b32.xlu0 %v3561, 102
    %v3600 = vpop.permute.xlu0 %3599
    %3601 = vrot.lane.b32.xlu0 %v3562, 102
    %v3602 = vpop.permute.xlu0 %3601
    %3603 = vrot.lane.b32.xlu0 %v3563, 102
    %v3604 = vpop.permute.xlu0 %3603
    %3605 = vrot.lane.b32.xlu0 %v3564, 102
    %v3606 = vpop.permute.xlu0 %3605
    %3607 = vrot.lane.b32.xlu0 %v3565, 102
    %v3608 = vpop.permute.xlu0 %3607
    %3609 = vrot.lane.b32.xlu0 %v3566, 102
    %v3610 = vpop.permute.xlu0 %3609
    %3611 = vrot.lane.b32.xlu0 %v3567, 102
    %v3612 = vpop.permute.xlu0 %3611
    %3613 = vrot.lane.b32.xlu0 %v3568, 102
    %v3614 = vpop.permute.xlu0 %3613
    %3615 = vrot.lane.b32.xlu0 %v3569, 102
    %v3616 = vpop.permute.xlu0 %3615
    %3617 = vrot.lane.b32.xlu0 %v3570, 102
    %v3618 = vpop.permute.xlu0 %3617
    %3619 = vrot.lane.b32.xlu0 %v3571, 102
    %v3620 = vpop.permute.xlu0 %3619
    %3621 = vrot.lane.b32.xlu0 %v3572, 102
    %v3622 = vpop.permute.xlu0 %3621
    %3623 = vrot.lane.b32.xlu0 %v3573, 102
    %v3624 = vpop.permute.xlu0 %3623
    %3625 = vrot.lane.b32.xlu0 %v3574, 102
    %v3626 = vpop.permute.xlu0 %3625
    %3627 = vrot.lane.b32.xlu0 %v3575, 102
    %v3628 = vpop.permute.xlu0 %3627
    %3629 = vrot.lane.b32.xlu0 %v3576, 102
    %v3630 = vpop.permute.xlu0 %3629
    %vm3631 = vcmask 834560
    %v3632 = vsel %vm3631, %v3596, %v3598
    %v3633 = vsel %vm3631, %v3598, %v3600
    %v3634 = vsel %vm3631, %v3600, %v3602
    %v3635 = vsel %vm3631, %v3602, %v3604
    %v3636 = vsel %vm3631, %v3604, %v3606
    %v3637 = vsel %vm3631, %v3606, %v3608
    %v3638 = vsel %vm3631, %v3608, %v3610
    %v3639 = vsel %vm3631, %v3610, %v3612
    %v3640 = vsel %vm3631, %v3614, %v3616
    %v3641 = vsel %vm3631, %v3616, %v3618
    %v3642 = vsel %vm3631, %v3618, %v3620
    %v3643 = vsel %vm3631, %v3620, %v3622
    %v3644 = vsel %vm3631, %v3622, %v3624
    %v3645 = vsel %vm3631, %v3624, %v3626
    %v3646 = vsel %vm3631, %v3626, %v3628
    %v3647 = vsel %vm3631, %v3628, %v3630
    %v3664 = vadd.f32 %v3535, %v3632
    %v3665 = vadd.f32 %v3536, %v3633
    %v3666 = vadd.f32 %v3537, %v3634
    %v3667 = vadd.f32 %v3538, %v3635
    %v3668 = vadd.f32 %v3539, %v3636
    %v3669 = vadd.f32 %v3540, %v3637
    %v3670 = vadd.f32 %v3541, %v3638
    %v3671 = vadd.f32 %v3542, %v3639
    %v3672 = vadd.f32 %v3543, %v3640
    %v3673 = vadd.f32 %v3544, %v3641
    %v3674 = vadd.f32 %v3545, %v3642
    %v3675 = vadd.f32 %v3546, %v3643
    %v3676 = vadd.f32 %v3547, %v3644
    %v3677 = vadd.f32 %v3548, %v3645
    %v3678 = vadd.f32 %v3549, %v3646
    %v3679 = vadd.f32 %v3550, %v3647
    %3680 = vset.pattern.permute.xlu0 27
    %3681 = vperm.xlu0 %3680, %v264
    %v3682 = vpop.permute.xlu0 %3681
    %3684 = vset.pattern.permute.xlu0 27
    %3685 = vperm.xlu0 %3684, %v265
    %v3686 = vpop.permute.xlu0 %3685
    %v3688 = vmul.f32 %v3682, %v308
    %v3689 = vmul.f32 %v3682, %v309
    %v3690 = vmul.f32 %v3682, %v310
    %v3691 = vmul.f32 %v3682, %v311
    %v3692 = vmul.f32 %v3682, %v312
    %v3693 = vmul.f32 %v3682, %v313
    %v3694 = vmul.f32 %v3682, %v314
    %v3695 = vmul.f32 %v3682, %v315
    %v3696 = vmul.f32 %v3682, %v316
    %v3697 = vmul.f32 %v3686, %v317
    %v3698 = vmul.f32 %v3686, %v318
    %v3699 = vmul.f32 %v3686, %v319
    %v3700 = vmul.f32 %v3686, %v320
    %v3701 = vmul.f32 %v3686, %v321
    %v3702 = vmul.f32 %v3686, %v322
    %v3703 = vmul.f32 %v3686, %v323
    %v3704 = vmul.f32 %v3686, %v324
    %v3705 = vmul.f32 %v3686, %v325
    %3724 = vrot.lane.b32.xlu0 %v3688, 101
    %v3725 = vpop.permute.xlu0 %3724
    %3726 = vrot.lane.b32.xlu0 %v3689, 101
    %v3727 = vpop.permute.xlu0 %3726
    %3728 = vrot.lane.b32.xlu0 %v3690, 101
    %v3729 = vpop.permute.xlu0 %3728
    %3730 = vrot.lane.b32.xlu0 %v3691, 101
    %v3731 = vpop.permute.xlu0 %3730
    %3732 = vrot.lane.b32.xlu0 %v3692, 101
    %v3733 = vpop.permute.xlu0 %3732
    %3734 = vrot.lane.b32.xlu0 %v3693, 101
    %v3735 = vpop.permute.xlu0 %3734
    %3736 = vrot.lane.b32.xlu0 %v3694, 101
    %v3737 = vpop.permute.xlu0 %3736
    %3738 = vrot.lane.b32.xlu0 %v3695, 101
    %v3739 = vpop.permute.xlu0 %3738
    %3740 = vrot.lane.b32.xlu0 %v3696, 101
    %v3741 = vpop.permute.xlu0 %3740
    %3742 = vrot.lane.b32.xlu0 %v3697, 101
    %v3743 = vpop.permute.xlu0 %3742
    %3744 = vrot.lane.b32.xlu0 %v3698, 101
    %v3745 = vpop.permute.xlu0 %3744
    %3746 = vrot.lane.b32.xlu0 %v3699, 101
    %v3747 = vpop.permute.xlu0 %3746
    %3748 = vrot.lane.b32.xlu0 %v3700, 101
    %v3749 = vpop.permute.xlu0 %3748
    %3750 = vrot.lane.b32.xlu0 %v3701, 101
    %v3751 = vpop.permute.xlu0 %3750
    %3752 = vrot.lane.b32.xlu0 %v3702, 101
    %v3753 = vpop.permute.xlu0 %3752
    %3754 = vrot.lane.b32.xlu0 %v3703, 101
    %v3755 = vpop.permute.xlu0 %3754
    %3756 = vrot.lane.b32.xlu0 %v3704, 101
    %v3757 = vpop.permute.xlu0 %3756
    %3758 = vrot.lane.b32.xlu0 %v3705, 101
    %v3759 = vpop.permute.xlu0 %3758
    %vm3760 = vcmask 826368
    %v3761 = vsel %vm3760, %v3725, %v3727
    %v3762 = vsel %vm3760, %v3727, %v3729
    %v3763 = vsel %vm3760, %v3729, %v3731
    %v3764 = vsel %vm3760, %v3731, %v3733
    %v3765 = vsel %vm3760, %v3733, %v3735
    %v3766 = vsel %vm3760, %v3735, %v3737
    %v3767 = vsel %vm3760, %v3737, %v3739
    %v3768 = vsel %vm3760, %v3739, %v3741
    %v3769 = vsel %vm3760, %v3743, %v3745
    %v3770 = vsel %vm3760, %v3745, %v3747
    %v3771 = vsel %vm3760, %v3747, %v3749
    %v3772 = vsel %vm3760, %v3749, %v3751
    %v3773 = vsel %vm3760, %v3751, %v3753
    %v3774 = vsel %vm3760, %v3753, %v3755
    %v3775 = vsel %vm3760, %v3755, %v3757
    %v3776 = vsel %vm3760, %v3757, %v3759
    %v3793 = vadd.f32 %v3664, %v3761
    %v3794 = vadd.f32 %v3665, %v3762
    %v3795 = vadd.f32 %v3666, %v3763
    %v3796 = vadd.f32 %v3667, %v3764
    %v3797 = vadd.f32 %v3668, %v3765
    %v3798 = vadd.f32 %v3669, %v3766
    %v3799 = vadd.f32 %v3670, %v3767
    %v3800 = vadd.f32 %v3671, %v3768
    %v3801 = vadd.f32 %v3672, %v3769
    %v3802 = vadd.f32 %v3673, %v3770
    %v3803 = vadd.f32 %v3674, %v3771
    %v3804 = vadd.f32 %v3675, %v3772
    %v3805 = vadd.f32 %v3676, %v3773
    %v3806 = vadd.f32 %v3677, %v3774
    %v3807 = vadd.f32 %v3678, %v3775
    %v3808 = vadd.f32 %v3679, %v3776
    %3809 = vset.pattern.permute.xlu0 28
    %3810 = vperm.xlu0 %3809, %v264
    %v3811 = vpop.permute.xlu0 %3810
    %3813 = vset.pattern.permute.xlu0 28
    %3814 = vperm.xlu0 %3813, %v265
    %v3815 = vpop.permute.xlu0 %3814
    %v3817 = vmul.f32 %v3811, %v308
    %v3818 = vmul.f32 %v3811, %v309
    %v3819 = vmul.f32 %v3811, %v310
    %v3820 = vmul.f32 %v3811, %v311
    %v3821 = vmul.f32 %v3811, %v312
    %v3822 = vmul.f32 %v3811, %v313
    %v3823 = vmul.f32 %v3811, %v314
    %v3824 = vmul.f32 %v3811, %v315
    %v3825 = vmul.f32 %v3811, %v316
    %v3826 = vmul.f32 %v3815, %v317
    %v3827 = vmul.f32 %v3815, %v318
    %v3828 = vmul.f32 %v3815, %v319
    %v3829 = vmul.f32 %v3815, %v320
    %v3830 = vmul.f32 %v3815, %v321
    %v3831 = vmul.f32 %v3815, %v322
    %v3832 = vmul.f32 %v3815, %v323
    %v3833 = vmul.f32 %v3815, %v324
    %v3834 = vmul.f32 %v3815, %v325
    %3853 = vrot.lane.b32.xlu0 %v3817, 100
    %v3854 = vpop.permute.xlu0 %3853
    %3855 = vrot.lane.b32.xlu0 %v3818, 100
    %v3856 = vpop.permute.xlu0 %3855
    %3857 = vrot.lane.b32.xlu0 %v3819, 100
    %v3858 = vpop.permute.xlu0 %3857
    %3859 = vrot.lane.b32.xlu0 %v3820, 100
    %v3860 = vpop.permute.xlu0 %3859
    %3861 = vrot.lane.b32.xlu0 %v3821, 100
    %v3862 = vpop.permute.xlu0 %3861
    %3863 = vrot.lane.b32.xlu0 %v3822, 100
    %v3864 = vpop.permute.xlu0 %3863
    %3865 = vrot.lane.b32.xlu0 %v3823, 100
    %v3866 = vpop.permute.xlu0 %3865
    %3867 = vrot.lane.b32.xlu0 %v3824, 100
    %v3868 = vpop.permute.xlu0 %3867
    %3869 = vrot.lane.b32.xlu0 %v3825, 100
    %v3870 = vpop.permute.xlu0 %3869
    %3871 = vrot.lane.b32.xlu0 %v3826, 100
    %v3872 = vpop.permute.xlu0 %3871
    %3873 = vrot.lane.b32.xlu0 %v3827, 100
    %v3874 = vpop.permute.xlu0 %3873
    %3875 = vrot.lane.b32.xlu0 %v3828, 100
    %v3876 = vpop.permute.xlu0 %3875
    %3877 = vrot.lane.b32.xlu0 %v3829, 100
    %v3878 = vpop.permute.xlu0 %3877
    %3879 = vrot.lane.b32.xlu0 %v3830, 100
    %v3880 = vpop.permute.xlu0 %3879
    %3881 = vrot.lane.b32.xlu0 %v3831, 100
    %v3882 = vpop.permute.xlu0 %3881
    %3883 = vrot.lane.b32.xlu0 %v3832, 100
    %v3884 = vpop.permute.xlu0 %3883
    %3885 = vrot.lane.b32.xlu0 %v3833, 100
    %v3886 = vpop.permute.xlu0 %3885
    %3887 = vrot.lane.b32.xlu0 %v3834, 100
    %v3888 = vpop.permute.xlu0 %3887
    %vm3889 = vcmask 818176
    %v3890 = vsel %vm3889, %v3854, %v3856
    %v3891 = vsel %vm3889, %v3856, %v3858
    %v3892 = vsel %vm3889, %v3858, %v3860
    %v3893 = vsel %vm3889, %v3860, %v3862
    %v3894 = vsel %vm3889, %v3862, %v3864
    %v3895 = vsel %vm3889, %v3864, %v3866
    %v3896 = vsel %vm3889, %v3866, %v3868
    %v3897 = vsel %vm3889, %v3868, %v3870
    %v3898 = vsel %vm3889, %v3872, %v3874
    %v3899 = vsel %vm3889, %v3874, %v3876
    %v3900 = vsel %vm3889, %v3876, %v3878
    %v3901 = vsel %vm3889, %v3878, %v3880
    %v3902 = vsel %vm3889, %v3880, %v3882
    %v3903 = vsel %vm3889, %v3882, %v3884
    %v3904 = vsel %vm3889, %v3884, %v3886
    %v3905 = vsel %vm3889, %v3886, %v3888
    %v3922 = vadd.f32 %v3793, %v3890
    %v3923 = vadd.f32 %v3794, %v3891
    %v3924 = vadd.f32 %v3795, %v3892
    %v3925 = vadd.f32 %v3796, %v3893
    %v3926 = vadd.f32 %v3797, %v3894
    %v3927 = vadd.f32 %v3798, %v3895
    %v3928 = vadd.f32 %v3799, %v3896
    %v3929 = vadd.f32 %v3800, %v3897
    %v3930 = vadd.f32 %v3801, %v3898
    %v3931 = vadd.f32 %v3802, %v3899
    %v3932 = vadd.f32 %v3803, %v3900
    %v3933 = vadd.f32 %v3804, %v3901
    %v3934 = vadd.f32 %v3805, %v3902
    %v3935 = vadd.f32 %v3806, %v3903
    %v3936 = vadd.f32 %v3807, %v3904
    %v3937 = vadd.f32 %v3808, %v3905
    %3938 = vset.pattern.permute.xlu0 29
    %3939 = vperm.xlu0 %3938, %v264
    %v3940 = vpop.permute.xlu0 %3939
    %3942 = vset.pattern.permute.xlu0 29
    %3943 = vperm.xlu0 %3942, %v265
    %v3944 = vpop.permute.xlu0 %3943
    %v3946 = vmul.f32 %v3940, %v308
    %v3947 = vmul.f32 %v3940, %v309
    %v3948 = vmul.f32 %v3940, %v310
    %v3949 = vmul.f32 %v3940, %v311
    %v3950 = vmul.f32 %v3940, %v312
    %v3951 = vmul.f32 %v3940, %v313
    %v3952 = vmul.f32 %v3940, %v314
    %v3953 = vmul.f32 %v3940, %v315
    %v3954 = vmul.f32 %v3940, %v316
    %v3955 = vmul.f32 %v3944, %v317
    %v3956 = vmul.f32 %v3944, %v318
    %v3957 = vmul.f32 %v3944, %v319
    %v3958 = vmul.f32 %v3944, %v320
    %v3959 = vmul.f32 %v3944, %v321
    %v3960 = vmul.f32 %v3944, %v322
    %v3961 = vmul.f32 %v3944, %v323
    %v3962 = vmul.f32 %v3944, %v324
    %v3963 = vmul.f32 %v3944, %v325
    %3982 = vrot.lane.b32.xlu0 %v3946, 99
    %v3983 = vpop.permute.xlu0 %3982
    %3984 = vrot.lane.b32.xlu0 %v3947, 99
    %v3985 = vpop.permute.xlu0 %3984
    %3986 = vrot.lane.b32.xlu0 %v3948, 99
    %v3987 = vpop.permute.xlu0 %3986
    %3988 = vrot.lane.b32.xlu0 %v3949, 99
    %v3989 = vpop.permute.xlu0 %3988
    %3990 = vrot.lane.b32.xlu0 %v3950, 99
    %v3991 = vpop.permute.xlu0 %3990
    %3992 = vrot.lane.b32.xlu0 %v3951, 99
    %v3993 = vpop.permute.xlu0 %3992
    %3994 = vrot.lane.b32.xlu0 %v3952, 99
    %v3995 = vpop.permute.xlu0 %3994
    %3996 = vrot.lane.b32.xlu0 %v3953, 99
    %v3997 = vpop.permute.xlu0 %3996
    %3998 = vrot.lane.b32.xlu0 %v3954, 99
    %v3999 = vpop.permute.xlu0 %3998
    %4000 = vrot.lane.b32.xlu0 %v3955, 99
    %v4001 = vpop.permute.xlu0 %4000
    %4002 = vrot.lane.b32.xlu0 %v3956, 99
    %v4003 = vpop.permute.xlu0 %4002
    %4004 = vrot.lane.b32.xlu0 %v3957, 99
    %v4005 = vpop.permute.xlu0 %4004
    %4006 = vrot.lane.b32.xlu0 %v3958, 99
    %v4007 = vpop.permute.xlu0 %4006
    %4008 = vrot.lane.b32.xlu0 %v3959, 99
    %v4009 = vpop.permute.xlu0 %4008
    %4010 = vrot.lane.b32.xlu0 %v3960, 99
    %v4011 = vpop.permute.xlu0 %4010
    %4012 = vrot.lane.b32.xlu0 %v3961, 99
    %v4013 = vpop.permute.xlu0 %4012
    %4014 = vrot.lane.b32.xlu0 %v3962, 99
    %v4015 = vpop.permute.xlu0 %4014
    %4016 = vrot.lane.b32.xlu0 %v3963, 99
    %v4017 = vpop.permute.xlu0 %4016
    %vm4018 = vcmask 809984
    %v4019 = vsel %vm4018, %v3983, %v3985
    %v4020 = vsel %vm4018, %v3985, %v3987
    %v4021 = vsel %vm4018, %v3987, %v3989
    %v4022 = vsel %vm4018, %v3989, %v3991
    %v4023 = vsel %vm4018, %v3991, %v3993
    %v4024 = vsel %vm4018, %v3993, %v3995
    %v4025 = vsel %vm4018, %v3995, %v3997
    %v4026 = vsel %vm4018, %v3997, %v3999
    %v4027 = vsel %vm4018, %v4001, %v4003
    %v4028 = vsel %vm4018, %v4003, %v4005
    %v4029 = vsel %vm4018, %v4005, %v4007
    %v4030 = vsel %vm4018, %v4007, %v4009
    %v4031 = vsel %vm4018, %v4009, %v4011
    %v4032 = vsel %vm4018, %v4011, %v4013
    %v4033 = vsel %vm4018, %v4013, %v4015
    %v4034 = vsel %vm4018, %v4015, %v4017
    %v4051 = vadd.f32 %v3922, %v4019
    %v4052 = vadd.f32 %v3923, %v4020
    %v4053 = vadd.f32 %v3924, %v4021
    %v4054 = vadd.f32 %v3925, %v4022
    %v4055 = vadd.f32 %v3926, %v4023
    %v4056 = vadd.f32 %v3927, %v4024
    %v4057 = vadd.f32 %v3928, %v4025
    %v4058 = vadd.f32 %v3929, %v4026
    %v4059 = vadd.f32 %v3930, %v4027
    %v4060 = vadd.f32 %v3931, %v4028
    %v4061 = vadd.f32 %v3932, %v4029
    %v4062 = vadd.f32 %v3933, %v4030
    %v4063 = vadd.f32 %v3934, %v4031
    %v4064 = vadd.f32 %v3935, %v4032
    %v4065 = vadd.f32 %v3936, %v4033
    %v4066 = vadd.f32 %v3937, %v4034
    %4067 = vset.pattern.permute.xlu0 30
    %4068 = vperm.xlu0 %4067, %v264
    %v4069 = vpop.permute.xlu0 %4068
    %4071 = vset.pattern.permute.xlu0 30
    %4072 = vperm.xlu0 %4071, %v265
    %v4073 = vpop.permute.xlu0 %4072
    %v4075 = vmul.f32 %v4069, %v308
    %v4076 = vmul.f32 %v4069, %v309
    %v4077 = vmul.f32 %v4069, %v310
    %v4078 = vmul.f32 %v4069, %v311
    %v4079 = vmul.f32 %v4069, %v312
    %v4080 = vmul.f32 %v4069, %v313
    %v4081 = vmul.f32 %v4069, %v314
    %v4082 = vmul.f32 %v4069, %v315
    %v4083 = vmul.f32 %v4069, %v316
    %v4084 = vmul.f32 %v4073, %v317
    %v4085 = vmul.f32 %v4073, %v318
    %v4086 = vmul.f32 %v4073, %v319
    %v4087 = vmul.f32 %v4073, %v320
    %v4088 = vmul.f32 %v4073, %v321
    %v4089 = vmul.f32 %v4073, %v322
    %v4090 = vmul.f32 %v4073, %v323
    %v4091 = vmul.f32 %v4073, %v324
    %v4092 = vmul.f32 %v4073, %v325
    %4111 = vrot.lane.b32.xlu0 %v4075, 98
    %v4112 = vpop.permute.xlu0 %4111
    %4113 = vrot.lane.b32.xlu0 %v4076, 98
    %v4114 = vpop.permute.xlu0 %4113
    %4115 = vrot.lane.b32.xlu0 %v4077, 98
    %v4116 = vpop.permute.xlu0 %4115
    %4117 = vrot.lane.b32.xlu0 %v4078, 98
    %v4118 = vpop.permute.xlu0 %4117
    %4119 = vrot.lane.b32.xlu0 %v4079, 98
    %v4120 = vpop.permute.xlu0 %4119
    %4121 = vrot.lane.b32.xlu0 %v4080, 98
    %v4122 = vpop.permute.xlu0 %4121
    %4123 = vrot.lane.b32.xlu0 %v4081, 98
    %v4124 = vpop.permute.xlu0 %4123
    %4125 = vrot.lane.b32.xlu0 %v4082, 98
    %v4126 = vpop.permute.xlu0 %4125
    %4127 = vrot.lane.b32.xlu0 %v4083, 98
    %v4128 = vpop.permute.xlu0 %4127
    %4129 = vrot.lane.b32.xlu0 %v4084, 98
    %v4130 = vpop.permute.xlu0 %4129
    %4131 = vrot.lane.b32.xlu0 %v4085, 98
    %v4132 = vpop.permute.xlu0 %4131
    %4133 = vrot.lane.b32.xlu0 %v4086, 98
    %v4134 = vpop.permute.xlu0 %4133
    %4135 = vrot.lane.b32.xlu0 %v4087, 98
    %v4136 = vpop.permute.xlu0 %4135
    %4137 = vrot.lane.b32.xlu0 %v4088, 98
    %v4138 = vpop.permute.xlu0 %4137
    %4139 = vrot.lane.b32.xlu0 %v4089, 98
    %v4140 = vpop.permute.xlu0 %4139
    %4141 = vrot.lane.b32.xlu0 %v4090, 98
    %v4142 = vpop.permute.xlu0 %4141
    %4143 = vrot.lane.b32.xlu0 %v4091, 98
    %v4144 = vpop.permute.xlu0 %4143
    %4145 = vrot.lane.b32.xlu0 %v4092, 98
    %v4146 = vpop.permute.xlu0 %4145
    %vm4147 = vcmask 801792
    %v4148 = vsel %vm4147, %v4112, %v4114
    %v4149 = vsel %vm4147, %v4114, %v4116
    %v4150 = vsel %vm4147, %v4116, %v4118
    %v4151 = vsel %vm4147, %v4118, %v4120
    %v4152 = vsel %vm4147, %v4120, %v4122
    %v4153 = vsel %vm4147, %v4122, %v4124
    %v4154 = vsel %vm4147, %v4124, %v4126
    %v4155 = vsel %vm4147, %v4126, %v4128
    %v4156 = vsel %vm4147, %v4130, %v4132
    %v4157 = vsel %vm4147, %v4132, %v4134
    %v4158 = vsel %vm4147, %v4134, %v4136
    %v4159 = vsel %vm4147, %v4136, %v4138
    %v4160 = vsel %vm4147, %v4138, %v4140
    %v4161 = vsel %vm4147, %v4140, %v4142
    %v4162 = vsel %vm4147, %v4142, %v4144
    %v4163 = vsel %vm4147, %v4144, %v4146
    %v4180 = vadd.f32 %v4051, %v4148
    %v4181 = vadd.f32 %v4052, %v4149
    %v4182 = vadd.f32 %v4053, %v4150
    %v4183 = vadd.f32 %v4054, %v4151
    %v4184 = vadd.f32 %v4055, %v4152
    %v4185 = vadd.f32 %v4056, %v4153
    %v4186 = vadd.f32 %v4057, %v4154
    %v4187 = vadd.f32 %v4058, %v4155
    %v4188 = vadd.f32 %v4059, %v4156
    %v4189 = vadd.f32 %v4060, %v4157
    %v4190 = vadd.f32 %v4061, %v4158
    %v4191 = vadd.f32 %v4062, %v4159
    %v4192 = vadd.f32 %v4063, %v4160
    %v4193 = vadd.f32 %v4064, %v4161
    %v4194 = vadd.f32 %v4065, %v4162
    %v4195 = vadd.f32 %v4066, %v4163
    %4196 = vset.pattern.permute.xlu0 31
    %4197 = vperm.xlu0 %4196, %v264
    %v4198 = vpop.permute.xlu0 %4197
    %4200 = vset.pattern.permute.xlu0 31
    %4201 = vperm.xlu0 %4200, %v265
    %v4202 = vpop.permute.xlu0 %4201
    %v4204 = vmul.f32 %v4198, %v308
    %v4205 = vmul.f32 %v4198, %v309
    %v4206 = vmul.f32 %v4198, %v310
    %v4207 = vmul.f32 %v4198, %v311
    %v4208 = vmul.f32 %v4198, %v312
    %v4209 = vmul.f32 %v4198, %v313
    %v4210 = vmul.f32 %v4198, %v314
    %v4211 = vmul.f32 %v4198, %v315
    %v4212 = vmul.f32 %v4198, %v316
    %v4213 = vmul.f32 %v4202, %v317
    %v4214 = vmul.f32 %v4202, %v318
    %v4215 = vmul.f32 %v4202, %v319
    %v4216 = vmul.f32 %v4202, %v320
    %v4217 = vmul.f32 %v4202, %v321
    %v4218 = vmul.f32 %v4202, %v322
    %v4219 = vmul.f32 %v4202, %v323
    %v4220 = vmul.f32 %v4202, %v324
    %v4221 = vmul.f32 %v4202, %v325
    %4240 = vrot.lane.b32.xlu0 %v4204, 97
    %v4241 = vpop.permute.xlu0 %4240
    %4242 = vrot.lane.b32.xlu0 %v4205, 97
    %v4243 = vpop.permute.xlu0 %4242
    %4244 = vrot.lane.b32.xlu0 %v4206, 97
    %v4245 = vpop.permute.xlu0 %4244
    %4246 = vrot.lane.b32.xlu0 %v4207, 97
    %v4247 = vpop.permute.xlu0 %4246
    %4248 = vrot.lane.b32.xlu0 %v4208, 97
    %v4249 = vpop.permute.xlu0 %4248
    %4250 = vrot.lane.b32.xlu0 %v4209, 97
    %v4251 = vpop.permute.xlu0 %4250
    %4252 = vrot.lane.b32.xlu0 %v4210, 97
    %v4253 = vpop.permute.xlu0 %4252
    %4254 = vrot.lane.b32.xlu0 %v4211, 97
    %v4255 = vpop.permute.xlu0 %4254
    %4256 = vrot.lane.b32.xlu0 %v4212, 97
    %v4257 = vpop.permute.xlu0 %4256
    %4258 = vrot.lane.b32.xlu0 %v4213, 97
    %v4259 = vpop.permute.xlu0 %4258
    %4260 = vrot.lane.b32.xlu0 %v4214, 97
    %v4261 = vpop.permute.xlu0 %4260
    %4262 = vrot.lane.b32.xlu0 %v4215, 97
    %v4263 = vpop.permute.xlu0 %4262
    %4264 = vrot.lane.b32.xlu0 %v4216, 97
    %v4265 = vpop.permute.xlu0 %4264
    %4266 = vrot.lane.b32.xlu0 %v4217, 97
    %v4267 = vpop.permute.xlu0 %4266
    %4268 = vrot.lane.b32.xlu0 %v4218, 97
    %v4269 = vpop.permute.xlu0 %4268
    %4270 = vrot.lane.b32.xlu0 %v4219, 97
    %v4271 = vpop.permute.xlu0 %4270
    %4272 = vrot.lane.b32.xlu0 %v4220, 97
    %v4273 = vpop.permute.xlu0 %4272
    %4274 = vrot.lane.b32.xlu0 %v4221, 97
    %v4275 = vpop.permute.xlu0 %4274
    %vm4276 = vcmask 793600
    %v4277 = vsel %vm4276, %v4241, %v4243
    %v4278 = vsel %vm4276, %v4243, %v4245
    %v4279 = vsel %vm4276, %v4245, %v4247
    %v4280 = vsel %vm4276, %v4247, %v4249
    %v4281 = vsel %vm4276, %v4249, %v4251
    %v4282 = vsel %vm4276, %v4251, %v4253
    %v4283 = vsel %vm4276, %v4253, %v4255
    %v4284 = vsel %vm4276, %v4255, %v4257
    %v4285 = vsel %vm4276, %v4259, %v4261
    %v4286 = vsel %vm4276, %v4261, %v4263
    %v4287 = vsel %vm4276, %v4263, %v4265
    %v4288 = vsel %vm4276, %v4265, %v4267
    %v4289 = vsel %vm4276, %v4267, %v4269
    %v4290 = vsel %vm4276, %v4269, %v4271
    %v4291 = vsel %vm4276, %v4271, %v4273
    %v4292 = vsel %vm4276, %v4273, %v4275
    %v4309 = vadd.f32 %v4180, %v4277
    %v4310 = vadd.f32 %v4181, %v4278
    %v4311 = vadd.f32 %v4182, %v4279
    %v4312 = vadd.f32 %v4183, %v4280
    %v4313 = vadd.f32 %v4184, %v4281
    %v4314 = vadd.f32 %v4185, %v4282
    %v4315 = vadd.f32 %v4186, %v4283
    %v4316 = vadd.f32 %v4187, %v4284
    %v4317 = vadd.f32 %v4188, %v4285
    %v4318 = vadd.f32 %v4189, %v4286
    %v4319 = vadd.f32 %v4190, %v4287
    %v4320 = vadd.f32 %v4191, %v4288
    %v4321 = vadd.f32 %v4192, %v4289
    %v4322 = vadd.f32 %v4193, %v4290
    %v4323 = vadd.f32 %v4194, %v4291
    %v4324 = vadd.f32 %v4195, %v4292
    %v4325 = vld [vmem:[%s3] sm:$0xff]
    %v4326 = vld [vmem:[%s3 + $0x8] sm:$0xff]
    %4328 = vset.pattern.permute.xlu0 0
    %4329 = vperm.xlu0 %4328, %v4325
    %v4330 = vpop.permute.xlu0 %4329
    %4333 = vset.pattern.permute.xlu0 0
    %4334 = vperm.xlu0 %4333, %v4326
    %v4335 = vpop.permute.xlu0 %4334
    %v4337 = vadd.f32 %v4309, %v4330
    %v4338 = vadd.f32 %v4310, %v4330
    %v4339 = vadd.f32 %v4311, %v4330
    %v4340 = vadd.f32 %v4312, %v4330
    %v4341 = vadd.f32 %v4313, %v4330
    %v4342 = vadd.f32 %v4314, %v4330
    %v4343 = vadd.f32 %v4315, %v4330
    %v4344 = vadd.f32 %v4316, %v4330
    %v4345 = vadd.f32 %v4317, %v4335
    %v4346 = vadd.f32 %v4318, %v4335
    %v4347 = vadd.f32 %v4319, %v4335
    %v4348 = vadd.f32 %v4320, %v4335
    %v4349 = vadd.f32 %v4321, %v4335
    %v4350 = vadd.f32 %v4322, %v4335
    %v4351 = vadd.f32 %v4323, %v4335
    %v4352 = vadd.f32 %v4324, %v4335
    %v4353 = vmax.f32 %v4337, 0.0
    %v4354 = vmax.f32 %v4338, 0.0
    %v4355 = vmax.f32 %v4339, 0.0
    %v4356 = vmax.f32 %v4340, 0.0
    %v4357 = vmax.f32 %v4341, 0.0
    %v4358 = vmax.f32 %v4342, 0.0
    %v4359 = vmax.f32 %v4343, 0.0
    %v4360 = vmax.f32 %v4344, 0.0
    %v4361 = vmax.f32 %v4345, 0.0
    %v4362 = vmax.f32 %v4346, 0.0
    %v4363 = vmax.f32 %v4347, 0.0
    %v4364 = vmax.f32 %v4348, 0.0
    %v4365 = vmax.f32 %v4349, 0.0
    %v4366 = vmax.f32 %v4350, 0.0
    %v4367 = vmax.f32 %v4351, 0.0
    %v4368 = vmax.f32 %v4352, 0.0
    %v4369 = vld [vmem:[%s4] sm:$0xff]
    %v4371 = vperm.slane %v4369, 0
    %v4372 = vperm.slane %v4369, 1
    %v4373 = vperm.slane %v4369, 2
    %v4374 = vperm.slane %v4369, 3
    %v4375 = vperm.slane %v4369, 4
    %v4376 = vperm.slane %v4369, 5
    %v4377 = vperm.slane %v4369, 6
    %v4378 = vperm.slane %v4369, 7
    %v4387 = vmul.f32 %v4353, %v4371
    %v4388 = vmul.f32 %v4354, %v4372
    %v4389 = vmul.f32 %v4355, %v4373
    %v4390 = vmul.f32 %v4356, %v4374
    %v4391 = vmul.f32 %v4357, %v4375
    %v4392 = vmul.f32 %v4358, %v4376
    %v4393 = vmul.f32 %v4359, %v4377
    %v4394 = vmul.f32 %v4360, %v4378
    %v4395 = vmul.f32 %v4361, %v4371
    %v4396 = vmul.f32 %v4362, %v4372
    %v4397 = vmul.f32 %v4363, %v4373
    %v4398 = vmul.f32 %v4364, %v4374
    %v4399 = vmul.f32 %v4365, %v4375
    %v4400 = vmul.f32 %v4366, %v4376
    %v4401 = vmul.f32 %v4367, %v4377
    %v4402 = vmul.f32 %v4368, %v4378
    %4403 = vadd.xlane.f32.xlu0 %v4387
    %v4404 = vpop.xlane.xlu0 %4403
    %4405 = vadd.xlane.f32.xlu0 %v4395
    %v4406 = vpop.xlane.xlu0 %4405
    %vm4407 = vcmask 7168
    %4408 = vst.msk [vmem:[#allocation3] sm:$0xff] %vm4407, %v4404
    %4409 = vst.msk [vmem:[#allocation3 + $0x8] sm:$0xff] %vm4407, %v4406
    %4410 = vadd.xlane.f32.xlu0 %v4388
    %v4411 = vpop.xlane.xlu0 %4410
    %4412 = vadd.xlane.f32.xlu0 %v4396
    %v4413 = vpop.xlane.xlu0 %4412
    %vm4414 = vcmask 15368
    %4415 = vst.msk [vmem:[#allocation3] sm:$0xff] %vm4414, %v4411
    %4416 = vst.msk [vmem:[#allocation3 + $0x8] sm:$0xff] %vm4414, %v4413
    %4417 = vadd.xlane.f32.xlu0 %v4389
    %v4418 = vpop.xlane.xlu0 %4417
    %4419 = vadd.xlane.f32.xlu0 %v4397
    %v4420 = vpop.xlane.xlu0 %4419
    %vm4421 = vcmask 23568
    %4422 = vst.msk [vmem:[#allocation3] sm:$0xff] %vm4421, %v4418
    %4423 = vst.msk [vmem:[#allocation3 + $0x8] sm:$0xff] %vm4421, %v4420
    %4424 = vadd.xlane.f32.xlu0 %v4390
    %v4425 = vpop.xlane.xlu0 %4424
    %4426 = vadd.xlane.f32.xlu0 %v4398
    %v4427 = vpop.xlane.xlu0 %4426
    %vm4428 = vcmask 31768
    %4429 = vst.msk [vmem:[#allocation3] sm:$0xff] %vm4428, %v4425
    %4430 = vst.msk [vmem:[#allocation3 + $0x8] sm:$0xff] %vm4428, %v4427
    %4431 = vadd.xlane.f32.xlu0 %v4391
    %v4432 = vpop.xlane.xlu0 %4431
    %4433 = vadd.xlane.f32.xlu0 %v4399
    %v4434 = vpop.xlane.xlu0 %4433
    %vm4435 = vcmask 39968
    %4436 = vst.msk [vmem:[#allocation3] sm:$0xff] %vm4435, %v4432
    %4437 = vst.msk [vmem:[#allocation3 + $0x8] sm:$0xff] %vm4435, %v4434
    %4438 = vadd.xlane.f32.xlu0 %v4392
    %v4439 = vpop.xlane.xlu0 %4438
    %4440 = vadd.xlane.f32.xlu0 %v4400
    %v4441 = vpop.xlane.xlu0 %4440
    %vm4442 = vcmask 48168
    %4443 = vst.msk [vmem:[#allocation3] sm:$0xff] %vm4442, %v4439
    %4444 = vst.msk [vmem:[#allocation3 + $0x8] sm:$0xff] %vm4442, %v4441
    %4445 = vadd.xlane.f32.xlu0 %v4393
    %v4446 = vpop.xlane.xlu0 %4445
    %4447 = vadd.xlane.f32.xlu0 %v4401
    %v4448 = vpop.xlane.xlu0 %4447
    %vm4449 = vcmask 56368
    %4450 = vst.msk [vmem:[#allocation3] sm:$0xff] %vm4449, %v4446
    %4451 = vst.msk [vmem:[#allocation3 + $0x8] sm:$0xff] %vm4449, %v4448
    %4452 = vadd.xlane.f32.xlu0 %v4394
    %v4453 = vpop.xlane.xlu0 %4452
    %4454 = vadd.xlane.f32.xlu0 %v4402
    %v4455 = vpop.xlane.xlu0 %4454
    %vm4456 = vcmask 64568
    %4457 = vst.msk [vmem:[#allocation3] sm:$0xff] %vm4456, %v4453
    %4458 = vst.msk [vmem:[#allocation3 + $0x8] sm:$0xff] %vm4456, %v4455
    %v4459 = vld [vmem:[#allocation3] sm:$0xff]
    %v4460 = vld [vmem:[#allocation3 + $0x8] sm:$0xff]
    %v4461 = vsel %vm42, %v4459, 0.0
    %4462 = vadd.xlane.f32.xlu0 %v4461
    %v4463 = vpop.xlane.xlu0 %4462
    %v4464 = vsel %vm42, %v4460, 0.0
    %4465 = vadd.xlane.f32.xlu0 %v4464
    %v4466 = vpop.xlane.xlu0 %4465
    %v4467 = vrcp.pop 520.0
    %v4468 = vmul.f32 520.0, %v4467
    %v4469 = vsub.f32 1.0, %v4468
    %v4470 = vmul.f32 %v4467, %v4469
    %v4471 = vadd.f32 %v4467, %v4470
    %vm4472 = vweird.f32 %v4467
    %v4473 = vsel %vm4472, %v4467, %v4471
    %v4474 = vmul.f32 %v4463, %v4473
    %v4475 = vmul.f32 %v4466, %v4473
    %v4476 = vmul.f32 %v4387, %v4387
    %v4477 = vmul.f32 %v4388, %v4388
    %v4478 = vmul.f32 %v4389, %v4389
    %v4479 = vmul.f32 %v4390, %v4390
    %v4480 = vmul.f32 %v4391, %v4391
    %v4481 = vmul.f32 %v4392, %v4392
    %v4482 = vmul.f32 %v4393, %v4393
    %v4483 = vmul.f32 %v4394, %v4394
    %v4484 = vmul.f32 %v4395, %v4395
    %v4485 = vmul.f32 %v4396, %v4396
    %v4486 = vmul.f32 %v4397, %v4397
    %v4487 = vmul.f32 %v4398, %v4398
    %v4488 = vmul.f32 %v4399, %v4399
    %v4489 = vmul.f32 %v4400, %v4400
    %v4490 = vmul.f32 %v4401, %v4401
    %v4491 = vmul.f32 %v4402, %v4402
    %v4492 = vadd.f32 %v4476, %v4477
    %v4493 = vadd.f32 %v4492, %v4478
    %v4494 = vadd.f32 %v4493, %v4479
    %v4495 = vadd.f32 %v4494, %v4480
    %v4496 = vadd.f32 %v4495, %v4481
    %v4497 = vadd.f32 %v4496, %v4482
    %v4498 = vadd.f32 %v4497, %v4483
    %4499 = vadd.xlane.f32.xlu0 %v4498
    %v4500 = vpop.xlane.xlu0 %4499
    %v4501 = vadd.f32 %v4484, %v4485
    %v4502 = vadd.f32 %v4501, %v4486
    %v4503 = vadd.f32 %v4502, %v4487
    %v4504 = vadd.f32 %v4503, %v4488
    %v4505 = vadd.f32 %v4504, %v4489
    %v4506 = vadd.f32 %v4505, %v4490
    %v4507 = vadd.f32 %v4506, %v4491
    %4508 = vadd.xlane.f32.xlu0 %v4507
    %v4509 = vpop.xlane.xlu0 %4508
    %v4510 = vmul.f32 %v4500, %v4473
    %v4511 = vmul.f32 %v4509, %v4473
    %v4512 = vmul.f32 %v4474, %v4474
    %v4513 = vmul.f32 %v4475, %v4475
    %v4514 = vsub.f32 %v4510, %v4512
    %v4515 = vsub.f32 %v4511, %v4513
    %v4516 = vld [vmem:[%s3] sm:$0xff]
    %v4517 = vld [vmem:[%s3 + $0x8] sm:$0xff]
    %v4518 = vadd.f32 %v4514, 1e-05
    %v4519 = vadd.f32 %v4515, 1e-05
    %v4520 = vrsqrt.pop %v4518
    %v4521 = vmul.f32 %v4520, %v4518
    %v4522 = vmul.f32 %v4521, %v4520
    %v4523 = vmul.f32 0.5, %v4522
    %v4524 = vsub.f32 1.5, %v4523
    %v4525 = vmul.f32 %v4520, %v4524
    %vm4526 = vweird.f32 %v4518
    %vm4527 = vweird.f32 %v4520
    %vm4528 = vmor %vm4526, %vm4527
    %v4529 = vsel %vm4528, %v4520, %v4525
    %v4530 = vrsqrt.pop %v4519
    %v4531 = vmul.f32 %v4530, %v4519
    %v4532 = vmul.f32 %v4531, %v4530
    %v4533 = vmul.f32 0.5, %v4532
    %v4534 = vsub.f32 1.5, %v4533
    %v4535 = vmul.f32 %v4530, %v4534
    %vm4536 = vweird.f32 %v4519
    %vm4537 = vweird.f32 %v4530
    %vm4538 = vmor %vm4536, %vm4537
    %v4539 = vsel %vm4538, %v4530, %v4535
    %v4540 = vmul.f32 %v4516, %v4529
    %v4541 = vmul.f32 %v4517, %v4539
    %v4542 = vmul.f32 %v4459, 0.015384615
    %v4543 = vmul.f32 %v4460, 0.015384615
    %v4544 = vsub.f32 %v4542, %v4474
    %v4545 = vsub.f32 %v4543, %v4475
    %4547 = vset.pattern.permute.xlu0 1
    %4548 = vperm.xlu0 %4547, %v4540
    %v4549 = vpop.permute.xlu0 %4548
    %4552 = vset.pattern.permute.xlu0 1
    %4553 = vperm.xlu0 %4552, %v4541
    %v4554 = vpop.permute.xlu0 %4553
    %v4556 = vmul.f32 %v4544, %v4549
    %v4557 = vmul.f32 %v4545, %v4554
    %4559 = vset.pattern.permute.xlu0 2
    %4560 = vperm.xlu0 %4559, %v4516
    %v4561 = vpop.permute.xlu0 %4560
    %4564 = vset.pattern.permute.xlu0 2
    %4565 = vperm.xlu0 %4564, %v4517
    %v4566 = vpop.permute.xlu0 %4565
    %v4568 = vadd.f32 %v4556, %v4561
    %v4569 = vadd.f32 %v4557, %v4566
    %4570 = vset.pattern.permute.xlu0 3
    %4571 = vperm.xlu0 %4570, %v4516
    %v4572 = vpop.permute.xlu0 %4571
    %4574 = vset.pattern.permute.xlu0 3
    %4575 = vperm.xlu0 %4574, %v4517
    %v4576 = vpop.permute.xlu0 %4575
    %v4578 = vmul.f32 %v4568, %v4572
    %v4579 = vmul.f32 %v4569, %v4576
    %v4580 = vsel %vm42, %v4578, 0.0
    %v4581 = vsel %vm42, %v4579, 0.0
    %v4582 = vadd.f32 %v4580, %v4581
    %v4583 = vrot.slane %v4582, 4
    %v4584 = vadd.f32 %v4582, %v4583
    %v4585 = vrot.slane %v4584, 2
    %v4586 = vadd.f32 %v4584, %v4585
    %v4587 = vrot.slane %v4586, 1
    %v4588 = vadd.f32 %v4586, %v4587
    %v4589 = vld [vmem:[%s3] sm:$0x1]
    %4591 = vset.pattern.permute.xlu0 5
    %4592 = vperm.xlu0 %4591, %v4589
    %v4593 = vpop.permute.xlu0 %4592
    %v4595 = vadd.f32 %v4588, %v4593
    %4596 = vset.pattern.permute.xlu0 4
    %4597 = vperm.xlu0 %4596, %v4516
    %v4598 = vpop.permute.xlu0 %4597
    %4600 = vset.pattern.permute.xlu0 4
    %4601 = vperm.xlu0 %4600, %v4517
    %v4602 = vpop.permute.xlu0 %4601
    %v4604 = vmul.f32 %v4568, %v4598
    %v4605 = vmul.f32 %v4569, %v4602
    %v4606 = vsel %vm42, %v4604, 0.0
    %v4607 = vsel %vm42, %v4605, 0.0
    %v4608 = vadd.f32 %v4606, %v4607
    %v4609 = vrot.slane %v4608, 4
    %v4610 = vadd.f32 %v4608, %v4609
    %v4611 = vrot.slane %v4610, 2
    %v4612 = vadd.f32 %v4610, %v4611
    %v4613 = vrot.slane %v4612, 1
    %v4614 = vadd.f32 %v4612, %v4613
    %v4615 = vld [vmem:[%s3 + $0x1] sm:$0x1]
    %4617 = vset.pattern.permute.xlu0 5
    %4618 = vperm.xlu0 %4617, %v4615
    %v4619 = vpop.permute.xlu0 %4618
    %v4621 = vadd.f32 %v4614, %v4619
    %v4623 = vrot.slane %v4621, 7
    %vm4625 = vcmask 1040384
    %v4626 = vsel %vm4625, %v4595, %v4623
    %vm4627 = vcmask 58368
    %v4628 = vsel %vm4627, %v4626, -inf
    %v4629 = vrot.slane %v4628, 4
    %v4630 = vmax.f32 %v4628, %v4629
    %v4631 = vrot.slane %v4630, 2
    %v4632 = vmax.f32 %v4630, %v4631
    %v4633 = vrot.slane %v4632, 1
    %v4634 = vmax.f32 %v4632, %v4633
    %v4635 = vsub.f32 %v4626, %v4634
    %v4636 = vmul.f32 %v4635, 1.442695
    %v4637 = vpow.pop %v4636
    %v4638 = vsel %vm4627, %v4637, 0.0
    %v4639 = vrot.slane %v4638, 4
    %v4640 = vadd.f32 %v4638, %v4639
    %v4641 = vrot.slane %v4640, 2
    %v4642 = vadd.f32 %v4640, %v4641
    %v4643 = vrot.slane %v4642, 1
    %v4644 = vadd.f32 %v4642, %v4643
    %v4645 = vlog2.pop %v4644
    %v4646 = vmul.f32 %v4645, 0.6931472
    %v4647 = vsub.f32 %v4635, %v4646
    %4648 = vst.msk [vmem:[#allocation4] sm:$0x3] %vm4627, %v4647
    // Predicated region
    $region22: #{interpretable_cnn_forward.1} parent=1 // pred_check
      _
    $region23: #{interpretable_cnn_forward.1} parent=1 // pred_check_branch
      %4650 = sbr.rel (0) target = $region25
    $region24: #{interpretable_cnn_forward.1} parent=1 // pred_region
      %4652 = vsyncadd [#allocation5], 0
      %s4654 = sshll.u32 [#allocation4], 4
      %s4655 = int_to_ptr.vmem [resolvable:$true] %s4654
      %s4656 = sshll.u32 %s5, 4
      %s4657 = int_to_ptr.hbm [resolvable:$true] %s4656
      %4659 = dma.vmem_to_hbm [thread:$0]  %s4655, 32, %s4657, [#allocation5]
    $region25: #{interpretable_cnn_forward.1} parent=1 // pred_fallthru
      _
    // Predicated region
    $region26: #{interpretable_cnn_forward.1} parent=1 // pred_check
      _
    $region27: #{interpretable_cnn_forward.1} parent=1 // pred_check_branch
      %4661 = sbr.rel (0) target = $region29
    $region28: #{interpretable_cnn_forward.1} parent=1 // pred_region
      %4663 = dma.done [#allocation5], 32
    $region29: #{interpretable_cnn_forward.1} parent=1 // pred_fallthru
      _
    %4664 = vsyncpa [#allocation5], 1

</llo_original>
